<compile_context>
chip_gen: v5e
topology: v5e:2x2
jax: 0.10.0
libtpu: 0.0.40
codegen_flags: <defaults>
</compile_context>

<pallas_src>
import functools
import math

import jax
import jax.numpy as jnp
from jax import lax
from jax.experimental import pallas as pl
from jax.experimental.pallas import tpu as pltpu

_LN_EPS = 1e-5


# ---------------------------------------------------------------------------
# Parameter construction (deterministic, synthetic — mirrors __init__)
# ---------------------------------------------------------------------------
def make_sota_lstm_params(key, input_size, hidden_size):
    assert input_size == hidden_size, (
        "SotaLSTM forward only typechecks when input_size == hidden_size")
    H = hidden_size
    stdv = 1.0 / math.sqrt(H)
    k = jax.random.split(key, 5)
    W = jax.random.uniform(k[0], (4 * input_size, 4 * H), jnp.float32, -stdv, stdv)
    U = jax.random.uniform(k[1], (4 * input_size, 4 * H), jnp.float32, -stdv, stdv)
    b = jnp.zeros((4 * H,), jnp.float32).at[H:2 * H].set(1.0)   # forget bias = 1
    w_peep = jax.random.uniform(k[2], (3 * H,), jnp.float32, -stdv, stdv)
    h_0 = jax.random.uniform(k[3], (H,), jnp.float32, -stdv, stdv)
    c_0 = jax.random.uniform(k[4], (H,), jnp.float32, -stdv, stdv)
    # Fresh nn.LayerNorm init: gamma = 1, beta = 0.  Order: [i | f | o | c].
    ln_gamma = jnp.ones((4 * H,), jnp.float32)
    ln_beta = jnp.zeros((4 * H,), jnp.float32)
    return dict(W=W, U=U, b=b, w_peep=w_peep, h_0=h_0, c_0=c_0,
                ln_gamma=ln_gamma, ln_beta=ln_beta)


# ---------------------------------------------------------------------------
# Pallas kernel: one grid step == TT time steps for one batch block
# ---------------------------------------------------------------------------
def _sota_lstm_kernel(H, TT, has_masks, *refs):
    if has_masks:
        (gx_ref, dh_ref, dc_ref, u_ref, wp_ref, gam_ref, bet_ref,
         h0_ref, c0_ref, out_ref, h_sc, c_sc) = refs
    else:
        (gx_ref, u_ref, wp_ref, gam_ref, bet_ref,
         h0_ref, c0_ref, out_ref, h_sc, c_sc) = refs
        dh_ref = dc_ref = None

    # Grid = (batch_blocks, time_chunks); time is the fast (serial) axis, so
    # each batch block re-initializes its carry at its first time chunk.
    @pl.when(pl.program_id(1) == 0)
    def _():
        h_sc[...] = h0_ref[...]
        c_sc[...] = c0_ref[...]

    # Hoist loop-invariant loads / slices out of the time loop (JAX does not
    # CSE broadcasts/slices across iterations).
    u = u_ref[...]                                          # (H, 4H), f32/bf16
    wp = wp_ref[...]                                        # (1, 3H)
    wp_i, wp_f, wp_o = wp[:, 0:H], wp[:, H:2 * H], wp[:, 2 * H:3 * H]
    gam = gam_ref[...]                                      # (1, 4H)
    bet = bet_ref[...]                                      # (1, 4H)
    gam_s = [gam[:, g * H:(g + 1) * H] for g in range(4)]
    bet_s = [bet[:, g * H:(g + 1) * H] for g in range(4)]
    inv_h = jnp.float32(1.0 / H)

    def layer_norm(z, g):
        # var = E[z^2] - E[z]^2: the two cross-lane (XLU) reductions are
        # independent and the dependent (z - mu)^2 VPU pass disappears,
        # shortening the per-step serial chain.  rsqrt goes to the EUP.
        mu = jnp.sum(z, axis=-1, keepdims=True) * inv_h
        ms = jnp.sum(z * z, axis=-1, keepdims=True) * inv_h
        var = ms - mu * mu
        return (z - mu) * lax.rsqrt(var + _LN_EPS) * gam_s[g] + bet_s[g]

    def step(s, h, c):
        # Only the recurrent h @ Ucomb matmul sits on the serial path; the
        # input projection Gx was precomputed outside the kernel.
        # TODO(synk): weight-stationary MXU driving (matmul_push_rhs once per
        # chunk, matmul_acc_lhs/pop per step) would remove the per-step RHS
        # push that dominates at small batch.
        gates = gx_ref[s] + jnp.dot(h.astype(u.dtype), u,
                                    preferred_element_type=jnp.float32)
        i_t = jax.nn.sigmoid(layer_norm(gates[:, 0:H] + wp_i * c, 0))
        f_t = jax.nn.sigmoid(layer_norm(gates[:, H:2 * H] + wp_f * c, 1))
        o_t = jax.nn.sigmoid(layer_norm(gates[:, 2 * H:3 * H] + wp_o * c, 2))
        g_c = jnp.tanh(layer_norm(gates[:, 3 * H:4 * H], 3))
        c_prim = f_t * c + i_t * g_c
        if has_masks:
            d_h = dh_ref[s]
            d_c = dc_ref[s]
            c_new = d_c * c_prim + (1.0 - d_c) * c
            h_new = d_h * (jnp.tanh(c_new) * o_t) + (1.0 - d_h) * h
        else:                       # eval mode: masks are identically 1
            c_new = c_prim
            h_new = jnp.tanh(c_new) * o_t
        out_ref[s] = h_new.astype(out_ref.dtype)   # dense (TB, H) time-major
        return h_new, c_new

    h = h_sc[...]
    c = c_sc[...]
    if TT <= 16:
        # Small chunk: full unroll (LLO sees the whole chunk).
        for s in range(TT):
            h, c = step(s, h, c)
    else:
        # Big chunk: bound vreg live ranges with a modestly-unrolled fori_loop.
        def body(s, carry):
            return step(s, *carry)
        h, c = lax.fori_loop(0, TT, body, (h, c), unroll=4)

    h_sc[...] = h
    c_sc[...] = c


# ---------------------------------------------------------------------------
# Chunk-size / spec helpers
# ---------------------------------------------------------------------------
def _default_time_chunk(T, B, H, has_masks):
    # Target ~4 MiB of streamed bytes per chunk (gx + out, + masks in
    # training) and >= ~4 grid steps so DMA of chunk t+1 overlaps compute of
    # chunk t; TT must divide T.
    bytes_per_step = B * (4 * H) * 4 + B * H * 4
    if has_masks:
        bytes_per_step += 2 * B * H * 4
    tt = max(1, min(T, (4 << 20) // max(bytes_per_step, 1)))
    tt = min(tt, max(1, -(-T // 4)))        # keep >= ~4 grid steps
    while T % tt:
        tt -= 1
    return tt


def _invariant_spec(shape, index_map, single_buffer):
    # Constant-index-map inputs don't need double buffering; Buffered(1)
    # halves their static VMEM (matters for large H where Ucomb dominates,
    # especially on v7x's 64 MiB VMEM).  Fall back gracefully if unsupported.
    if single_buffer and hasattr(pl, "Buffered"):
        try:
            return pl.BlockSpec(shape, index_map, pipeline_mode=pl.Buffered(1))
        except TypeError:
            pass
    return pl.BlockSpec(shape, index_map)


# ---------------------------------------------------------------------------
# Wrapper: weight folding + hoisted input projection + pallas_call
# ---------------------------------------------------------------------------
def sota_lstm_forward(x, params, h_c=None, d_h_seq=None, d_c_seq=None, *,
                      time_chunk=None, batch_block=None,
                      compute_dtype=jnp.float32, vmem_limit_bytes=None,
                      single_buffer_invariants=True):
    B, T, I = x.shape
    W, U, b = params["W"], params["U"], params["b"]
    wp = params["w_peep"]
    h0, c0 = params["h_0"], params["c_0"]
    ln_gamma, ln_beta = params["ln_gamma"], params["ln_beta"]
    H = h0.shape[0]
    assert I == H, "SotaLSTM forward requires input_size == hidden_size"

    has_masks = (d_h_seq is not None) or (d_c_seq is not None)

    TT = (_default_time_chunk(T, B, H, has_masks)
          if time_chunk is None else min(int(time_chunk), T))
    assert T % TT == 0, (T, TT)
    TB = B if batch_block is None else int(batch_block)
    assert B % TB == 0 and (TB == B or TB % 8 == 0), (B, TB)
    nb, nt = B // TB, T // TT

    HIGH = lax.Precision.HIGHEST

    # Fold the repeat(1,3) trick into the weights (pure parameter setup):
    # x.repeat(1,3) @ W[:3H,:3H] == x @ (W[0:H] + W[H:2H] + W[2H:3H])[:, :3H].
    Wg = W[0:H, 0:3 * H] + W[H:2 * H, 0:3 * H] + W[2 * H:3 * H, 0:3 * H]
    Ug = U[0:H, 0:3 * H] + U[H:2 * H, 0:3 * H] + U[2 * H:3 * H, 0:3 * H]
    Wcomb = jnp.concatenate([Wg, W[3 * H:4 * H, 3 * H:4 * H]], axis=1)  # (H,4H)
    Ucomb = jnp.concatenate([Ug, U[3 * H:4 * H, 3 * H:4 * H]], axis=1)  # (H,4H)
    Ucomb = Ucomb.astype(compute_dtype)   # bf16 option: MXU-native, f32 accum

    # Hoisted input projection (no recurrent dependency): one big MXU matmul
    # outside the serial loop, emitted time-major so the kernel streams
    # (TT, B, 4H) chunks directly without any wrapper transpose of x.
    gx = (jnp.einsum("bti,ij->tbj", x.astype(jnp.float32), Wcomb,
                     precision=HIGH)
          + b.reshape(1, 1, 4 * H)).astype(jnp.float32)                 # (T,B,4H)

    if h_c is None:
        h_init = jnp.broadcast_to(h0, (B, H)).astype(jnp.float32)
        c_init = jnp.broadcast_to(c0, (B, H)).astype(jnp.float32)
    else:
        h_init = h_c[0].astype(jnp.float32)
        c_init = h_c[1].astype(jnp.float32)

    inputs = [gx]
    stream_specs = [pl.BlockSpec((TT, TB, 4 * H), lambda b_, t: (t, b_, 0))]
    if has_masks:
        ones = jnp.ones((T, B, H), jnp.float32)
        d_h = ones if d_h_seq is None else d_h_seq.astype(jnp.float32)
        d_c = ones if d_c_seq is None else d_c_seq.astype(jnp.float32)
        inputs += [d_h, d_c]
        stream_specs += [pl.BlockSpec((TT, TB, H), lambda b_, t: (t, b_, 0)),
                         pl.BlockSpec((TT, TB, H), lambda b_, t: (t, b_, 0))]

    inputs += [Ucomb,
               wp.reshape(1, 3 * H).astype(jnp.float32),
               ln_gamma.reshape(1, 4 * H).astype(jnp.float32),
               ln_beta.reshape(1, 4 * H).astype(jnp.float32),
               h_init, c_init]

    # Explicit VMEM budget (lifts the 16/32 MiB default scoped limit, capped
    # at 64 MiB so the same config stays safe on v7x's per-TC VMEM).
    if vmem_limit_bytes is None:
        stream_bytes = (TT * TB * (4 * H + H) * 4
                        + (2 * TT * TB * H * 4 if has_masks else 0))
        const_bytes = (H * 4 * H * jnp.dtype(compute_dtype).itemsize
                       + (3 * H + 8 * H + 2 * TB * H) * 4)
        est = 2 * stream_bytes + const_bytes + 2 * TB * H * 4
        vmem_limit_bytes = int(min(max(2 * est, 32 << 20), 64 << 20))

    kernel = functools.partial(_sota_lstm_kernel, H, TT, has_masks)
    out_shape = jax.ShapeDtypeStruct((T, B, H), jnp.float32)   # time-major

    def run(single_buffer):
        inv_specs = [
            _invariant_spec((H, 4 * H), lambda b_, t: (0, 0), single_buffer),
            _invariant_spec((1, 3 * H), lambda b_, t: (0, 0), single_buffer),
            _invariant_spec((1, 4 * H), lambda b_, t: (0, 0), single_buffer),
            _invariant_spec((1, 4 * H), lambda b_, t: (0, 0), single_buffer),
            _invariant_spec((TB, H), lambda b_, t: (b_, 0), single_buffer),
            _invariant_spec((TB, H), lambda b_, t: (b_, 0), single_buffer),
        ]
        return pl.pallas_call(
            kernel,
            out_shape=out_shape,
            grid_spec=pltpu.PrefetchScalarGridSpec(
                num_scalar_prefetch=0,
                grid=(nb, nt),          # batch blocks (parallel) x time chunks
                in_specs=stream_specs + inv_specs,
                out_specs=pl.BlockSpec((TT, TB, H), lambda b_, t: (t, b_, 0)),
                scratch_shapes=[pltpu.VMEM((TB, H), jnp.float32),   # h carry
                                pltpu.VMEM((TB, H), jnp.float32)],  # c carry
            ),
            compiler_params=pltpu.CompilerParams(
                dimension_semantics=("parallel", "arbitrary"),
                vmem_limit_bytes=vmem_limit_bytes),
        )(*inputs)

    if single_buffer_invariants:
        try:
            out_tm = run(True)
        except Exception:   # graceful fallback to default double buffering
            out_tm = run(False)
    else:
        out_tm = run(False)

    # Single XLA transpose off the serial path: time-major -> batch-first.
    return jnp.transpose(out_tm, (1, 0, 2))                    # (B, T, H)


# ---------------------------------------------------------------------------
# Pure-JAX reference (direct transcription of the PyTorch forward)
# ---------------------------------------------------------------------------
def sota_lstm_reference(x, params, h_c=None, d_h_seq=None, d_c_seq=None):
    W, U, b = params["W"], params["U"], params["b"]
    wp = params["w_peep"]
    h0, c0 = params["h_0"], params["c_0"]
    gam, bet = params["ln_gamma"], params["ln_beta"]
    H = h0.shape[0]
    B, T, I = x.shape
    HIGH = lax.Precision.HIGHEST

    def ln(z, g):
        mu = jnp.mean(z, axis=-1, keepdims=True)
        var = jnp.mean(jnp.square(z - mu), axis=-1, keepdims=True)
        return ((z - mu) * lax.rsqrt(var + _LN_EPS)
                * gam[g * H:(g + 1) * H] + bet[g * H:(g + 1) * H])

    if h_c is None:
        h = jnp.broadcast_to(h0, (B, H))
        c = jnp.broadcast_to(c0, (B, H))
    else:
        h, c = h_c
    outs = []
    for t in range(T):
        x_t = x[:, t, :]
        gates = (jnp.dot(jnp.tile(x_t, (1, 3)), W[:3 * H, :3 * H], precision=HIGH)
                 + jnp.dot(jnp.tile(h, (1, 3)), U[:3 * H, :3 * H], precision=HIGH)
                 + b[:3 * H] + wp * jnp.tile(c, (1, 3)))
        i_t = jax.nn.sigmoid(ln(gates[:, 0:H], 0))
        f_t = jax.nn.sigmoid(ln(gates[:, H:2 * H], 1))
        o_t = jax.nn.sigmoid(ln(gates[:, 2 * H:3 * H], 2))
        gate_c = ln(jnp.dot(x_t, W[3 * H:4 * H, 3 * H:4 * H], precision=HIGH)
                    + jnp.dot(h, U[3 * H:4 * H, 3 * H:4 * H], precision=HIGH)
                    + b[3 * H:4 * H], 3)
        d_h = jnp.ones((B, H), jnp.float32) if d_h_seq is None else d_h_seq[t]
        d_c = jnp.ones((B, H), jnp.float32) if d_c_seq is None else d_c_seq[t]
        c_prim = f_t * c + i_t * jnp.tanh(gate_c)
        c = d_c * c_prim + (1.0 - d_c) * c
        h = d_h * (jnp.tanh(c) * o_t) + (1.0 - d_h) * h
        outs.append(h)
    return jnp.stack(outs, axis=1)                          # (B, T, H)


if __name__ == "__main__":
    B, T, H = 4, 8, 32          # batch, sequence, hidden (= input_size)
    key = jax.random.PRNGKey(0)
    pkey, xkey, dkey = jax.random.split(key, 3)
    params = make_sota_lstm_params(pkey, H, H)
    x = jax.random.normal(xkey, (B, T, H), jnp.float32)

    # 1) f32 recurrent weights, eval mode (no mask streams): tight check.
    #    Default chunking gives TT=2 -> grid of 4 time chunks (pipelined).
    out = jax.block_until_ready(sota_lstm_forward(x, params))
    ref = sota_lstm_reference(x, params)
    assert out.shape == (B, T, H), out.shape
    err = float(jnp.max(jnp.abs(out - ref)))
    assert jnp.allclose(out, ref, atol=1e-3, rtol=1e-3), err

    # 2) Training-mode dropout masks (explicit {0,2} masks from JAX RNG).
    kh, kc = jax.random.split(dkey)
    d_h = jax.random.bernoulli(kh, 0.5, (T, B, H)).astype(jnp.float32) * 2.0
    d_c = jax.random.bernoulli(kc, 0.5, (T, B, H)).astype(jnp.float32) * 2.0
    out_tr = jax.block_until_ready(
        sota_lstm_forward(x, params, d_h_seq=d_h, d_c_seq=d_c))
    ref_tr = sota_lstm_reference(x, params, d_h_seq=d_h, d_c_seq=d_c)
    err_tr = float(jnp.max(jnp.abs(out_tr - ref_tr)))
    assert jnp.allclose(out_tr, ref_tr, atol=1e-3, rtol=1e-3), err_tr

    # 3) bf16 recurrent weights (MXU-native, recommended on v6e/v7x) with f32
    #    accumulation: loose check.
    out_bf = jax.block_until_ready(
        sota_lstm_forward(x, params, compute_dtype=jnp.bfloat16))
    err_bf = float(jnp.max(jnp.abs(out_bf - ref)))
    assert jnp.allclose(out_bf, ref, atol=7.5e-2, rtol=5e-2), err_bf

    # 4) Explicit single-chunk configuration still works (no pipelining).
    out_one = jax.block_until_ready(sota_lstm_forward(x, params, time_chunk=T))
    err_one = float(jnp.max(jnp.abs(out_one - ref)))
    assert jnp.allclose(out_one, ref, atol=1e-3, rtol=1e-3), err_one

    print("KERNEL_OK")
</pallas_src>

<mosaic_0001>
module attributes {stable_mosaic.version = 11 : i64} {
  func.func @_sota_lstm_kernel(%arg0: i32, %arg1: i32, %arg2: memref<2x4x128xf32, #tpu.memory_space<vmem>>, %arg3: memref<32x128xf32, #tpu.memory_space<vmem>>, %arg4: memref<1x96xf32, #tpu.memory_space<vmem>>, %arg5: memref<1x128xf32, #tpu.memory_space<vmem>>, %arg6: memref<1x128xf32, #tpu.memory_space<vmem>>, %arg7: memref<4x32xf32, #tpu.memory_space<vmem>>, %arg8: memref<4x32xf32, #tpu.memory_space<vmem>>, %arg9: memref<2x4x32xf32, #tpu.memory_space<vmem>>, %arg10: memref<4x32xf32, #tpu.memory_space<vmem>>, %arg11: memref<4x32xf32, #tpu.memory_space<vmem>>) attributes {dimension_semantics = [#tpu.dimension_semantics<parallel>, #tpu.dimension_semantics<arbitrary>], iteration_bounds = array<i64: 1, 4>, scalar_prefetch = 0 : i64, scratch_operands = 2 : i64, tpu.core_type = #tpu.core_type<tc>, window_params = [{transform_indices = @transform_0, window_bounds = array<i64: 2, 4, 128>}, {pipeline_mode = #tpu.pipeline_mode<synchronous>, transform_indices = @transform_1, window_bounds = array<i64: 32, 128>}, {pipeline_mode = #tpu.pipeline_mode<synchronous>, transform_indices = @transform_2, window_bounds = array<i64: 1, 96>}, {pipeline_mode = #tpu.pipeline_mode<synchronous>, transform_indices = @transform_3, window_bounds = array<i64: 1, 128>}, {pipeline_mode = #tpu.pipeline_mode<synchronous>, transform_indices = @transform_4, window_bounds = array<i64: 1, 128>}, {pipeline_mode = #tpu.pipeline_mode<synchronous>, transform_indices = @transform_5, window_bounds = array<i64: 4, 32>}, {pipeline_mode = #tpu.pipeline_mode<synchronous>, transform_indices = @transform_6, window_bounds = array<i64: 4, 32>}, {transform_indices = @transform_7, window_bounds = array<i64: 2, 4, 32>}]} {
    %c0_i32 = arith.constant 0 : i32
    %0 = arith.cmpi eq, %arg1, %c0_i32 : i32
    %1 = arith.extui %0 : i1 to i32
    %c0_i32_0 = arith.constant 0 : i32
    %2 = arith.cmpi ne, %1, %c0_i32_0 : i32
    scf.if %2 {
      %c0_74 = arith.constant 0 : index
      %c0_75 = arith.constant 0 : index
      %280 = vector.load %arg7[%c0_74, %c0_75] : memref<4x32xf32, #tpu.memory_space<vmem>>, vector<4x32xf32>
      %c0_76 = arith.constant 0 : index
      %c0_77 = arith.constant 0 : index
      %281 = vector.load %arg10[%c0_76, %c0_77] : memref<4x32xf32, #tpu.memory_space<vmem>>, vector<4x32xf32>
      tpu.vector_store %arg10[%c0_76, %c0_77], %280 {strides = array<i32>} : memref<4x32xf32, #tpu.memory_space<vmem>>, vector<4x32xf32>,
      %c0_78 = arith.constant 0 : index
      %c0_79 = arith.constant 0 : index
      %282 = vector.load %arg8[%c0_78, %c0_79] : memref<4x32xf32, #tpu.memory_space<vmem>>, vector<4x32xf32>
      %c0_80 = arith.constant 0 : index
      %c0_81 = arith.constant 0 : index
      %283 = vector.load %arg11[%c0_80, %c0_81] : memref<4x32xf32, #tpu.memory_space<vmem>>, vector<4x32xf32>
      tpu.vector_store %arg11[%c0_80, %c0_81], %282 {strides = array<i32>} : memref<4x32xf32, #tpu.memory_space<vmem>>, vector<4x32xf32>,
    } else {
    }
    %c0 = arith.constant 0 : index
    %c0_1 = arith.constant 0 : index
    %3 = vector.load %arg3[%c0, %c0_1] : memref<32x128xf32, #tpu.memory_space<vmem>>, vector<32x128xf32>
    %c0_2 = arith.constant 0 : index
    %c0_3 = arith.constant 0 : index
    %4 = vector.load %arg4[%c0_2, %c0_3] : memref<1x96xf32, #tpu.memory_space<vmem>>, vector<1x96xf32>
    %5 = vector.extract_strided_slice %4 {offsets = [0, 0], sizes = [1, 32], strides = [1, 1]} : vector<1x96xf32> to vector<1x32xf32>
    %6 = vector.extract_strided_slice %4 {offsets = [0, 32], sizes = [1, 32], strides = [1, 1]} : vector<1x96xf32> to vector<1x32xf32>
    %7 = vector.extract_strided_slice %4 {offsets = [0, 64], sizes = [1, 32], strides = [1, 1]} : vector<1x96xf32> to vector<1x32xf32>
    %c0_4 = arith.constant 0 : index
    %c0_5 = arith.constant 0 : index
    %8 = vector.load %arg5[%c0_4, %c0_5] : memref<1x128xf32, #tpu.memory_space<vmem>>, vector<1x128xf32>
    %c0_6 = arith.constant 0 : index
    %c0_7 = arith.constant 0 : index
    %9 = vector.load %arg6[%c0_6, %c0_7] : memref<1x128xf32, #tpu.memory_space<vmem>>, vector<1x128xf32>
    %10 = vector.extract_strided_slice %8 {offsets = [0, 0], sizes = [1, 32], strides = [1, 1]} : vector<1x128xf32> to vector<1x32xf32>
    %11 = vector.extract_strided_slice %8 {offsets = [0, 32], sizes = [1, 32], strides = [1, 1]} : vector<1x128xf32> to vector<1x32xf32>
    %12 = vector.extract_strided_slice %8 {offsets = [0, 64], sizes = [1, 32], strides = [1, 1]} : vector<1x128xf32> to vector<1x32xf32>
    %13 = vector.extract_strided_slice %8 {offsets = [0, 96], sizes = [1, 32], strides = [1, 1]} : vector<1x128xf32> to vector<1x32xf32>
    %14 = vector.extract_strided_slice %9 {offsets = [0, 0], sizes = [1, 32], strides = [1, 1]} : vector<1x128xf32> to vector<1x32xf32>
    %15 = vector.extract_strided_slice %9 {offsets = [0, 32], sizes = [1, 32], strides = [1, 1]} : vector<1x128xf32> to vector<1x32xf32>
    %16 = vector.extract_strided_slice %9 {offsets = [0, 64], sizes = [1, 32], strides = [1, 1]} : vector<1x128xf32> to vector<1x32xf32>
    %17 = vector.extract_strided_slice %9 {offsets = [0, 96], sizes = [1, 32], strides = [1, 1]} : vector<1x128xf32> to vector<1x32xf32>
    %c0_8 = arith.constant 0 : index
    %c0_9 = arith.constant 0 : index
    %18 = vector.load %arg10[%c0_8, %c0_9] : memref<4x32xf32, #tpu.memory_space<vmem>>, vector<4x32xf32>
    %c0_10 = arith.constant 0 : index
    %c0_11 = arith.constant 0 : index
    %19 = vector.load %arg11[%c0_10, %c0_11] : memref<4x32xf32, #tpu.memory_space<vmem>>, vector<4x32xf32>
    %c0_12 = arith.constant 0 : index
    %c0_13 = arith.constant 0 : index
    %c0_14 = arith.constant 0 : index
    %20 = vector.load %arg2[%c0_12, %c0_13, %c0_14] : memref<2x4x128xf32, #tpu.memory_space<vmem>>, vector<1x4x128xf32>
    %21 = vector.shape_cast %20 : vector<1x4x128xf32> to vector<4x128xf32>
    %cst = arith.constant dense<0.000000e+00> : vector<4x128xf32>
    %22 = tpu.matmul %18, %3, %cst {dimension_numbers = #tpu.dot_dimension_numbers<[1], [0], [0], [1], [0, 0, 1, 1], [], []>} : vector<4x32xf32>, vector<32x128xf32>, vector<4x128xf32> -> vector<4x128xf32>
    %23 = arith.addf %21, %22 : vector<4x128xf32>
    %24 = vector.extract_strided_slice %23 {offsets = [0, 0], sizes = [4, 32], strides = [1, 1]} : vector<4x128xf32> to vector<4x32xf32>
    %25 = vector.broadcast %5 : vector<1x32xf32> to vector<4x32xf32>
    %26 = arith.mulf %25, %19 : vector<4x32xf32>
    %27 = arith.addf %24, %26 : vector<4x32xf32>
    %cst_15 = arith.constant dense<0.000000e+00> : vector<4xf32>
    %28 = vector.multi_reduction <add>, %27, %cst_15 [1] : vector<4x32xf32> to vector<4xf32>
    %29 = vector.shape_cast %28 : vector<4xf32> to vector<4x1xf32>
    %cst_16 = arith.constant 3.125000e-02 : f32
    %30 = vector.broadcast %cst_16 : f32 to vector<4x1xf32>
    %31 = arith.mulf %29, %30 : vector<4x1xf32>
    %32 = arith.mulf %27, %27 : vector<4x32xf32>
    %cst_17 = arith.constant dense<0.000000e+00> : vector<4xf32>
    %33 = vector.multi_reduction <add>, %32, %cst_17 [1] : vector<4x32xf32> to vector<4xf32>
    %34 = vector.shape_cast %33 : vector<4xf32> to vector<4x1xf32>
    %cst_18 = arith.constant 3.125000e-02 : f32
    %35 = vector.broadcast %cst_18 : f32 to vector<4x1xf32>
    %36 = arith.mulf %34, %35 : vector<4x1xf32>
    %37 = arith.mulf %31, %31 : vector<4x1xf32>
    %38 = arith.subf %36, %37 : vector<4x1xf32>
    %39 = vector.broadcast %31 : vector<4x1xf32> to vector<4x32xf32>
    %40 = arith.subf %27, %39 : vector<4x32xf32>
    %cst_19 = arith.constant 9.99999974E-6 : f32
    %41 = vector.broadcast %cst_19 : f32 to vector<4x1xf32>
    %42 = arith.addf %38, %41 : vector<4x1xf32>
    %43 = math.rsqrt %42 : vector<4x1xf32>
    %44 = vector.broadcast %43 : vector<4x1xf32> to vector<4x32xf32>
    %45 = arith.mulf %40, %44 : vector<4x32xf32>
    %46 = vector.broadcast %10 : vector<1x32xf32> to vector<4x32xf32>
    %47 = arith.mulf %45, %46 : vector<4x32xf32>
    %48 = vector.broadcast %14 : vector<1x32xf32> to vector<4x32xf32>
    %49 = arith.addf %47, %48 : vector<4x32xf32>
    %50 = arith.negf %49 : vector<4x32xf32>
    %51 = math.exp %50 : vector<4x32xf32>
    %cst_20 = arith.constant 1.000000e+00 : f32
    %52 = vector.broadcast %cst_20 : f32 to vector<4x32xf32>
    %53 = arith.addf %52, %51 : vector<4x32xf32>
    %54 = arith.divf %52, %53 : vector<4x32xf32>
    %55 = vector.extract_strided_slice %23 {offsets = [0, 32], sizes = [4, 32], strides = [1, 1]} : vector<4x128xf32> to vector<4x32xf32>
    %56 = vector.broadcast %6 : vector<1x32xf32> to vector<4x32xf32>
    %57 = arith.mulf %56, %19 : vector<4x32xf32>
    %58 = arith.addf %55, %57 : vector<4x32xf32>
    %cst_21 = arith.constant dense<0.000000e+00> : vector<4xf32>
    %59 = vector.multi_reduction <add>, %58, %cst_21 [1] : vector<4x32xf32> to vector<4xf32>
    %60 = vector.shape_cast %59 : vector<4xf32> to vector<4x1xf32>
    %cst_22 = arith.constant 3.125000e-02 : f32
    %61 = vector.broadcast %cst_22 : f32 to vector<4x1xf32>
    %62 = arith.mulf %60, %61 : vector<4x1xf32>
    %63 = arith.mulf %58, %58 : vector<4x32xf32>
    %cst_23 = arith.constant dense<0.000000e+00> : vector<4xf32>
    %64 = vector.multi_reduction <add>, %63, %cst_23 [1] : vector<4x32xf32> to vector<4xf32>
    %65 = vector.shape_cast %64 : vector<4xf32> to vector<4x1xf32>
    %cst_24 = arith.constant 3.125000e-02 : f32
    %66 = vector.broadcast %cst_24 : f32 to vector<4x1xf32>
    %67 = arith.mulf %65, %66 : vector<4x1xf32>
    %68 = arith.mulf %62, %62 : vector<4x1xf32>
    %69 = arith.subf %67, %68 : vector<4x1xf32>
    %70 = vector.broadcast %62 : vector<4x1xf32> to vector<4x32xf32>
    %71 = arith.subf %58, %70 : vector<4x32xf32>
    %cst_25 = arith.constant 9.99999974E-6 : f32
    %72 = vector.broadcast %cst_25 : f32 to vector<4x1xf32>
    %73 = arith.addf %69, %72 : vector<4x1xf32>
    %74 = math.rsqrt %73 : vector<4x1xf32>
    %75 = vector.broadcast %74 : vector<4x1xf32> to vector<4x32xf32>
    %76 = arith.mulf %71, %75 : vector<4x32xf32>
    %77 = vector.broadcast %11 : vector<1x32xf32> to vector<4x32xf32>
    %78 = arith.mulf %76, %77 : vector<4x32xf32>
    %79 = vector.broadcast %15 : vector<1x32xf32> to vector<4x32xf32>
    %80 = arith.addf %78, %79 : vector<4x32xf32>
    %81 = arith.negf %80 : vector<4x32xf32>
    %82 = math.exp %81 : vector<4x32xf32>
    %cst_26 = arith.constant 1.000000e+00 : f32
    %83 = vector.broadcast %cst_26 : f32 to vector<4x32xf32>
    %84 = arith.addf %83, %82 : vector<4x32xf32>
    %85 = arith.divf %83, %84 : vector<4x32xf32>
    %86 = vector.extract_strided_slice %23 {offsets = [0, 64], sizes = [4, 32], strides = [1, 1]} : vector<4x128xf32> to vector<4x32xf32>
    %87 = vector.broadcast %7 : vector<1x32xf32> to vector<4x32xf32>
    %88 = arith.mulf %87, %19 : vector<4x32xf32>
    %89 = arith.addf %86, %88 : vector<4x32xf32>
    %cst_27 = arith.constant dense<0.000000e+00> : vector<4xf32>
    %90 = vector.multi_reduction <add>, %89, %cst_27 [1] : vector<4x32xf32> to vector<4xf32>
    %91 = vector.shape_cast %90 : vector<4xf32> to vector<4x1xf32>
    %cst_28 = arith.constant 3.125000e-02 : f32
    %92 = vector.broadcast %cst_28 : f32 to vector<4x1xf32>
    %93 = arith.mulf %91, %92 : vector<4x1xf32>
    %94 = arith.mulf %89, %89 : vector<4x32xf32>
    %cst_29 = arith.constant dense<0.000000e+00> : vector<4xf32>
    %95 = vector.multi_reduction <add>, %94, %cst_29 [1] : vector<4x32xf32> to vector<4xf32>
    %96 = vector.shape_cast %95 : vector<4xf32> to vector<4x1xf32>
    %cst_30 = arith.constant 3.125000e-02 : f32
    %97 = vector.broadcast %cst_30 : f32 to vector<4x1xf32>
    %98 = arith.mulf %96, %97 : vector<4x1xf32>
    %99 = arith.mulf %93, %93 : vector<4x1xf32>
    %100 = arith.subf %98, %99 : vector<4x1xf32>
    %101 = vector.broadcast %93 : vector<4x1xf32> to vector<4x32xf32>
    %102 = arith.subf %89, %101 : vector<4x32xf32>
    %cst_31 = arith.constant 9.99999974E-6 : f32
    %103 = vector.broadcast %cst_31 : f32 to vector<4x1xf32>
    %104 = arith.addf %100, %103 : vector<4x1xf32>
    %105 = math.rsqrt %104 : vector<4x1xf32>
    %106 = vector.broadcast %105 : vector<4x1xf32> to vector<4x32xf32>
    %107 = arith.mulf %102, %106 : vector<4x32xf32>
    %108 = vector.broadcast %12 : vector<1x32xf32> to vector<4x32xf32>
    %109 = arith.mulf %107, %108 : vector<4x32xf32>
    %110 = vector.broadcast %16 : vector<1x32xf32> to vector<4x32xf32>
    %111 = arith.addf %109, %110 : vector<4x32xf32>
    %112 = arith.negf %111 : vector<4x32xf32>
    %113 = math.exp %112 : vector<4x32xf32>
    %cst_32 = arith.constant 1.000000e+00 : f32
    %114 = vector.broadcast %cst_32 : f32 to vector<4x32xf32>
    %115 = arith.addf %114, %113 : vector<4x32xf32>
    %116 = arith.divf %114, %115 : vector<4x32xf32>
    %117 = vector.extract_strided_slice %23 {offsets = [0, 96], sizes = [4, 32], strides = [1, 1]} : vector<4x128xf32> to vector<4x32xf32>
    %cst_33 = arith.constant dense<0.000000e+00> : vector<4xf32>
    %118 = vector.multi_reduction <add>, %117, %cst_33 [1] : vector<4x32xf32> to vector<4xf32>
    %119 = vector.shape_cast %118 : vector<4xf32> to vector<4x1xf32>
    %cst_34 = arith.constant 3.125000e-02 : f32
    %120 = vector.broadcast %cst_34 : f32 to vector<4x1xf32>
    %121 = arith.mulf %119, %120 : vector<4x1xf32>
    %122 = arith.mulf %117, %117 : vector<4x32xf32>
    %cst_35 = arith.constant dense<0.000000e+00> : vector<4xf32>
    %123 = vector.multi_reduction <add>, %122, %cst_35 [1] : vector<4x32xf32> to vector<4xf32>
    %124 = vector.shape_cast %123 : vector<4xf32> to vector<4x1xf32>
    %cst_36 = arith.constant 3.125000e-02 : f32
    %125 = vector.broadcast %cst_36 : f32 to vector<4x1xf32>
    %126 = arith.mulf %124, %125 : vector<4x1xf32>
    %127 = arith.mulf %121, %121 : vector<4x1xf32>
    %128 = arith.subf %126, %127 : vector<4x1xf32>
    %129 = vector.broadcast %121 : vector<4x1xf32> to vector<4x32xf32>
    %130 = arith.subf %117, %129 : vector<4x32xf32>
    %cst_37 = arith.constant 9.99999974E-6 : f32
    %131 = vector.broadcast %cst_37 : f32 to vector<4x1xf32>
    %132 = arith.addf %128, %131 : vector<4x1xf32>
    %133 = math.rsqrt %132 : vector<4x1xf32>
    %134 = vector.broadcast %133 : vector<4x1xf32> to vector<4x32xf32>
    %135 = arith.mulf %130, %134 : vector<4x32xf32>
    %136 = vector.broadcast %13 : vector<1x32xf32> to vector<4x32xf32>
    %137 = arith.mulf %135, %136 : vector<4x32xf32>
    %138 = vector.broadcast %17 : vector<1x32xf32> to vector<4x32xf32>
    %139 = arith.addf %137, %138 : vector<4x32xf32>
    %140 = math.tanh %139 : vector<4x32xf32>
    %141 = arith.mulf %85, %19 : vector<4x32xf32>
    %142 = arith.mulf %54, %140 : vector<4x32xf32>
    %143 = arith.addf %141, %142 : vector<4x32xf32>
    %144 = math.tanh %143 : vector<4x32xf32>
    %145 = arith.mulf %144, %116 : vector<4x32xf32>
    %c0_38 = arith.constant 0 : index
    %c0_39 = arith.constant 0 : index
    %c0_40 = arith.constant 0 : index
    %146 = vector.load %arg9[%c0_38, %c0_39, %c0_40] : memref<2x4x32xf32, #tpu.memory_space<vmem>>, vector<1x4x32xf32>
    %147 = vector.shape_cast %146 : vector<1x4x32xf32> to vector<4x32xf32>
    %148 = vector.shape_cast %145 : vector<4x32xf32> to vector<1x4x32xf32>
    tpu.vector_store %arg9[%c0_38, %c0_39, %c0_40], %148 {strides = array<i32>} : memref<2x4x32xf32, #tpu.memory_space<vmem>>, vector<1x4x32xf32>,
    %c1 = arith.constant 1 : index
    %c0_41 = arith.constant 0 : index
    %c0_42 = arith.constant 0 : index
    %149 = vector.load %arg2[%c1, %c0_41, %c0_42] : memref<2x4x128xf32, #tpu.memory_space<vmem>>, vector<1x4x128xf32>
    %150 = vector.shape_cast %149 : vector<1x4x128xf32> to vector<4x128xf32>
    %cst_43 = arith.constant dense<0.000000e+00> : vector<4x128xf32>
    %151 = tpu.matmul %145, %3, %cst_43 {dimension_numbers = #tpu.dot_dimension_numbers<[1], [0], [0], [1], [0, 0, 1, 1], [], []>} : vector<4x32xf32>, vector<32x128xf32>, vector<4x128xf32> -> vector<4x128xf32>
    %152 = arith.addf %150, %151 : vector<4x128xf32>
    %153 = vector.extract_strided_slice %152 {offsets = [0, 0], sizes = [4, 32], strides = [1, 1]} : vector<4x128xf32> to vector<4x32xf32>
    %154 = vector.broadcast %5 : vector<1x32xf32> to vector<4x32xf32>
    %155 = arith.mulf %154, %143 : vector<4x32xf32>
    %156 = arith.addf %153, %155 : vector<4x32xf32>
    %cst_44 = arith.constant dense<0.000000e+00> : vector<4xf32>
    %157 = vector.multi_reduction <add>, %156, %cst_44 [1] : vector<4x32xf32> to vector<4xf32>
    %158 = vector.shape_cast %157 : vector<4xf32> to vector<4x1xf32>
    %cst_45 = arith.constant 3.125000e-02 : f32
    %159 = vector.broadcast %cst_45 : f32 to vector<4x1xf32>
    %160 = arith.mulf %158, %159 : vector<4x1xf32>
    %161 = arith.mulf %156, %156 : vector<4x32xf32>
    %cst_46 = arith.constant dense<0.000000e+00> : vector<4xf32>
    %162 = vector.multi_reduction <add>, %161, %cst_46 [1] : vector<4x32xf32> to vector<4xf32>
    %163 = vector.shape_cast %162 : vector<4xf32> to vector<4x1xf32>
    %cst_47 = arith.constant 3.125000e-02 : f32
    %164 = vector.broadcast %cst_47 : f32 to vector<4x1xf32>
    %165 = arith.mulf %163, %164 : vector<4x1xf32>
    %166 = arith.mulf %160, %160 : vector<4x1xf32>
    %167 = arith.subf %165, %166 : vector<4x1xf32>
    %168 = vector.broadcast %160 : vector<4x1xf32> to vector<4x32xf32>
    %169 = arith.subf %156, %168 : vector<4x32xf32>
    %cst_48 = arith.constant 9.99999974E-6 : f32
    %170 = vector.broadcast %cst_48 : f32 to vector<4x1xf32>
    %171 = arith.addf %167, %170 : vector<4x1xf32>
    %172 = math.rsqrt %171 : vector<4x1xf32>
    %173 = vector.broadcast %172 : vector<4x1xf32> to vector<4x32xf32>
    %174 = arith.mulf %169, %173 : vector<4x32xf32>
    %175 = vector.broadcast %10 : vector<1x32xf32> to vector<4x32xf32>
    %176 = arith.mulf %174, %175 : vector<4x32xf32>
    %177 = vector.broadcast %14 : vector<1x32xf32> to vector<4x32xf32>
    %178 = arith.addf %176, %177 : vector<4x32xf32>
    %179 = arith.negf %178 : vector<4x32xf32>
    %180 = math.exp %179 : vector<4x32xf32>
    %cst_49 = arith.constant 1.000000e+00 : f32
    %181 = vector.broadcast %cst_49 : f32 to vector<4x32xf32>
    %182 = arith.addf %181, %180 : vector<4x32xf32>
    %183 = arith.divf %181, %182 : vector<4x32xf32>
    %184 = vector.extract_strided_slice %152 {offsets = [0, 32], sizes = [4, 32], strides = [1, 1]} : vector<4x128xf32> to vector<4x32xf32>
    %185 = vector.broadcast %6 : vector<1x32xf32> to vector<4x32xf32>
    %186 = arith.mulf %185, %143 : vector<4x32xf32>
    %187 = arith.addf %184, %186 : vector<4x32xf32>
    %cst_50 = arith.constant dense<0.000000e+00> : vector<4xf32>
    %188 = vector.multi_reduction <add>, %187, %cst_50 [1] : vector<4x32xf32> to vector<4xf32>
    %189 = vector.shape_cast %188 : vector<4xf32> to vector<4x1xf32>
    %cst_51 = arith.constant 3.125000e-02 : f32
    %190 = vector.broadcast %cst_51 : f32 to vector<4x1xf32>
    %191 = arith.mulf %189, %190 : vector<4x1xf32>
    %192 = arith.mulf %187, %187 : vector<4x32xf32>
    %cst_52 = arith.constant dense<0.000000e+00> : vector<4xf32>
    %193 = vector.multi_reduction <add>, %192, %cst_52 [1] : vector<4x32xf32> to vector<4xf32>
    %194 = vector.shape_cast %193 : vector<4xf32> to vector<4x1xf32>
    %cst_53 = arith.constant 3.125000e-02 : f32
    %195 = vector.broadcast %cst_53 : f32 to vector<4x1xf32>
    %196 = arith.mulf %194, %195 : vector<4x1xf32>
    %197 = arith.mulf %191, %191 : vector<4x1xf32>
    %198 = arith.subf %196, %197 : vector<4x1xf32>
    %199 = vector.broadcast %191 : vector<4x1xf32> to vector<4x32xf32>
    %200 = arith.subf %187, %199 : vector<4x32xf32>
    %cst_54 = arith.constant 9.99999974E-6 : f32
    %201 = vector.broadcast %cst_54 : f32 to vector<4x1xf32>
    %202 = arith.addf %198, %201 : vector<4x1xf32>
    %203 = math.rsqrt %202 : vector<4x1xf32>
    %204 = vector.broadcast %203 : vector<4x1xf32> to vector<4x32xf32>
    %205 = arith.mulf %200, %204 : vector<4x32xf32>
    %206 = vector.broadcast %11 : vector<1x32xf32> to vector<4x32xf32>
    %207 = arith.mulf %205, %206 : vector<4x32xf32>
    %208 = vector.broadcast %15 : vector<1x32xf32> to vector<4x32xf32>
    %209 = arith.addf %207, %208 : vector<4x32xf32>
    %210 = arith.negf %209 : vector<4x32xf32>
    %211 = math.exp %210 : vector<4x32xf32>
    %cst_55 = arith.constant 1.000000e+00 : f32
    %212 = vector.broadcast %cst_55 : f32 to vector<4x32xf32>
    %213 = arith.addf %212, %211 : vector<4x32xf32>
    %214 = arith.divf %212, %213 : vector<4x32xf32>
    %215 = vector.extract_strided_slice %152 {offsets = [0, 64], sizes = [4, 32], strides = [1, 1]} : vector<4x128xf32> to vector<4x32xf32>
    %216 = vector.broadcast %7 : vector<1x32xf32> to vector<4x32xf32>
    %217 = arith.mulf %216, %143 : vector<4x32xf32>
    %218 = arith.addf %215, %217 : vector<4x32xf32>
    %cst_56 = arith.constant dense<0.000000e+00> : vector<4xf32>
    %219 = vector.multi_reduction <add>, %218, %cst_56 [1] : vector<4x32xf32> to vector<4xf32>
    %220 = vector.shape_cast %219 : vector<4xf32> to vector<4x1xf32>
    %cst_57 = arith.constant 3.125000e-02 : f32
    %221 = vector.broadcast %cst_57 : f32 to vector<4x1xf32>
    %222 = arith.mulf %220, %221 : vector<4x1xf32>
    %223 = arith.mulf %218, %218 : vector<4x32xf32>
    %cst_58 = arith.constant dense<0.000000e+00> : vector<4xf32>
    %224 = vector.multi_reduction <add>, %223, %cst_58 [1] : vector<4x32xf32> to vector<4xf32>
    %225 = vector.shape_cast %224 : vector<4xf32> to vector<4x1xf32>
    %cst_59 = arith.constant 3.125000e-02 : f32
    %226 = vector.broadcast %cst_59 : f32 to vector<4x1xf32>
    %227 = arith.mulf %225, %226 : vector<4x1xf32>
    %228 = arith.mulf %222, %222 : vector<4x1xf32>
    %229 = arith.subf %227, %228 : vector<4x1xf32>
    %230 = vector.broadcast %222 : vector<4x1xf32> to vector<4x32xf32>
    %231 = arith.subf %218, %230 : vector<4x32xf32>
    %cst_60 = arith.constant 9.99999974E-6 : f32
    %232 = vector.broadcast %cst_60 : f32 to vector<4x1xf32>
    %233 = arith.addf %229, %232 : vector<4x1xf32>
    %234 = math.rsqrt %233 : vector<4x1xf32>
    %235 = vector.broadcast %234 : vector<4x1xf32> to vector<4x32xf32>
    %236 = arith.mulf %231, %235 : vector<4x32xf32>
    %237 = vector.broadcast %12 : vector<1x32xf32> to vector<4x32xf32>
    %238 = arith.mulf %236, %237 : vector<4x32xf32>
    %239 = vector.broadcast %16 : vector<1x32xf32> to vector<4x32xf32>
    %240 = arith.addf %238, %239 : vector<4x32xf32>
    %241 = arith.negf %240 : vector<4x32xf32>
    %242 = math.exp %241 : vector<4x32xf32>
    %cst_61 = arith.constant 1.000000e+00 : f32
    %243 = vector.broadcast %cst_61 : f32 to vector<4x32xf32>
    %244 = arith.addf %243, %242 : vector<4x32xf32>
    %245 = arith.divf %243, %244 : vector<4x32xf32>
    %246 = vector.extract_strided_slice %152 {offsets = [0, 96], sizes = [4, 32], strides = [1, 1]} : vector<4x128xf32> to vector<4x32xf32>
    %cst_62 = arith.constant dense<0.000000e+00> : vector<4xf32>
    %247 = vector.multi_reduction <add>, %246, %cst_62 [1] : vector<4x32xf32> to vector<4xf32>
    %248 = vector.shape_cast %247 : vector<4xf32> to vector<4x1xf32>
    %cst_63 = arith.constant 3.125000e-02 : f32
    %249 = vector.broadcast %cst_63 : f32 to vector<4x1xf32>
    %250 = arith.mulf %248, %249 : vector<4x1xf32>
    %251 = arith.mulf %246, %246 : vector<4x32xf32>
    %cst_64 = arith.constant dense<0.000000e+00> : vector<4xf32>
    %252 = vector.multi_reduction <add>, %251, %cst_64 [1] : vector<4x32xf32> to vector<4xf32>
    %253 = vector.shape_cast %252 : vector<4xf32> to vector<4x1xf32>
    %cst_65 = arith.constant 3.125000e-02 : f32
    %254 = vector.broadcast %cst_65 : f32 to vector<4x1xf32>
    %255 = arith.mulf %253, %254 : vector<4x1xf32>
    %256 = arith.mulf %250, %250 : vector<4x1xf32>
    %257 = arith.subf %255, %256 : vector<4x1xf32>
    %258 = vector.broadcast %250 : vector<4x1xf32> to vector<4x32xf32>
    %259 = arith.subf %246, %258 : vector<4x32xf32>
    %cst_66 = arith.constant 9.99999974E-6 : f32
    %260 = vector.broadcast %cst_66 : f32 to vector<4x1xf32>
    %261 = arith.addf %257, %260 : vector<4x1xf32>
    %262 = math.rsqrt %261 : vector<4x1xf32>
    %263 = vector.broadcast %262 : vector<4x1xf32> to vector<4x32xf32>
    %264 = arith.mulf %259, %263 : vector<4x32xf32>
    %265 = vector.broadcast %13 : vector<1x32xf32> to vector<4x32xf32>
    %266 = arith.mulf %264, %265 : vector<4x32xf32>
    %267 = vector.broadcast %17 : vector<1x32xf32> to vector<4x32xf32>
    %268 = arith.addf %266, %267 : vector<4x32xf32>
    %269 = math.tanh %268 : vector<4x32xf32>
    %270 = arith.mulf %214, %143 : vector<4x32xf32>
    %271 = arith.mulf %183, %269 : vector<4x32xf32>
    %272 = arith.addf %270, %271 : vector<4x32xf32>
    %273 = math.tanh %272 : vector<4x32xf32>
    %274 = arith.mulf %273, %245 : vector<4x32xf32>
    %c1_67 = arith.constant 1 : index
    %c0_68 = arith.constant 0 : index
    %c0_69 = arith.constant 0 : index
    %275 = vector.load %arg9[%c1_67, %c0_68, %c0_69] : memref<2x4x32xf32, #tpu.memory_space<vmem>>, vector<1x4x32xf32>
    %276 = vector.shape_cast %275 : vector<1x4x32xf32> to vector<4x32xf32>
    %277 = vector.shape_cast %274 : vector<4x32xf32> to vector<1x4x32xf32>
    tpu.vector_store %arg9[%c1_67, %c0_68, %c0_69], %277 {strides = array<i32>} : memref<2x4x32xf32, #tpu.memory_space<vmem>>, vector<1x4x32xf32>,
    %c0_70 = arith.constant 0 : index
    %c0_71 = arith.constant 0 : index
    %278 = vector.load %arg10[%c0_70, %c0_71] : memref<4x32xf32, #tpu.memory_space<vmem>>, vector<4x32xf32>
    tpu.vector_store %arg10[%c0_70, %c0_71], %274 {strides = array<i32>} : memref<4x32xf32, #tpu.memory_space<vmem>>, vector<4x32xf32>,
    %c0_72 = arith.constant 0 : index
    %c0_73 = arith.constant 0 : index
    %279 = vector.load %arg11[%c0_72, %c0_73] : memref<4x32xf32, #tpu.memory_space<vmem>>, vector<4x32xf32>
    tpu.vector_store %arg11[%c0_72, %c0_73], %272 {strides = array<i32>} : memref<4x32xf32, #tpu.memory_space<vmem>>, vector<4x32xf32>,
    return
  }
  func.func @transform_0(%arg0: i32, %arg1: i32) -> (i32, i32, i32) {
    %c0_i32 = arith.constant 0 : i32
    %c0_i32_0 = arith.constant 0 : i32
    return %arg1, %arg0, %c0_i32 : i32, i32, i32
  }
  func.func @transform_1(%arg0: i32, %arg1: i32) -> (i32, i32) {
    %c0_i32 = arith.constant 0 : i32
    %c0_i32_0 = arith.constant 0 : i32
    %c0_i32_1 = arith.constant 0 : i32
    return %c0_i32, %c0_i32_0 : i32, i32
  }
  func.func @transform_2(%arg0: i32, %arg1: i32) -> (i32, i32) {
    %c0_i32 = arith.constant 0 : i32
    %c0_i32_0 = arith.constant 0 : i32
    %c0_i32_1 = arith.constant 0 : i32
    return %c0_i32, %c0_i32_0 : i32, i32
  }
  func.func @transform_3(%arg0: i32, %arg1: i32) -> (i32, i32) {
    %c0_i32 = arith.constant 0 : i32
    %c0_i32_0 = arith.constant 0 : i32
    %c0_i32_1 = arith.constant 0 : i32
    return %c0_i32, %c0_i32_0 : i32, i32
  }
  func.func @transform_4(%arg0: i32, %arg1: i32) -> (i32, i32) {
    %c0_i32 = arith.constant 0 : i32
    %c0_i32_0 = arith.constant 0 : i32
    %c0_i32_1 = arith.constant 0 : i32
    return %c0_i32, %c0_i32_0 : i32, i32
  }
  func.func @transform_5(%arg0: i32, %arg1: i32) -> (i32, i32) {
    %c0_i32 = arith.constant 0 : i32
    %c0_i32_0 = arith.constant 0 : i32
    return %arg0, %c0_i32 : i32, i32
  }
  func.func @transform_6(%arg0: i32, %arg1: i32) -> (i32, i32) {
    %c0_i32 = arith.constant 0 : i32
    %c0_i32_0 = arith.constant 0 : i32
    return %arg0, %c0_i32 : i32, i32
  }
  func.func @transform_7(%arg0: i32, %arg1: i32) -> (i32, i32, i32) {
    %c0_i32 = arith.constant 0 : i32
    %c0_i32_0 = arith.constant 0 : i32
    return %arg1, %arg0, %c0_i32 : i32, i32, i32
  }
}

module attributes {stable_mosaic.version = 11 : i64} {
  func.func @_sota_lstm_kernel(%arg0: i32, %arg1: i32, %arg2: memref<2x4x128xf32, #tpu.memory_space<vmem>>, %arg3: memref<32x128xf32, #tpu.memory_space<vmem>>, %arg4: memref<1x96xf32, #tpu.memory_space<vmem>>, %arg5: memref<1x128xf32, #tpu.memory_space<vmem>>, %arg6: memref<1x128xf32, #tpu.memory_space<vmem>>, %arg7: memref<4x32xf32, #tpu.memory_space<vmem>>, %arg8: memref<4x32xf32, #tpu.memory_space<vmem>>, %arg9: memref<2x4x32xf32, #tpu.memory_space<vmem>>, %arg10: memref<4x32xf32, #tpu.memory_space<vmem>>, %arg11: memref<4x32xf32, #tpu.memory_space<vmem>>) attributes {dimension_semantics = [#tpu.dimension_semantics<parallel>, #tpu.dimension_semantics<arbitrary>], iteration_bounds = array<i64: 1, 4>, scalar_prefetch = 0 : i64, scratch_operands = 2 : i64, tpu.core_type = #tpu.core_type<tc>, window_params = [{transform_indices = @transform_0, window_bounds = array<i64: 2, 4, 128>}, {pipeline_mode = #tpu.pipeline_mode<synchronous>, transform_indices = @transform_1, window_bounds = array<i64: 32, 128>}, {pipeline_mode = #tpu.pipeline_mode<synchronous>, transform_indices = @transform_2, window_bounds = array<i64: 1, 96>}, {pipeline_mode = #tpu.pipeline_mode<synchronous>, transform_indices = @transform_3, window_bounds = array<i64: 1, 128>}, {pipeline_mode = #tpu.pipeline_mode<synchronous>, transform_indices = @transform_4, window_bounds = array<i64: 1, 128>}, {transform_indices = @transform_5, window_bounds = array<i64: 4, 32>}, {transform_indices = @transform_6, window_bounds = array<i64: 4, 32>}, {transform_indices = @transform_7, window_bounds = array<i64: 2, 4, 32>}]} {
    %c0_i32 = arith.constant 0 : i32
    %0 = arith.cmpi eq, %arg1, %c0_i32 : i32
    %1 = arith.extui %0 : i1 to i32
    %c0_i32_0 = arith.constant 0 : i32
    %2 = arith.cmpi ne, %1, %c0_i32_0 : i32
    scf.if %2 {
      %c0_74 = arith.constant 0 : index
      %c0_75 = arith.constant 0 : index
      %280 = vector.load %arg7[%c0_74, %c0_75] : memref<4x32xf32, #tpu.memory_space<vmem>>, vector<4x32xf32>
      %c0_76 = arith.constant 0 : index
      %c0_77 = arith.constant 0 : index
      %281 = vector.load %arg10[%c0_76, %c0_77] : memref<4x32xf32, #tpu.memory_space<vmem>>, vector<4x32xf32>
      tpu.vector_store %arg10[%c0_76, %c0_77], %280 {strides = array<i32>} : memref<4x32xf32, #tpu.memory_space<vmem>>, vector<4x32xf32>,
      %c0_78 = arith.constant 0 : index
      %c0_79 = arith.constant 0 : index
      %282 = vector.load %arg8[%c0_78, %c0_79] : memref<4x32xf32, #tpu.memory_space<vmem>>, vector<4x32xf32>
      %c0_80 = arith.constant 0 : index
      %c0_81 = arith.constant 0 : index
      %283 = vector.load %arg11[%c0_80, %c0_81] : memref<4x32xf32, #tpu.memory_space<vmem>>, vector<4x32xf32>
      tpu.vector_store %arg11[%c0_80, %c0_81], %282 {strides = array<i32>} : memref<4x32xf32, #tpu.memory_space<vmem>>, vector<4x32xf32>,
    } else {
    }
    %c0 = arith.constant 0 : index
    %c0_1 = arith.constant 0 : index
    %3 = vector.load %arg3[%c0, %c0_1] : memref<32x128xf32, #tpu.memory_space<vmem>>, vector<32x128xf32>
    %c0_2 = arith.constant 0 : index
    %c0_3 = arith.constant 0 : index
    %4 = vector.load %arg4[%c0_2, %c0_3] : memref<1x96xf32, #tpu.memory_space<vmem>>, vector<1x96xf32>
    %5 = vector.extract_strided_slice %4 {offsets = [0, 0], sizes = [1, 32], strides = [1, 1]} : vector<1x96xf32> to vector<1x32xf32>
    %6 = vector.extract_strided_slice %4 {offsets = [0, 32], sizes = [1, 32], strides = [1, 1]} : vector<1x96xf32> to vector<1x32xf32>
    %7 = vector.extract_strided_slice %4 {offsets = [0, 64], sizes = [1, 32], strides = [1, 1]} : vector<1x96xf32> to vector<1x32xf32>
    %c0_4 = arith.constant 0 : index
    %c0_5 = arith.constant 0 : index
    %8 = vector.load %arg5[%c0_4, %c0_5] : memref<1x128xf32, #tpu.memory_space<vmem>>, vector<1x128xf32>
    %c0_6 = arith.constant 0 : index
    %c0_7 = arith.constant 0 : index
    %9 = vector.load %arg6[%c0_6, %c0_7] : memref<1x128xf32, #tpu.memory_space<vmem>>, vector<1x128xf32>
    %10 = vector.extract_strided_slice %8 {offsets = [0, 0], sizes = [1, 32], strides = [1, 1]} : vector<1x128xf32> to vector<1x32xf32>
    %11 = vector.extract_strided_slice %8 {offsets = [0, 32], sizes = [1, 32], strides = [1, 1]} : vector<1x128xf32> to vector<1x32xf32>
    %12 = vector.extract_strided_slice %8 {offsets = [0, 64], sizes = [1, 32], strides = [1, 1]} : vector<1x128xf32> to vector<1x32xf32>
    %13 = vector.extract_strided_slice %8 {offsets = [0, 96], sizes = [1, 32], strides = [1, 1]} : vector<1x128xf32> to vector<1x32xf32>
    %14 = vector.extract_strided_slice %9 {offsets = [0, 0], sizes = [1, 32], strides = [1, 1]} : vector<1x128xf32> to vector<1x32xf32>
    %15 = vector.extract_strided_slice %9 {offsets = [0, 32], sizes = [1, 32], strides = [1, 1]} : vector<1x128xf32> to vector<1x32xf32>
    %16 = vector.extract_strided_slice %9 {offsets = [0, 64], sizes = [1, 32], strides = [1, 1]} : vector<1x128xf32> to vector<1x32xf32>
    %17 = vector.extract_strided_slice %9 {offsets = [0, 96], sizes = [1, 32], strides = [1, 1]} : vector<1x128xf32> to vector<1x32xf32>
    %c0_8 = arith.constant 0 : index
    %c0_9 = arith.constant 0 : index
    %18 = vector.load %arg10[%c0_8, %c0_9] : memref<4x32xf32, #tpu.memory_space<vmem>>, vector<4x32xf32>
    %c0_10 = arith.constant 0 : index
    %c0_11 = arith.constant 0 : index
    %19 = vector.load %arg11[%c0_10, %c0_11] : memref<4x32xf32, #tpu.memory_space<vmem>>, vector<4x32xf32>
    %c0_12 = arith.constant 0 : index
    %c0_13 = arith.constant 0 : index
    %c0_14 = arith.constant 0 : index
    %20 = vector.load %arg2[%c0_12, %c0_13, %c0_14] : memref<2x4x128xf32, #tpu.memory_space<vmem>>, vector<1x4x128xf32>
    %21 = vector.shape_cast %20 : vector<1x4x128xf32> to vector<4x128xf32>
    %cst = arith.constant dense<0.000000e+00> : vector<4x128xf32>
    %22 = tpu.matmul %18, %3, %cst {dimension_numbers = #tpu.dot_dimension_numbers<[1], [0], [0], [1], [0, 0, 1, 1], [], []>} : vector<4x32xf32>, vector<32x128xf32>, vector<4x128xf32> -> vector<4x128xf32>
    %23 = arith.addf %21, %22 : vector<4x128xf32>
    %24 = vector.extract_strided_slice %23 {offsets = [0, 0], sizes = [4, 32], strides = [1, 1]} : vector<4x128xf32> to vector<4x32xf32>
    %25 = vector.broadcast %5 : vector<1x32xf32> to vector<4x32xf32>
    %26 = arith.mulf %25, %19 : vector<4x32xf32>
    %27 = arith.addf %24, %26 : vector<4x32xf32>
    %cst_15 = arith.constant dense<0.000000e+00> : vector<4xf32>
    %28 = vector.multi_reduction <add>, %27, %cst_15 [1] : vector<4x32xf32> to vector<4xf32>
    %29 = vector.shape_cast %28 : vector<4xf32> to vector<4x1xf32>
    %cst_16 = arith.constant 3.125000e-02 : f32
    %30 = vector.broadcast %cst_16 : f32 to vector<4x1xf32>
    %31 = arith.mulf %29, %30 : vector<4x1xf32>
    %32 = arith.mulf %27, %27 : vector<4x32xf32>
    %cst_17 = arith.constant dense<0.000000e+00> : vector<4xf32>
    %33 = vector.multi_reduction <add>, %32, %cst_17 [1] : vector<4x32xf32> to vector<4xf32>
    %34 = vector.shape_cast %33 : vector<4xf32> to vector<4x1xf32>
    %cst_18 = arith.constant 3.125000e-02 : f32
    %35 = vector.broadcast %cst_18 : f32 to vector<4x1xf32>
    %36 = arith.mulf %34, %35 : vector<4x1xf32>
    %37 = arith.mulf %31, %31 : vector<4x1xf32>
    %38 = arith.subf %36, %37 : vector<4x1xf32>
    %39 = vector.broadcast %31 : vector<4x1xf32> to vector<4x32xf32>
    %40 = arith.subf %27, %39 : vector<4x32xf32>
    %cst_19 = arith.constant 9.99999974E-6 : f32
    %41 = vector.broadcast %cst_19 : f32 to vector<4x1xf32>
    %42 = arith.addf %38, %41 : vector<4x1xf32>
    %43 = math.rsqrt %42 : vector<4x1xf32>
    %44 = vector.broadcast %43 : vector<4x1xf32> to vector<4x32xf32>
    %45 = arith.mulf %40, %44 : vector<4x32xf32>
    %46 = vector.broadcast %10 : vector<1x32xf32> to vector<4x32xf32>
    %47 = arith.mulf %45, %46 : vector<4x32xf32>
    %48 = vector.broadcast %14 : vector<1x32xf32> to vector<4x32xf32>
    %49 = arith.addf %47, %48 : vector<4x32xf32>
    %50 = arith.negf %49 : vector<4x32xf32>
    %51 = math.exp %50 : vector<4x32xf32>
    %cst_20 = arith.constant 1.000000e+00 : f32
    %52 = vector.broadcast %cst_20 : f32 to vector<4x32xf32>
    %53 = arith.addf %52, %51 : vector<4x32xf32>
    %54 = arith.divf %52, %53 : vector<4x32xf32>
    %55 = vector.extract_strided_slice %23 {offsets = [0, 32], sizes = [4, 32], strides = [1, 1]} : vector<4x128xf32> to vector<4x32xf32>
    %56 = vector.broadcast %6 : vector<1x32xf32> to vector<4x32xf32>
    %57 = arith.mulf %56, %19 : vector<4x32xf32>
    %58 = arith.addf %55, %57 : vector<4x32xf32>
    %cst_21 = arith.constant dense<0.000000e+00> : vector<4xf32>
    %59 = vector.multi_reduction <add>, %58, %cst_21 [1] : vector<4x32xf32> to vector<4xf32>
    %60 = vector.shape_cast %59 : vector<4xf32> to vector<4x1xf32>
    %cst_22 = arith.constant 3.125000e-02 : f32
    %61 = vector.broadcast %cst_22 : f32 to vector<4x1xf32>
    %62 = arith.mulf %60, %61 : vector<4x1xf32>
    %63 = arith.mulf %58, %58 : vector<4x32xf32>
    %cst_23 = arith.constant dense<0.000000e+00> : vector<4xf32>
    %64 = vector.multi_reduction <add>, %63, %cst_23 [1] : vector<4x32xf32> to vector<4xf32>
    %65 = vector.shape_cast %64 : vector<4xf32> to vector<4x1xf32>
    %cst_24 = arith.constant 3.125000e-02 : f32
    %66 = vector.broadcast %cst_24 : f32 to vector<4x1xf32>
    %67 = arith.mulf %65, %66 : vector<4x1xf32>
    %68 = arith.mulf %62, %62 : vector<4x1xf32>
    %69 = arith.subf %67, %68 : vector<4x1xf32>
    %70 = vector.broadcast %62 : vector<4x1xf32> to vector<4x32xf32>
    %71 = arith.subf %58, %70 : vector<4x32xf32>
    %cst_25 = arith.constant 9.99999974E-6 : f32
    %72 = vector.broadcast %cst_25 : f32 to vector<4x1xf32>
    %73 = arith.addf %69, %72 : vector<4x1xf32>
    %74 = math.rsqrt %73 : vector<4x1xf32>
    %75 = vector.broadcast %74 : vector<4x1xf32> to vector<4x32xf32>
    %76 = arith.mulf %71, %75 : vector<4x32xf32>
    %77 = vector.broadcast %11 : vector<1x32xf32> to vector<4x32xf32>
    %78 = arith.mulf %76, %77 : vector<4x32xf32>
    %79 = vector.broadcast %15 : vector<1x32xf32> to vector<4x32xf32>
    %80 = arith.addf %78, %79 : vector<4x32xf32>
    %81 = arith.negf %80 : vector<4x32xf32>
    %82 = math.exp %81 : vector<4x32xf32>
    %cst_26 = arith.constant 1.000000e+00 : f32
    %83 = vector.broadcast %cst_26 : f32 to vector<4x32xf32>
    %84 = arith.addf %83, %82 : vector<4x32xf32>
    %85 = arith.divf %83, %84 : vector<4x32xf32>
    %86 = vector.extract_strided_slice %23 {offsets = [0, 64], sizes = [4, 32], strides = [1, 1]} : vector<4x128xf32> to vector<4x32xf32>
    %87 = vector.broadcast %7 : vector<1x32xf32> to vector<4x32xf32>
    %88 = arith.mulf %87, %19 : vector<4x32xf32>
    %89 = arith.addf %86, %88 : vector<4x32xf32>
    %cst_27 = arith.constant dense<0.000000e+00> : vector<4xf32>
    %90 = vector.multi_reduction <add>, %89, %cst_27 [1] : vector<4x32xf32> to vector<4xf32>
    %91 = vector.shape_cast %90 : vector<4xf32> to vector<4x1xf32>
    %cst_28 = arith.constant 3.125000e-02 : f32
    %92 = vector.broadcast %cst_28 : f32 to vector<4x1xf32>
    %93 = arith.mulf %91, %92 : vector<4x1xf32>
    %94 = arith.mulf %89, %89 : vector<4x32xf32>
    %cst_29 = arith.constant dense<0.000000e+00> : vector<4xf32>
    %95 = vector.multi_reduction <add>, %94, %cst_29 [1] : vector<4x32xf32> to vector<4xf32>
    %96 = vector.shape_cast %95 : vector<4xf32> to vector<4x1xf32>
    %cst_30 = arith.constant 3.125000e-02 : f32
    %97 = vector.broadcast %cst_30 : f32 to vector<4x1xf32>
    %98 = arith.mulf %96, %97 : vector<4x1xf32>
    %99 = arith.mulf %93, %93 : vector<4x1xf32>
    %100 = arith.subf %98, %99 : vector<4x1xf32>
    %101 = vector.broadcast %93 : vector<4x1xf32> to vector<4x32xf32>
    %102 = arith.subf %89, %101 : vector<4x32xf32>
    %cst_31 = arith.constant 9.99999974E-6 : f32
    %103 = vector.broadcast %cst_31 : f32 to vector<4x1xf32>
    %104 = arith.addf %100, %103 : vector<4x1xf32>
    %105 = math.rsqrt %104 : vector<4x1xf32>
    %106 = vector.broadcast %105 : vector<4x1xf32> to vector<4x32xf32>
    %107 = arith.mulf %102, %106 : vector<4x32xf32>
    %108 = vector.broadcast %12 : vector<1x32xf32> to vector<4x32xf32>
    %109 = arith.mulf %107, %108 : vector<4x32xf32>
    %110 = vector.broadcast %16 : vector<1x32xf32> to vector<4x32xf32>
    %111 = arith.addf %109, %110 : vector<4x32xf32>
    %112 = arith.negf %111 : vector<4x32xf32>
    %113 = math.exp %112 : vector<4x32xf32>
    %cst_32 = arith.constant 1.000000e+00 : f32
    %114 = vector.broadcast %cst_32 : f32 to vector<4x32xf32>
    %115 = arith.addf %114, %113 : vector<4x32xf32>
    %116 = arith.divf %114, %115 : vector<4x32xf32>
    %117 = vector.extract_strided_slice %23 {offsets = [0, 96], sizes = [4, 32], strides = [1, 1]} : vector<4x128xf32> to vector<4x32xf32>
    %cst_33 = arith.constant dense<0.000000e+00> : vector<4xf32>
    %118 = vector.multi_reduction <add>, %117, %cst_33 [1] : vector<4x32xf32> to vector<4xf32>
    %119 = vector.shape_cast %118 : vector<4xf32> to vector<4x1xf32>
    %cst_34 = arith.constant 3.125000e-02 : f32
    %120 = vector.broadcast %cst_34 : f32 to vector<4x1xf32>
    %121 = arith.mulf %119, %120 : vector<4x1xf32>
    %122 = arith.mulf %117, %117 : vector<4x32xf32>
    %cst_35 = arith.constant dense<0.000000e+00> : vector<4xf32>
    %123 = vector.multi_reduction <add>, %122, %cst_35 [1] : vector<4x32xf32> to vector<4xf32>
    %124 = vector.shape_cast %123 : vector<4xf32> to vector<4x1xf32>
    %cst_36 = arith.constant 3.125000e-02 : f32
    %125 = vector.broadcast %cst_36 : f32 to vector<4x1xf32>
    %126 = arith.mulf %124, %125 : vector<4x1xf32>
    %127 = arith.mulf %121, %121 : vector<4x1xf32>
    %128 = arith.subf %126, %127 : vector<4x1xf32>
    %129 = vector.broadcast %121 : vector<4x1xf32> to vector<4x32xf32>
    %130 = arith.subf %117, %129 : vector<4x32xf32>
    %cst_37 = arith.constant 9.99999974E-6 : f32
    %131 = vector.broadcast %cst_37 : f32 to vector<4x1xf32>
    %132 = arith.addf %128, %131 : vector<4x1xf32>
    %133 = math.rsqrt %132 : vector<4x1xf32>
    %134 = vector.broadcast %133 : vector<4x1xf32> to vector<4x32xf32>
    %135 = arith.mulf %130, %134 : vector<4x32xf32>
    %136 = vector.broadcast %13 : vector<1x32xf32> to vector<4x32xf32>
    %137 = arith.mulf %135, %136 : vector<4x32xf32>
    %138 = vector.broadcast %17 : vector<1x32xf32> to vector<4x32xf32>
    %139 = arith.addf %137, %138 : vector<4x32xf32>
    %140 = math.tanh %139 : vector<4x32xf32>
    %141 = arith.mulf %85, %19 : vector<4x32xf32>
    %142 = arith.mulf %54, %140 : vector<4x32xf32>
    %143 = arith.addf %141, %142 : vector<4x32xf32>
    %144 = math.tanh %143 : vector<4x32xf32>
    %145 = arith.mulf %144, %116 : vector<4x32xf32>
    %c0_38 = arith.constant 0 : index
    %c0_39 = arith.constant 0 : index
    %c0_40 = arith.constant 0 : index
    %146 = vector.load %arg9[%c0_38, %c0_39, %c0_40] : memref<2x4x32xf32, #tpu.memory_space<vmem>>, vector<1x4x32xf32>
    %147 = vector.shape_cast %146 : vector<1x4x32xf32> to vector<4x32xf32>
    %148 = vector.shape_cast %145 : vector<4x32xf32> to vector<1x4x32xf32>
    tpu.vector_store %arg9[%c0_38, %c0_39, %c0_40], %148 {strides = array<i32>} : memref<2x4x32xf32, #tpu.memory_space<vmem>>, vector<1x4x32xf32>,
    %c1 = arith.constant 1 : index
    %c0_41 = arith.constant 0 : index
    %c0_42 = arith.constant 0 : index
    %149 = vector.load %arg2[%c1, %c0_41, %c0_42] : memref<2x4x128xf32, #tpu.memory_space<vmem>>, vector<1x4x128xf32>
    %150 = vector.shape_cast %149 : vector<1x4x128xf32> to vector<4x128xf32>
    %cst_43 = arith.constant dense<0.000000e+00> : vector<4x128xf32>
    %151 = tpu.matmul %145, %3, %cst_43 {dimension_numbers = #tpu.dot_dimension_numbers<[1], [0], [0], [1], [0, 0, 1, 1], [], []>} : vector<4x32xf32>, vector<32x128xf32>, vector<4x128xf32> -> vector<4x128xf32>
    %152 = arith.addf %150, %151 : vector<4x128xf32>
    %153 = vector.extract_strided_slice %152 {offsets = [0, 0], sizes = [4, 32], strides = [1, 1]} : vector<4x128xf32> to vector<4x32xf32>
    %154 = vector.broadcast %5 : vector<1x32xf32> to vector<4x32xf32>
    %155 = arith.mulf %154, %143 : vector<4x32xf32>
    %156 = arith.addf %153, %155 : vector<4x32xf32>
    %cst_44 = arith.constant dense<0.000000e+00> : vector<4xf32>
    %157 = vector.multi_reduction <add>, %156, %cst_44 [1] : vector<4x32xf32> to vector<4xf32>
    %158 = vector.shape_cast %157 : vector<4xf32> to vector<4x1xf32>
    %cst_45 = arith.constant 3.125000e-02 : f32
    %159 = vector.broadcast %cst_45 : f32 to vector<4x1xf32>
    %160 = arith.mulf %158, %159 : vector<4x1xf32>
    %161 = arith.mulf %156, %156 : vector<4x32xf32>
    %cst_46 = arith.constant dense<0.000000e+00> : vector<4xf32>
    %162 = vector.multi_reduction <add>, %161, %cst_46 [1] : vector<4x32xf32> to vector<4xf32>
    %163 = vector.shape_cast %162 : vector<4xf32> to vector<4x1xf32>
    %cst_47 = arith.constant 3.125000e-02 : f32
    %164 = vector.broadcast %cst_47 : f32 to vector<4x1xf32>
    %165 = arith.mulf %163, %164 : vector<4x1xf32>
    %166 = arith.mulf %160, %160 : vector<4x1xf32>
    %167 = arith.subf %165, %166 : vector<4x1xf32>
    %168 = vector.broadcast %160 : vector<4x1xf32> to vector<4x32xf32>
    %169 = arith.subf %156, %168 : vector<4x32xf32>
    %cst_48 = arith.constant 9.99999974E-6 : f32
    %170 = vector.broadcast %cst_48 : f32 to vector<4x1xf32>
    %171 = arith.addf %167, %170 : vector<4x1xf32>
    %172 = math.rsqrt %171 : vector<4x1xf32>
    %173 = vector.broadcast %172 : vector<4x1xf32> to vector<4x32xf32>
    %174 = arith.mulf %169, %173 : vector<4x32xf32>
    %175 = vector.broadcast %10 : vector<1x32xf32> to vector<4x32xf32>
    %176 = arith.mulf %174, %175 : vector<4x32xf32>
    %177 = vector.broadcast %14 : vector<1x32xf32> to vector<4x32xf32>
    %178 = arith.addf %176, %177 : vector<4x32xf32>
    %179 = arith.negf %178 : vector<4x32xf32>
    %180 = math.exp %179 : vector<4x32xf32>
    %cst_49 = arith.constant 1.000000e+00 : f32
    %181 = vector.broadcast %cst_49 : f32 to vector<4x32xf32>
    %182 = arith.addf %181, %180 : vector<4x32xf32>
    %183 = arith.divf %181, %182 : vector<4x32xf32>
    %184 = vector.extract_strided_slice %152 {offsets = [0, 32], sizes = [4, 32], strides = [1, 1]} : vector<4x128xf32> to vector<4x32xf32>
    %185 = vector.broadcast %6 : vector<1x32xf32> to vector<4x32xf32>
    %186 = arith.mulf %185, %143 : vector<4x32xf32>
    %187 = arith.addf %184, %186 : vector<4x32xf32>
    %cst_50 = arith.constant dense<0.000000e+00> : vector<4xf32>
    %188 = vector.multi_reduction <add>, %187, %cst_50 [1] : vector<4x32xf32> to vector<4xf32>
    %189 = vector.shape_cast %188 : vector<4xf32> to vector<4x1xf32>
    %cst_51 = arith.constant 3.125000e-02 : f32
    %190 = vector.broadcast %cst_51 : f32 to vector<4x1xf32>
    %191 = arith.mulf %189, %190 : vector<4x1xf32>
    %192 = arith.mulf %187, %187 : vector<4x32xf32>
    %cst_52 = arith.constant dense<0.000000e+00> : vector<4xf32>
    %193 = vector.multi_reduction <add>, %192, %cst_52 [1] : vector<4x32xf32> to vector<4xf32>
    %194 = vector.shape_cast %193 : vector<4xf32> to vector<4x1xf32>
    %cst_53 = arith.constant 3.125000e-02 : f32
    %195 = vector.broadcast %cst_53 : f32 to vector<4x1xf32>
    %196 = arith.mulf %194, %195 : vector<4x1xf32>
    %197 = arith.mulf %191, %191 : vector<4x1xf32>
    %198 = arith.subf %196, %197 : vector<4x1xf32>
    %199 = vector.broadcast %191 : vector<4x1xf32> to vector<4x32xf32>
    %200 = arith.subf %187, %199 : vector<4x32xf32>
    %cst_54 = arith.constant 9.99999974E-6 : f32
    %201 = vector.broadcast %cst_54 : f32 to vector<4x1xf32>
    %202 = arith.addf %198, %201 : vector<4x1xf32>
    %203 = math.rsqrt %202 : vector<4x1xf32>
    %204 = vector.broadcast %203 : vector<4x1xf32> to vector<4x32xf32>
    %205 = arith.mulf %200, %204 : vector<4x32xf32>
    %206 = vector.broadcast %11 : vector<1x32xf32> to vector<4x32xf32>
    %207 = arith.mulf %205, %206 : vector<4x32xf32>
    %208 = vector.broadcast %15 : vector<1x32xf32> to vector<4x32xf32>
    %209 = arith.addf %207, %208 : vector<4x32xf32>
    %210 = arith.negf %209 : vector<4x32xf32>
    %211 = math.exp %210 : vector<4x32xf32>
    %cst_55 = arith.constant 1.000000e+00 : f32
    %212 = vector.broadcast %cst_55 : f32 to vector<4x32xf32>
    %213 = arith.addf %212, %211 : vector<4x32xf32>
    %214 = arith.divf %212, %213 : vector<4x32xf32>
    %215 = vector.extract_strided_slice %152 {offsets = [0, 64], sizes = [4, 32], strides = [1, 1]} : vector<4x128xf32> to vector<4x32xf32>
    %216 = vector.broadcast %7 : vector<1x32xf32> to vector<4x32xf32>
    %217 = arith.mulf %216, %143 : vector<4x32xf32>
    %218 = arith.addf %215, %217 : vector<4x32xf32>
    %cst_56 = arith.constant dense<0.000000e+00> : vector<4xf32>
    %219 = vector.multi_reduction <add>, %218, %cst_56 [1] : vector<4x32xf32> to vector<4xf32>
    %220 = vector.shape_cast %219 : vector<4xf32> to vector<4x1xf32>
    %cst_57 = arith.constant 3.125000e-02 : f32
    %221 = vector.broadcast %cst_57 : f32 to vector<4x1xf32>
    %222 = arith.mulf %220, %221 : vector<4x1xf32>
    %223 = arith.mulf %218, %218 : vector<4x32xf32>
    %cst_58 = arith.constant dense<0.000000e+00> : vector<4xf32>
    %224 = vector.multi_reduction <add>, %223, %cst_58 [1] : vector<4x32xf32> to vector<4xf32>
    %225 = vector.shape_cast %224 : vector<4xf32> to vector<4x1xf32>
    %cst_59 = arith.constant 3.125000e-02 : f32
    %226 = vector.broadcast %cst_59 : f32 to vector<4x1xf32>
    %227 = arith.mulf %225, %226 : vector<4x1xf32>
    %228 = arith.mulf %222, %222 : vector<4x1xf32>
    %229 = arith.subf %227, %228 : vector<4x1xf32>
    %230 = vector.broadcast %222 : vector<4x1xf32> to vector<4x32xf32>
    %231 = arith.subf %218, %230 : vector<4x32xf32>
    %cst_60 = arith.constant 9.99999974E-6 : f32
    %232 = vector.broadcast %cst_60 : f32 to vector<4x1xf32>
    %233 = arith.addf %229, %232 : vector<4x1xf32>
    %234 = math.rsqrt %233 : vector<4x1xf32>
    %235 = vector.broadcast %234 : vector<4x1xf32> to vector<4x32xf32>
    %236 = arith.mulf %231, %235 : vector<4x32xf32>
    %237 = vector.broadcast %12 : vector<1x32xf32> to vector<4x32xf32>
    %238 = arith.mulf %236, %237 : vector<4x32xf32>
    %239 = vector.broadcast %16 : vector<1x32xf32> to vector<4x32xf32>
    %240 = arith.addf %238, %239 : vector<4x32xf32>
    %241 = arith.negf %240 : vector<4x32xf32>
    %242 = math.exp %241 : vector<4x32xf32>
    %cst_61 = arith.constant 1.000000e+00 : f32
    %243 = vector.broadcast %cst_61 : f32 to vector<4x32xf32>
    %244 = arith.addf %243, %242 : vector<4x32xf32>
    %245 = arith.divf %243, %244 : vector<4x32xf32>
    %246 = vector.extract_strided_slice %152 {offsets = [0, 96], sizes = [4, 32], strides = [1, 1]} : vector<4x128xf32> to vector<4x32xf32>
    %cst_62 = arith.constant dense<0.000000e+00> : vector<4xf32>
    %247 = vector.multi_reduction <add>, %246, %cst_62 [1] : vector<4x32xf32> to vector<4xf32>
    %248 = vector.shape_cast %247 : vector<4xf32> to vector<4x1xf32>
    %cst_63 = arith.constant 3.125000e-02 : f32
    %249 = vector.broadcast %cst_63 : f32 to vector<4x1xf32>
    %250 = arith.mulf %248, %249 : vector<4x1xf32>
    %251 = arith.mulf %246, %246 : vector<4x32xf32>
    %cst_64 = arith.constant dense<0.000000e+00> : vector<4xf32>
    %252 = vector.multi_reduction <add>, %251, %cst_64 [1] : vector<4x32xf32> to vector<4xf32>
    %253 = vector.shape_cast %252 : vector<4xf32> to vector<4x1xf32>
    %cst_65 = arith.constant 3.125000e-02 : f32
    %254 = vector.broadcast %cst_65 : f32 to vector<4x1xf32>
    %255 = arith.mulf %253, %254 : vector<4x1xf32>
    %256 = arith.mulf %250, %250 : vector<4x1xf32>
    %257 = arith.subf %255, %256 : vector<4x1xf32>
    %258 = vector.broadcast %250 : vector<4x1xf32> to vector<4x32xf32>
    %259 = arith.subf %246, %258 : vector<4x32xf32>
    %cst_66 = arith.constant 9.99999974E-6 : f32
    %260 = vector.broadcast %cst_66 : f32 to vector<4x1xf32>
    %261 = arith.addf %257, %260 : vector<4x1xf32>
    %262 = math.rsqrt %261 : vector<4x1xf32>
    %263 = vector.broadcast %262 : vector<4x1xf32> to vector<4x32xf32>
    %264 = arith.mulf %259, %263 : vector<4x32xf32>
    %265 = vector.broadcast %13 : vector<1x32xf32> to vector<4x32xf32>
    %266 = arith.mulf %264, %265 : vector<4x32xf32>
    %267 = vector.broadcast %17 : vector<1x32xf32> to vector<4x32xf32>
    %268 = arith.addf %266, %267 : vector<4x32xf32>
    %269 = math.tanh %268 : vector<4x32xf32>
    %270 = arith.mulf %214, %143 : vector<4x32xf32>
    %271 = arith.mulf %183, %269 : vector<4x32xf32>
    %272 = arith.addf %270, %271 : vector<4x32xf32>
    %273 = math.tanh %272 : vector<4x32xf32>
    %274 = arith.mulf %273, %245 : vector<4x32xf32>
    %c1_67 = arith.constant 1 : index
    %c0_68 = arith.constant 0 : index
    %c0_69 = arith.constant 0 : index
    %275 = vector.load %arg9[%c1_67, %c0_68, %c0_69] : memref<2x4x32xf32, #tpu.memory_space<vmem>>, vector<1x4x32xf32>
    %276 = vector.shape_cast %275 : vector<1x4x32xf32> to vector<4x32xf32>
    %277 = vector.shape_cast %274 : vector<4x32xf32> to vector<1x4x32xf32>
    tpu.vector_store %arg9[%c1_67, %c0_68, %c0_69], %277 {strides = array<i32>} : memref<2x4x32xf32, #tpu.memory_space<vmem>>, vector<1x4x32xf32>,
    %c0_70 = arith.constant 0 : index
    %c0_71 = arith.constant 0 : index
    %278 = vector.load %arg10[%c0_70, %c0_71] : memref<4x32xf32, #tpu.memory_space<vmem>>, vector<4x32xf32>
    tpu.vector_store %arg10[%c0_70, %c0_71], %274 {strides = array<i32>} : memref<4x32xf32, #tpu.memory_space<vmem>>, vector<4x32xf32>,
    %c0_72 = arith.constant 0 : index
    %c0_73 = arith.constant 0 : index
    %279 = vector.load %arg11[%c0_72, %c0_73] : memref<4x32xf32, #tpu.memory_space<vmem>>, vector<4x32xf32>
    tpu.vector_store %arg11[%c0_72, %c0_73], %272 {strides = array<i32>} : memref<4x32xf32, #tpu.memory_space<vmem>>, vector<4x32xf32>,
    return
  }
  func.func @transform_0(%arg0: i32, %arg1: i32) -> (i32, i32, i32) {
    %c0_i32 = arith.constant 0 : i32
    %c0_i32_0 = arith.constant 0 : i32
    return %arg1, %arg0, %c0_i32 : i32, i32, i32
  }
  func.func @transform_1(%arg0: i32, %arg1: i32) -> (i32, i32) {
    %c0_i32 = arith.constant 0 : i32
    %c0_i32_0 = arith.constant 0 : i32
    %c0_i32_1 = arith.constant 0 : i32
    return %c0_i32, %c0_i32_0 : i32, i32
  }
  func.func @transform_2(%arg0: i32, %arg1: i32) -> (i32, i32) {
    %c0_i32 = arith.constant 0 : i32
    %c0_i32_0 = arith.constant 0 : i32
    %c0_i32_1 = arith.constant 0 : i32
    return %c0_i32, %c0_i32_0 : i32, i32
  }
  func.func @transform_3(%arg0: i32, %arg1: i32) -> (i32, i32) {
    %c0_i32 = arith.constant 0 : i32
    %c0_i32_0 = arith.constant 0 : i32
    %c0_i32_1 = arith.constant 0 : i32
    return %c0_i32, %c0_i32_0 : i32, i32
  }
  func.func @transform_4(%arg0: i32, %arg1: i32) -> (i32, i32) {
    %c0_i32 = arith.constant 0 : i32
    %c0_i32_0 = arith.constant 0 : i32
    %c0_i32_1 = arith.constant 0 : i32
    return %c0_i32, %c0_i32_0 : i32, i32
  }
  func.func @transform_5(%arg0: i32, %arg1: i32) -> (i32, i32) {
    %c0_i32 = arith.constant 0 : i32
    %c0_i32_0 = arith.constant 0 : i32
    return %arg0, %c0_i32 : i32, i32
  }
  func.func @transform_6(%arg0: i32, %arg1: i32) -> (i32, i32) {
    %c0_i32 = arith.constant 0 : i32
    %c0_i32_0 = arith.constant 0 : i32
    return %arg0, %c0_i32 : i32, i32
  }
  func.func @transform_7(%arg0: i32, %arg1: i32) -> (i32, i32, i32) {
    %c0_i32 = arith.constant 0 : i32
    %c0_i32_0 = arith.constant 0 : i32
    return %arg1, %arg0, %c0_i32 : i32, i32, i32
  }
}

</mosaic_0001>

<llo_original>
// kernel: tpu_custom_call.1
$region0: #{tpu_custom_call.1}
  #allocation0 [shape = 'u32[]', space=smem, size = 0x4, offset = 0x4, fixed_abs, tag = 'smem constant byte address 0x4 - core index']
  #allocation1 [shape = 'u32[72,128]{1,0:T(1,128)}', space=vmem, size = 0x9000, scoped, tag = 'internal scratch']
  #allocation2 [shape = 'f32[4,32]{1,0:T(4,128)}', space=vmem, size = 0x800, scoped, tag = 'scratch operand']
  #allocation3 [shape = 'f32[4,32]{1,0:T(4,128)}', space=vmem, size = 0x800, scoped, tag = 'scratch operand']
  %s0 = inlined_call_operand.hbm [shape: f32[8,4,128], index: 0, kind: input, shape index: {}]
  %s1 = inlined_call_operand.hbm [shape: f32[32,128], index: 1, kind: input, shape index: {}]
  %s2 = inlined_call_operand.hbm [shape: f32[1,96], index: 2, kind: input, shape index: {}]
  %s3 = inlined_call_operand.hbm [shape: f32[1,128], index: 3, kind: input, shape index: {}]
  %s4 = inlined_call_operand.hbm [shape: f32[1,128], index: 4, kind: input, shape index: {}]
  %s5 = inlined_call_operand.vmem [shape: f32[4,32], index: 5, kind: input, shape index: {}]
  %s6 = inlined_call_operand.hbm [shape: f32[4,32], index: 6, kind: input, shape index: {}]
  %s7 = inlined_call_operand.hbm [shape: f32[8,4,32], index: 7, kind: output, shape index: {}]
  %s8 = sld [smem:[#allocation0]]
  $region89: #{tpu_custom_call.1} parent=0
    _
  %s10 = ssub.s32 1, %s8
  %s11 = scalar_select 0, %s10, %s8
  $region1: #{tpu_custom_call.1} parent=0
    #allocation4 [shape = 'u8[8192]{0}', space=vmem, size = 0x2000, scoped, tag = 'input window, operand 0']
    #allocation5 [shape = 's32[2]{0}', space=sflag, size = 0x8, scoped, tag = 'scoped memory for tpu_custom_call.1']
    #allocation6 [shape = 's32[2]{0}', space=sflag, size = 0x8, scoped, tag = 'scoped memory for tpu_custom_call.1']
    #allocation7 [shape = 'u8[16384]{0}', space=vmem, size = 0x4000, scoped, tag = 'input window, operand 1, single buffered']
    #allocation8 [shape = 's32[1]{0}', space=sflag, size = 0x4, scoped, tag = 'scoped memory for tpu_custom_call.1']
    #allocation9 [shape = 'u8[512]{0}', space=vmem, size = 0x400, scoped, tag = 'input window, operand 2, single buffered']
    #allocation10 [shape = 'u8[512]{0}', space=vmem, size = 0x400, scoped, tag = 'input window, operand 3, single buffered']
    #allocation11 [shape = 's32[1]{0}', space=sflag, size = 0x4, scoped, tag = 'scoped memory for tpu_custom_call.1']
    #allocation12 [shape = 'u8[512]{0}', space=vmem, size = 0x400, scoped, tag = 'input window, operand 4, single buffered']
    #allocation13 [shape = 'u8[2048]{0}', space=vmem, size = 0x800, scoped, tag = 'input window, operand 6, single buffered']
    #allocation14 [shape = 's32[1]{0}', space=sflag, size = 0x4, scoped, tag = 'scoped memory for tpu_custom_call.1']
    #allocation15 [shape = 'u8[8192]{0}', space=vmem, size = 0x2000, scoped, tag = 'output window, operand 0']
    %12 = vsyncpa [#allocation5], 0
    %s13 = scalar_lea.sflag [#allocation5], 1
    %14 = vsyncpa %s13, 0
    %15 = vsyncpa [#allocation8], 0
    %16 = vsyncpa [#allocation11], 0
    %17 = vsyncpa [#allocation14], 0
    %18 = vsyncpa [#allocation6], 0
    %s19 = scalar_lea.sflag [#allocation6], 1
    %20 = vsyncpa %s19, 0
    loop: start=0, step=1, limit=6
    $region2: #{tpu_custom_call.1} parent=1 // loop_pre_header
      _
    $region3: #{tpu_custom_call.1} parent=1 // loop_header
      %s22 = sphi 0, %s26
      %p23 = scmp.ge.s32.totalorder %s22, 6
      %s29 = sphi 0, %s41
      %s30 = sphi 0, %s37
      %s31 = sphi 0, %s29
      %s32 = sphi 0, %s30
      %s33 = sphi 0, %s31
      %s34 = sphi 0, %s32
      %s46 = sphi 0, %s48
      %s49 = sphi 0, %s46
      %s50 = sphi 0, %s49
      %s66 = sphi 0, %s50
      %s70 = sphi 0, %s70
      %s72 = sphi 0, %s70
      %s73 = sphi 0, %s72
      %s87 = sphi 0, %s73
      %s91 = sphi 0, %s91
      %s93 = sphi 0, %s91
      %s94 = sphi 0, %s93
      %s108 = sphi 0, %s94
      %s112 = sphi 0, %s112
      %s114 = sphi 0, %s112
      %s115 = sphi 0, %s114
      %s129 = sphi 0, %s115
      %s133 = sphi 0, %s133
      %s135 = sphi 0, %s133
      %s136 = sphi 0, %s135
      %s150 = sphi 0, %s136
      %s156 = sphi 0, %s158
      %s159 = sphi 0, %s156
      %s160 = sphi 0, %s159
      %s176 = sphi 0, %s160
      %s182 = sphi 0, %s184
      %s185 = sphi 0, %s182
      %s186 = sphi 0, %s185
      %s202 = sphi 0, %s186
      %s210 = sphi 0, %s212
      %s213 = sphi 0, %s210
      %s214 = sphi 0, %s213
      %s230 = sphi 0, %s214
    $region4: #{tpu_custom_call.1} parent=1 // loop_header_branch
      %25 = sbr.rel (%p23) target = $region8
    $region5: #{tpu_custom_call.1} parent=1 // loop_body
      %s27 = ssub.s32 %s22, 1
      %s28 = ssub.s32 %s22, 2
      %s35 = sadd.s32 1, %s30
      %p36 = scmp.ge.s32.totalorder %s35, 4
      %s37 = scalar_select %p36, 0, %s35
      %s38 = sadd.s32 1, %s29
      %s39 = scalar_select %p36, %s38, %s29
      %p40 = scmp.ge.s32.totalorder %s39, 1
      %s41 = scalar_select %p40, 0, %s39
      %s42 = ssub.s32 %s30, %s37
      %s43 = ssub.s32 %s29, %s41
      %s44 = sor.u32 %s42, %s43
      %p45 = scmp.eq.s32.totalorder %s44, 0
      %s47 = sadd.s32 %s46, 1
      %s48 = scalar_select %p45, %s46, %s47
      %p51 = pneg %p45
      %p52 = scmp.eq.s32.totalorder %s22, 3
      %p53 = por %p51, %p52
      %p54 = scmp.ne.s32.totalorder %s46, %s49
      %p55 = scmp.eq.s32.totalorder %s22, 0
      %p56 = por %p54, %p55
      %p57 = scmp.ne.s32.totalorder %s46, %s49
      %p58 = scmp.eq.s32.totalorder %s27, 3
      %p59 = por %p57, %p58
      %p60 = scmp.ne.s32.totalorder %s49, %s50
      %p61 = scmp.eq.s32.totalorder %s27, 0
      %p62 = por %p60, %p61
      %p63 = scmp.ne.s32.totalorder %s49, %s50
      %p64 = scmp.eq.s32.totalorder %s28, 3
      %p65 = por %p63, %p64
      %p67 = scmp.ne.s32.totalorder %s50, %s66
      %p68 = scmp.eq.s32.totalorder %s28, 0
      %p69 = por %p67, %p68
      %s71 = sadd.s32 %s70, 1
      %p74 = scmp.eq.s32.totalorder %s22, 3
      %p75 = scmp.ne.s32.totalorder %s70, %s72
      %p76 = scmp.eq.s32.totalorder %s22, 0
      %p77 = por %p75, %p76
      %p78 = scmp.ne.s32.totalorder %s70, %s72
      %p79 = scmp.eq.s32.totalorder %s27, 3
      %p80 = por %p78, %p79
      %p81 = scmp.ne.s32.totalorder %s72, %s73
      %p82 = scmp.eq.s32.totalorder %s27, 0
      %p83 = por %p81, %p82
      %p84 = scmp.ne.s32.totalorder %s72, %s73
      %p85 = scmp.eq.s32.totalorder %s28, 3
      %p86 = por %p84, %p85
      %p88 = scmp.ne.s32.totalorder %s73, %s87
      %p89 = scmp.eq.s32.totalorder %s28, 0
      %p90 = por %p88, %p89
      %s92 = sadd.s32 %s91, 1
      %p95 = scmp.eq.s32.totalorder %s22, 3
      %p96 = scmp.ne.s32.totalorder %s91, %s93
      %p97 = scmp.eq.s32.totalorder %s22, 0
      %p98 = por %p96, %p97
      %p99 = scmp.ne.s32.totalorder %s91, %s93
      %p100 = scmp.eq.s32.totalorder %s27, 3
      %p101 = por %p99, %p100
      %p102 = scmp.ne.s32.totalorder %s93, %s94
      %p103 = scmp.eq.s32.totalorder %s27, 0
      %p104 = por %p102, %p103
      %p105 = scmp.ne.s32.totalorder %s93, %s94
      %p106 = scmp.eq.s32.totalorder %s28, 3
      %p107 = por %p105, %p106
      %p109 = scmp.ne.s32.totalorder %s94, %s108
      %p110 = scmp.eq.s32.totalorder %s28, 0
      %p111 = por %p109, %p110
      %s113 = sadd.s32 %s112, 1
      %p116 = scmp.eq.s32.totalorder %s22, 3
      %p117 = scmp.ne.s32.totalorder %s112, %s114
      %p118 = scmp.eq.s32.totalorder %s22, 0
      %p119 = por %p117, %p118
      %p120 = scmp.ne.s32.totalorder %s112, %s114
      %p121 = scmp.eq.s32.totalorder %s27, 3
      %p122 = por %p120, %p121
      %p123 = scmp.ne.s32.totalorder %s114, %s115
      %p124 = scmp.eq.s32.totalorder %s27, 0
      %p125 = por %p123, %p124
      %p126 = scmp.ne.s32.totalorder %s114, %s115
      %p127 = scmp.eq.s32.totalorder %s28, 3
      %p128 = por %p126, %p127
      %p130 = scmp.ne.s32.totalorder %s115, %s129
      %p131 = scmp.eq.s32.totalorder %s28, 0
      %p132 = por %p130, %p131
      %s134 = sadd.s32 %s133, 1
      %p137 = scmp.eq.s32.totalorder %s22, 3
      %p138 = scmp.ne.s32.totalorder %s133, %s135
      %p139 = scmp.eq.s32.totalorder %s22, 0
      %p140 = por %p138, %p139
      %p141 = scmp.ne.s32.totalorder %s133, %s135
      %p142 = scmp.eq.s32.totalorder %s27, 3
      %p143 = por %p141, %p142
      %p144 = scmp.ne.s32.totalorder %s135, %s136
      %p145 = scmp.eq.s32.totalorder %s27, 0
      %p146 = por %p144, %p145
      %p147 = scmp.ne.s32.totalorder %s135, %s136
      %p148 = scmp.eq.s32.totalorder %s28, 3
      %p149 = por %p147, %p148
      %p151 = scmp.ne.s32.totalorder %s136, %s150
      %p152 = scmp.eq.s32.totalorder %s28, 0
      %p153 = por %p151, %p152
      %s154 = ssub.s32 %s29, %s41
      %p155 = scmp.eq.s32.totalorder %s154, 0
      %s157 = sadd.s32 %s156, 1
      %s158 = scalar_select %p155, %s156, %s157
      %p161 = pneg %p155
      %p162 = scmp.eq.s32.totalorder %s22, 3
      %p163 = por %p161, %p162
      %p164 = scmp.ne.s32.totalorder %s156, %s159
      %p165 = scmp.eq.s32.totalorder %s22, 0
      %p166 = por %p164, %p165
      %p167 = scmp.ne.s32.totalorder %s156, %s159
      %p168 = scmp.eq.s32.totalorder %s27, 3
      %p169 = por %p167, %p168
      %p170 = scmp.ne.s32.totalorder %s159, %s160
      %p171 = scmp.eq.s32.totalorder %s27, 0
      %p172 = por %p170, %p171
      %p173 = scmp.ne.s32.totalorder %s159, %s160
      %p174 = scmp.eq.s32.totalorder %s28, 3
      %p175 = por %p173, %p174
      %p177 = scmp.ne.s32.totalorder %s160, %s176
      %p178 = scmp.eq.s32.totalorder %s28, 0
      %p179 = por %p177, %p178
      %s180 = ssub.s32 %s29, %s41
      %p181 = scmp.eq.s32.totalorder %s180, 0
      %s183 = sadd.s32 %s182, 1
      %s184 = scalar_select %p181, %s182, %s183
      %p187 = pneg %p181
      %p188 = scmp.eq.s32.totalorder %s22, 3
      %p189 = por %p187, %p188
      %p190 = scmp.ne.s32.totalorder %s182, %s185
      %p191 = scmp.eq.s32.totalorder %s22, 0
      %p192 = por %p190, %p191
      %p193 = scmp.ne.s32.totalorder %s182, %s185
      %p194 = scmp.eq.s32.totalorder %s27, 3
      %p195 = por %p193, %p194
      %p196 = scmp.ne.s32.totalorder %s185, %s186
      %p197 = scmp.eq.s32.totalorder %s27, 0
      %p198 = por %p196, %p197
      %p199 = scmp.ne.s32.totalorder %s185, %s186
      %p200 = scmp.eq.s32.totalorder %s28, 3
      %p201 = por %p199, %p200
      %p203 = scmp.ne.s32.totalorder %s186, %s202
      %p204 = scmp.eq.s32.totalorder %s28, 0
      %p205 = por %p203, %p204
      %s206 = ssub.s32 %s30, %s37
      %s207 = ssub.s32 %s29, %s41
      %s208 = sor.u32 %s206, %s207
      %p209 = scmp.eq.s32.totalorder %s208, 0
      %s211 = sadd.s32 %s210, 1
      %s212 = scalar_select %p209, %s210, %s211
      %p215 = pneg %p209
      %p216 = scmp.eq.s32.totalorder %s22, 3
      %p217 = por %p215, %p216
      %p218 = scmp.ne.s32.totalorder %s210, %s213
      %p219 = scmp.eq.s32.totalorder %s22, 0
      %p220 = por %p218, %p219
      %p221 = scmp.ne.s32.totalorder %s210, %s213
      %p222 = scmp.eq.s32.totalorder %s27, 3
      %p223 = por %p221, %p222
      %p224 = scmp.ne.s32.totalorder %s213, %s214
      %p225 = scmp.eq.s32.totalorder %s27, 0
      %p226 = por %p224, %p225
      %p227 = scmp.ne.s32.totalorder %s213, %s214
      %p228 = scmp.eq.s32.totalorder %s28, 3
      %p229 = por %p227, %p228
      %p231 = scmp.ne.s32.totalorder %s214, %s230
      %p232 = scmp.eq.s32.totalorder %s28, 0
      %p233 = por %p231, %p232
      %p234 = scmp.le.s32.totalorder 1, %s22
      %p235 = scmp.lt.s32.totalorder %s22, 5
      %p236 = pnand %p234, %p235
      %p237 = pneg %p236
      // Predicated region
      $region9: #{tpu_custom_call.1} parent=5 // pred_check
        _
      $region10: #{tpu_custom_call.1} parent=5 // pred_check_branch
        %239 = sbr.rel (%p236) target = $region12
      $region11: #{tpu_custom_call.1} parent=5 // pred_region
        %s240 = ssub.s32 %s22, 1
        // Predicated region
        $region13: #{tpu_custom_call.1} parent=11 // pred_check
          %p241 = pneg %p83
        $region14: #{tpu_custom_call.1} parent=11 // pred_check_branch
          %243 = sbr.rel (%p241) target = $region16
        $region15: #{tpu_custom_call.1} parent=11 // pred_region
          %245 = vsyncadd [#allocation8], 0
          %s246 = sshll.u32 %s1, 4
          %s247 = int_to_ptr.hbm [resolvable:$true] %s246
          %s248 = sshll.u32 [#allocation7], 4
          %s249 = int_to_ptr.vmem [resolvable:$true] %s248
          %254 = dma.hbm_to_vmem [thread:$0]  %s247, 512, %s249, [#allocation8], 128, 128, 8
        $region16: #{tpu_custom_call.1} parent=11 // pred_fallthru
          _
        // Predicated region
        $region17: #{tpu_custom_call.1} parent=11 // pred_check
          %p255 = pneg %p104
        $region18: #{tpu_custom_call.1} parent=11 // pred_check_branch
          %257 = sbr.rel (%p255) target = $region20
        $region19: #{tpu_custom_call.1} parent=11 // pred_region
          %259 = vsyncadd [#allocation8], 0
          %s261 = sshll.u32 %s2, 4
          %s262 = int_to_ptr.hbm [resolvable:$true] %s261
          %s263 = sshll.u32 [#allocation9], 4
          %s264 = int_to_ptr.vmem [resolvable:$true] %s263
          %266 = dma.hbm_to_vmem [thread:$0]  %s262, 16, %s264, [#allocation8]
        $region20: #{tpu_custom_call.1} parent=11 // pred_fallthru
          _
        // Predicated region
        $region21: #{tpu_custom_call.1} parent=11 // pred_check
          %p267 = pneg %p125
        $region22: #{tpu_custom_call.1} parent=11 // pred_check_branch
          %269 = sbr.rel (%p267) target = $region24
        $region23: #{tpu_custom_call.1} parent=11 // pred_region
          %271 = vsyncadd [#allocation11], 0
          %s273 = sshll.u32 %s3, 4
          %s274 = int_to_ptr.hbm [resolvable:$true] %s273
          %s275 = sshll.u32 [#allocation10], 4
          %s276 = int_to_ptr.vmem [resolvable:$true] %s275
          %278 = dma.hbm_to_vmem [thread:$0]  %s274, 16, %s276, [#allocation11]
        $region24: #{tpu_custom_call.1} parent=11 // pred_fallthru
          _
        // Predicated region
        $region25: #{tpu_custom_call.1} parent=11 // pred_check
          %p279 = pneg %p146
        $region26: #{tpu_custom_call.1} parent=11 // pred_check_branch
          %281 = sbr.rel (%p279) target = $region28
        $region27: #{tpu_custom_call.1} parent=11 // pred_region
          %283 = vsyncadd [#allocation11], 0
          %s285 = sshll.u32 %s4, 4
          %s286 = int_to_ptr.hbm [resolvable:$true] %s285
          %s287 = sshll.u32 [#allocation12], 4
          %s288 = int_to_ptr.vmem [resolvable:$true] %s287
          %290 = dma.hbm_to_vmem [thread:$0]  %s286, 16, %s288, [#allocation11]
        $region28: #{tpu_custom_call.1} parent=11 // pred_fallthru
          _
        // Predicated region
        $region29: #{tpu_custom_call.1} parent=11 // pred_check
          %p291 = pneg %p172
        $region30: #{tpu_custom_call.1} parent=11 // pred_check_branch
          %293 = sbr.rel (%p291) target = $region32
        $region31: #{tpu_custom_call.1} parent=11 // pred_region
          %p294 = scmp.lt.s32.totalorder %s31, 0
          %s295 = scalar_select %p294, %s31, 0
          %s296 = smul.addr %s295, 4
          %s297 = scalar_lea.vmem %s5, %s296
        $region32: #{tpu_custom_call.1} parent=11 // pred_fallthru
          _
        // Predicated region
        $region33: #{tpu_custom_call.1} parent=11 // pred_check
          %p298 = pneg %p198
        $region34: #{tpu_custom_call.1} parent=11 // pred_check_branch
          %300 = sbr.rel (%p298) target = $region36
        $region35: #{tpu_custom_call.1} parent=11 // pred_region
          %302 = vsyncadd [#allocation14], 0
          %s303 = smul.addr %s31, 4
          %s304 = scalar_lea.hbm %s6, %s303
          %s306 = sshll.u32 %s304, 4
          %s307 = int_to_ptr.hbm [resolvable:$true] %s306
          %s308 = sshll.u32 [#allocation13], 4
          %s309 = int_to_ptr.vmem [resolvable:$true] %s308
          %311 = dma.hbm_to_vmem [thread:$0]  %s307, 64, %s309, [#allocation14]
        $region36: #{tpu_custom_call.1} parent=11 // pred_fallthru
          _
      $region12: #{tpu_custom_call.1} parent=5 // pred_fallthru
        _
      %p312 = scmp.lt.s32.totalorder %s22, 4
      // Predicated region
      $region37: #{tpu_custom_call.1} parent=5 // pred_check
        %p313 = pneg %p312
      $region38: #{tpu_custom_call.1} parent=5 // pred_check_branch
        %315 = sbr.rel (%p313) target = $region40
      $region39: #{tpu_custom_call.1} parent=5 // pred_region
        // Predicated region
        $region41: #{tpu_custom_call.1} parent=39 // pred_check
          %p316 = pneg %p56
        $region42: #{tpu_custom_call.1} parent=39 // pred_check_branch
          %318 = sbr.rel (%p316) target = $region44
        $region43: #{tpu_custom_call.1} parent=39 // pred_region
          %s319 = sand.u32 %s46, 1
          %s320 = scalar_lea.sflag [#allocation5], %s319
          %s321 = sand.u32 %s46, 1
          %s322 = smul.addr %s321, 8
          %s323 = scalar_lea.vmem [#allocation4], %s322
          %s324 = smul.u32 2, %s30
          %326 = vsyncadd %s320, 0
          %s327 = sadd.s32 %s29, %s324
          %s328 = smul.addr %s327, 4
          %s329 = scalar_lea.hbm %s0, %s328
          %s330 = sshll.u32 %s329, 4
          %s331 = int_to_ptr.hbm [resolvable:$true] %s330
          %s332 = sshll.u32 %s323, 4
          %s333 = int_to_ptr.vmem [resolvable:$true] %s332
          %338 = dma.hbm_to_vmem [thread:$0]  %s331, 128, %s333, %s320, 64, 64, 4
        $region44: #{tpu_custom_call.1} parent=39 // pred_fallthru
          _
      $region40: #{tpu_custom_call.1} parent=5 // pred_fallthru
        _
      %p339 = scmp.le.s32.totalorder 1, %s22
      %p340 = scmp.lt.s32.totalorder %s22, 5
      %p341 = pnand %p339, %p340
      %p342 = pneg %p341
      // Predicated region
      $region45: #{tpu_custom_call.1} parent=5 // pred_check
        _
      $region46: #{tpu_custom_call.1} parent=5 // pred_check_branch
        %344 = sbr.rel (%p341) target = $region48
      $region47: #{tpu_custom_call.1} parent=5 // pred_region
        %s345 = ssub.s32 %s22, 1
        %s346 = sand.u32 %s49, 1
        %s347 = scalar_lea.sflag [#allocation5], %s346
        %s348 = sand.u32 %s49, 1
        %s349 = smul.addr %s348, 8
        %s350 = scalar_lea.vmem [#allocation4], %s349
        // Predicated region
        $region49: #{tpu_custom_call.1} parent=47 // pred_check
          %p351 = pneg %p62
        $region50: #{tpu_custom_call.1} parent=47 // pred_check_branch
          %353 = sbr.rel (%p351) target = $region52
        $region51: #{tpu_custom_call.1} parent=47 // pred_region
          %355 = dma.done %s347, 128
        $region52: #{tpu_custom_call.1} parent=47 // pred_fallthru
          _
        // Predicated region
        $region53: #{tpu_custom_call.1} parent=47 // pred_check
          %p356 = pneg %p83
        $region54: #{tpu_custom_call.1} parent=47 // pred_check_branch
          %358 = sbr.rel (%p356) target = $region56
        $region55: #{tpu_custom_call.1} parent=47 // pred_region
          %360 = dma.done [#allocation8], 512
        $region56: #{tpu_custom_call.1} parent=47 // pred_fallthru
          _
        // Predicated region
        $region57: #{tpu_custom_call.1} parent=47 // pred_check
          %p361 = pneg %p104
        $region58: #{tpu_custom_call.1} parent=47 // pred_check_branch
          %363 = sbr.rel (%p361) target = $region60
        $region59: #{tpu_custom_call.1} parent=47 // pred_region
          %365 = dma.done [#allocation8], 16
        $region60: #{tpu_custom_call.1} parent=47 // pred_fallthru
          _
        // Predicated region
        $region61: #{tpu_custom_call.1} parent=47 // pred_check
          %p366 = pneg %p125
        $region62: #{tpu_custom_call.1} parent=47 // pred_check_branch
          %368 = sbr.rel (%p366) target = $region64
        $region63: #{tpu_custom_call.1} parent=47 // pred_region
          %370 = dma.done [#allocation11], 16
        $region64: #{tpu_custom_call.1} parent=47 // pred_fallthru
          _
        // Predicated region
        $region65: #{tpu_custom_call.1} parent=47 // pred_check
          %p371 = pneg %p146
        $region66: #{tpu_custom_call.1} parent=47 // pred_check_branch
          %373 = sbr.rel (%p371) target = $region68
        $region67: #{tpu_custom_call.1} parent=47 // pred_region
          %375 = dma.done [#allocation11], 16
        $region68: #{tpu_custom_call.1} parent=47 // pred_fallthru
          _
        // Predicated region
        $region69: #{tpu_custom_call.1} parent=47 // pred_check
          %p376 = pneg %p198
        $region70: #{tpu_custom_call.1} parent=47 // pred_check_branch
          %378 = sbr.rel (%p376) target = $region72
        $region71: #{tpu_custom_call.1} parent=47 // pred_region
          %380 = dma.done [#allocation14], 64
        $region72: #{tpu_custom_call.1} parent=47 // pred_fallthru
          _
        %s381 = sand.u32 %s49, 1
        %s382 = scalar_lea.sflag [#allocation5], %s381
        %s383 = sand.u32 %s49, 1
        %s384 = smul.addr %s383, 8
        %s385 = scalar_lea.vmem [#allocation4], %s384
        %p386 = pneg %p62
        %p387 = pneg %p59
        %p388 = pneg %p83
        %p389 = pneg %p80
        %p390 = pneg %p104
        %p391 = pneg %p101
        %p392 = pneg %p125
        %p393 = pneg %p122
        %p394 = pneg %p146
        %p395 = pneg %p143
        %p396 = scmp.lt.s32.totalorder %s31, 0
        %s397 = scalar_select %p396, %s31, 0
        %s398 = smul.addr %s397, 4
        %s399 = scalar_lea.vmem %s5, %s398
        %p400 = pneg %p172
        %p401 = pneg %p169
        %p402 = pneg %p198
        %p403 = pneg %p195
        %p404 = pneg %p226
        %p405 = pneg %p223
        %s406 = sand.u32 %s213, 1
        %s407 = scalar_lea.sflag [#allocation6], %s406
        %s408 = sand.u32 %s213, 1
        %s409 = smul.addr %s408, 8
        %s410 = scalar_lea.vmem [#allocation15], %s409
        %s411 = smul.u32 2, %s32
        %p412 = scmp.lt.s32.totalorder %s31, 0
        %s413 = scalar_select %p412, %s31, 0
        %s414 = smul.addr %s413, 4
        %s415 = scalar_lea.vmem %s5, %s414
        %s416 = smul.u32 2, %s32
        %p417 = scmp.eq.s32.totalorder %s32, 0
        // Predicated region
        $region73: #{tpu_custom_call.1} parent=47 // pred_check
          %p418 = pneg %p417
        $region74: #{tpu_custom_call.1} parent=47 // pred_check_branch
          %420 = sbr.rel (%p418) target = $region76
        $region75: #{tpu_custom_call.1} parent=47 // pred_region
          %v421 = vld [vmem:[%s415] sm:$0xf]
          %vm422 = vcmask 257024
          %423 = vst.msk [vmem:[#allocation2] sm:$0xf] %vm422, %v421
          %v424 = vld [vmem:[#allocation13] sm:$0xf]
          %425 = vst.msk [vmem:[#allocation3] sm:$0xf] %vm422, %v424
        $region76: #{tpu_custom_call.1} parent=47 // pred_fallthru
          _
        %v426 = vld [vmem:[#allocation7] sm:$0xff]
        %v427 = vld [vmem:[#allocation7 + $0x8] sm:$0xff]
        %v428 = vld [vmem:[#allocation7 + $0x10] sm:$0xff]
        %v429 = vld [vmem:[#allocation7 + $0x18] sm:$0xff]
        %v430 = vld [vmem:[#allocation9] sm:$0x1]
        %v431 = vld [vmem:[#allocation10] sm:$0x1]
        %v432 = vld [vmem:[#allocation12] sm:$0x1]
        %v433 = vld [vmem:[#allocation2] sm:$0xf]
        %v434 = vld [vmem:[#allocation3] sm:$0xf]
        %v435 = vld [vmem:[%s350] sm:$0xf]
        %vm436 = vcmask 261120
        %v438 = vsel %vm436, %v433, 0
        %440 = vmatpush.msra.mxu0 0.0
        %441 = vmatpush.msra.mxu0 0.0
        %442 = vmatpush.msra.mxu0 0.0
        %443 = vmatpush.msra.mxu0 0.0
        %444 = vmatpush.msra.mxu0 0.0
        %445 = vmatpush.msra.mxu0 0.0
        %446 = vmatpush.msra.mxu0 0.0
        %447 = vmatpush.msra.mxu0 0.0
        %448 = vmatpush.msra.mxu0 0.0
        %449 = vmatpush.msra.mxu0 0.0
        %450 = vmatpush.msra.mxu0 0.0
        %451 = vmatpush.msra.mxu0 0.0
        %452 = vmatpush.msra.mxu0 %v429
        %453 = vmatpush.msra.mxu0 %v428
        %454 = vmatpush.msra.mxu0 %v427
        %455 = vmatpush.msra.mxu0 %v426
        %456 = vmatmul.f32.gmra.mxu0 %v438
        %v457 = vpop.f32.mrf.mxu0
        %v458 = vadd.f32 0.0, %v457
        %459 = vdwg.mxu0
        %v460 = vadd.f32 %v435, %v458
        %v462 = vperm.slane %v430, 0
        %v464 = vmul.f32 %v462, %v434
        %v465 = vadd.f32 %v460, %v464
        %vm466 = vcmask 257024
        %v467 = vsel %vm466, %v465, 0.0
        %468 = vadd.xlane.f32.xlu0 %v467
        %v469 = vpop.xlane.xlu0 %468
        %v470 = vmul.f32 %v469, 0.03125
        %v471 = vmul.f32 %v465, %v465
        %v472 = vsel %vm466, %v471, 0.0
        %473 = vadd.xlane.f32.xlu0 %v472
        %v474 = vpop.xlane.xlu0 %473
        %v475 = vmul.f32 %v474, 0.03125
        %v476 = vmul.f32 %v470, %v470
        %v477 = vsub.f32 %v475, %v476
        %v478 = vsub.f32 %v465, %v470
        %v479 = vadd.f32 %v477, 1e-05
        %v480 = vrsqrt.pop %v479
        %v481 = vmul.f32 %v480, %v479
        %v482 = vmul.f32 %v481, %v480
        %v483 = vmul.f32 0.5, %v482
        %v484 = vsub.f32 1.5, %v483
        %v485 = vmul.f32 %v480, %v484
        %vm486 = vweird.f32 %v479
        %vm487 = vweird.f32 %v480
        %vm488 = vmor %vm486, %vm487
        %v489 = vsel %vm488, %v480, %v485
        %v490 = vmul.f32 %v478, %v489
        %v492 = vperm.slane %v431, 0
        %v494 = vmul.f32 %v490, %v492
        %v496 = vperm.slane %v432, 0
        %v498 = vadd.f32 %v494, %v496
        %v499 = vxor.u32 %v498, 2147483648
        %v500 = vmul.f32 %v499, 1.442695
        %v501 = vpow.pop %v500
        %v502 = vadd.f32 %v501, 1.0
        %v503 = vrcp.pop %v502
        %v504 = vmul.f32 %v502, %v503
        %v505 = vsub.f32 1.0, %v504
        %v506 = vmul.f32 %v503, %v505
        %v507 = vadd.f32 %v503, %v506
        %vm508 = vweird.f32 %v502
        %vm509 = vweird.f32 %v503
        %vm510 = vmor %vm508, %vm509
        %v511 = vsel %vm510, %v503, %v507
        %v512 = vand.u32 2147483647, %v502
        %vm513 = vcmp.eq.f32.partialorder %v512, 8.507059e+37
        %v514 = vand.u32 %v502, 2147483648
        %v515 = vor.u32 1.1754944e-38, %v514
        %v516 = vsel %vm513, %v515, %v511
        %v517 = vmul.f32 1.0, %v516
        %519 = vrot.lane.b32.xlu0 %v434, 32
        %v520 = vpop.permute.xlu0 %519
        %v522 = vmul.f32 %v462, %v520
        %v523 = vadd.f32 %v460, %v522
        %525 = vrot.lane.b32.xlu0 %v523, 96
        %v526 = vpop.permute.xlu0 %525
        %v528 = vsel %vm466, %v526, 0.0
        %529 = vadd.xlane.f32.xlu0 %v528
        %v530 = vpop.xlane.xlu0 %529
        %v531 = vmul.f32 %v530, 0.03125
        %v532 = vmul.f32 %v523, %v523
        %534 = vrot.lane.b32.xlu0 %v532, 96
        %v535 = vpop.permute.xlu0 %534
        %v537 = vsel %vm466, %v535, 0.0
        %538 = vadd.xlane.f32.xlu0 %v537
        %v539 = vpop.xlane.xlu0 %538
        %v540 = vmul.f32 %v539, 0.03125
        %v541 = vmul.f32 %v531, %v531
        %v542 = vsub.f32 %v540, %v541
        %v543 = vsub.f32 %v523, %v531
        %v544 = vadd.f32 %v542, 1e-05
        %v545 = vrsqrt.pop %v544
        %v546 = vmul.f32 %v545, %v544
        %v547 = vmul.f32 %v546, %v545
        %v548 = vmul.f32 0.5, %v547
        %v549 = vsub.f32 1.5, %v548
        %v550 = vmul.f32 %v545, %v549
        %vm551 = vweird.f32 %v544
        %vm552 = vweird.f32 %v545
        %vm553 = vmor %vm551, %vm552
        %v554 = vsel %vm553, %v545, %v550
        %v555 = vmul.f32 %v543, %v554
        %v556 = vmul.f32 %v555, %v492
        %v557 = vadd.f32 %v556, %v496
        %v558 = vxor.u32 %v557, 2147483648
        %v559 = vmul.f32 %v558, 1.442695
        %v560 = vpow.pop %v559
        %v561 = vadd.f32 %v560, 1.0
        %v562 = vrcp.pop %v561
        %v563 = vmul.f32 %v561, %v562
        %v564 = vsub.f32 1.0, %v563
        %v565 = vmul.f32 %v562, %v564
        %v566 = vadd.f32 %v562, %v565
        %vm567 = vweird.f32 %v561
        %vm568 = vweird.f32 %v562
        %vm569 = vmor %vm567, %vm568
        %v570 = vsel %vm569, %v562, %v566
        %v571 = vand.u32 2147483647, %v561
        %vm572 = vcmp.eq.f32.partialorder %v571, 8.507059e+37
        %v573 = vand.u32 %v561, 2147483648
        %v574 = vor.u32 1.1754944e-38, %v573
        %v575 = vsel %vm572, %v574, %v570
        %v576 = vmul.f32 1.0, %v575
        %577 = vrot.lane.b32.xlu0 %v434, 64
        %v578 = vpop.permute.xlu0 %577
        %v580 = vmul.f32 %v462, %v578
        %v581 = vadd.f32 %v460, %v580
        %583 = vrot.lane.b32.xlu0 %v581, 64
        %v584 = vpop.permute.xlu0 %583
        %v586 = vsel %vm466, %v584, 0.0
        %587 = vadd.xlane.f32.xlu0 %v586
        %v588 = vpop.xlane.xlu0 %587
        %v589 = vmul.f32 %v588, 0.03125
        %v590 = vmul.f32 %v581, %v581
        %592 = vrot.lane.b32.xlu0 %v590, 64
        %v593 = vpop.permute.xlu0 %592
        %v595 = vsel %vm466, %v593, 0.0
        %596 = vadd.xlane.f32.xlu0 %v595
        %v597 = vpop.xlane.xlu0 %596
        %v598 = vmul.f32 %v597, 0.03125
        %v599 = vmul.f32 %v589, %v589
        %v600 = vsub.f32 %v598, %v599
        %v601 = vsub.f32 %v581, %v589
        %v602 = vadd.f32 %v600, 1e-05
        %v603 = vrsqrt.pop %v602
        %v604 = vmul.f32 %v603, %v602
        %v605 = vmul.f32 %v604, %v603
        %v606 = vmul.f32 0.5, %v605
        %v607 = vsub.f32 1.5, %v606
        %v608 = vmul.f32 %v603, %v607
        %vm609 = vweird.f32 %v602
        %vm610 = vweird.f32 %v603
        %vm611 = vmor %vm609, %vm610
        %v612 = vsel %vm611, %v603, %v608
        %v613 = vmul.f32 %v601, %v612
        %v614 = vmul.f32 %v613, %v492
        %v615 = vadd.f32 %v614, %v496
        %v616 = vxor.u32 %v615, 2147483648
        %v617 = vmul.f32 %v616, 1.442695
        %v618 = vpow.pop %v617
        %v619 = vadd.f32 %v618, 1.0
        %v620 = vrcp.pop %v619
        %v621 = vmul.f32 %v619, %v620
        %v622 = vsub.f32 1.0, %v621
        %v623 = vmul.f32 %v620, %v622
        %v624 = vadd.f32 %v620, %v623
        %vm625 = vweird.f32 %v619
        %vm626 = vweird.f32 %v620
        %vm627 = vmor %vm625, %vm626
        %v628 = vsel %vm627, %v620, %v624
        %v629 = vand.u32 2147483647, %v619
        %vm630 = vcmp.eq.f32.partialorder %v629, 8.507059e+37
        %v631 = vand.u32 %v619, 2147483648
        %v632 = vor.u32 1.1754944e-38, %v631
        %v633 = vsel %vm630, %v632, %v628
        %v634 = vmul.f32 1.0, %v633
        %636 = vrot.lane.b32.xlu0 %v460, 32
        %v637 = vpop.permute.xlu0 %636
        %v639 = vsel %vm466, %v637, 0.0
        %640 = vadd.xlane.f32.xlu0 %v639
        %v641 = vpop.xlane.xlu0 %640
        %v642 = vmul.f32 %v641, 0.03125
        %v643 = vmul.f32 %v460, %v460
        %645 = vrot.lane.b32.xlu0 %v643, 32
        %v646 = vpop.permute.xlu0 %645
        %v648 = vsel %vm466, %v646, 0.0
        %649 = vadd.xlane.f32.xlu0 %v648
        %v650 = vpop.xlane.xlu0 %649
        %v651 = vmul.f32 %v650, 0.03125
        %v652 = vmul.f32 %v642, %v642
        %v653 = vsub.f32 %v651, %v652
        %v654 = vsub.f32 %v460, %v642
        %v655 = vadd.f32 %v653, 1e-05
        %v656 = vrsqrt.pop %v655
        %v657 = vmul.f32 %v656, %v655
        %v658 = vmul.f32 %v657, %v656
        %v659 = vmul.f32 0.5, %v658
        %v660 = vsub.f32 1.5, %v659
        %v661 = vmul.f32 %v656, %v660
        %vm662 = vweird.f32 %v655
        %vm663 = vweird.f32 %v656
        %vm664 = vmor %vm662, %vm663
        %v665 = vsel %vm664, %v656, %v661
        %v666 = vmul.f32 %v654, %v665
        %v667 = vmul.f32 %v666, %v492
        %v668 = vadd.f32 %v667, %v496
        %v669 = vtanh.pop %v668
        %v670 = vmul.f32 %v576, %v520
        %672 = vrot.lane.b32.xlu0 %v669, 32
        %v673 = vpop.permute.xlu0 %672
        %v675 = vmul.f32 %v517, %v673
        %677 = vrot.lane.b32.xlu0 %v675, 32
        %v678 = vpop.permute.xlu0 %677
        %v680 = vadd.f32 %v670, %v678
        %v681 = vtanh.pop %v680
        %683 = vrot.lane.b32.xlu0 %v634, 96
        %v684 = vpop.permute.xlu0 %683
        %v686 = vmul.f32 %v681, %v684
        %688 = vrot.lane.b32.xlu0 %v686, 96
        %v689 = vpop.permute.xlu0 %688
        %691 = vst.msk [vmem:[%s410] sm:$0xf] %vm466, %v689
        %s692 = scalar_lea.vmem %s350, 4 [#allocation4]
        %v693 = vld [vmem:[%s692] sm:$0xf]
        %v694 = vsel %vm436, %v689, 0
        %696 = vmatpush.msra.mxu0 0.0
        %697 = vmatpush.msra.mxu0 0.0
        %698 = vmatpush.msra.mxu0 0.0
        %699 = vmatpush.msra.mxu0 0.0
        %700 = vmatpush.msra.mxu0 0.0
        %701 = vmatpush.msra.mxu0 0.0
        %702 = vmatpush.msra.mxu0 0.0
        %703 = vmatpush.msra.mxu0 0.0
        %704 = vmatpush.msra.mxu0 0.0
        %705 = vmatpush.msra.mxu0 0.0
        %706 = vmatpush.msra.mxu0 0.0
        %707 = vmatpush.msra.mxu0 0.0
        %708 = vmatpush.msra.mxu0 %v429
        %709 = vmatpush.msra.mxu0 %v428
        %710 = vmatpush.msra.mxu0 %v427
        %711 = vmatpush.msra.mxu0 %v426
        %712 = vmatmul.f32.gmra.mxu0 %v694
        %v713 = vpop.f32.mrf.mxu0
        %v714 = vadd.f32 0.0, %v713
        %715 = vdwg.mxu0
        %v716 = vadd.f32 %v693, %v714
        %718 = vrot.lane.b32.xlu0 %v680, 96
        %v719 = vpop.permute.xlu0 %718
        %v721 = vmul.f32 %v462, %v719
        %v722 = vadd.f32 %v716, %v721
        %v723 = vsel %vm466, %v722, 0.0
        %724 = vadd.xlane.f32.xlu0 %v723
        %v725 = vpop.xlane.xlu0 %724
        %v726 = vmul.f32 %v725, 0.03125
        %v727 = vmul.f32 %v722, %v722
        %v728 = vsel %vm466, %v727, 0.0
        %729 = vadd.xlane.f32.xlu0 %v728
        %v730 = vpop.xlane.xlu0 %729
        %v731 = vmul.f32 %v730, 0.03125
        %v732 = vmul.f32 %v726, %v726
        %v733 = vsub.f32 %v731, %v732
        %v734 = vsub.f32 %v722, %v726
        %v735 = vadd.f32 %v733, 1e-05
        %v736 = vrsqrt.pop %v735
        %v737 = vmul.f32 %v736, %v735
        %v738 = vmul.f32 %v737, %v736
        %v739 = vmul.f32 0.5, %v738
        %v740 = vsub.f32 1.5, %v739
        %v741 = vmul.f32 %v736, %v740
        %vm742 = vweird.f32 %v735
        %vm743 = vweird.f32 %v736
        %vm744 = vmor %vm742, %vm743
        %v745 = vsel %vm744, %v736, %v741
        %v746 = vmul.f32 %v734, %v745
        %v747 = vmul.f32 %v746, %v492
        %v748 = vadd.f32 %v747, %v496
        %v749 = vxor.u32 %v748, 2147483648
        %v750 = vmul.f32 %v749, 1.442695
        %v751 = vpow.pop %v750
        %v752 = vadd.f32 %v751, 1.0
        %v753 = vrcp.pop %v752
        %v754 = vmul.f32 %v752, %v753
        %v755 = vsub.f32 1.0, %v754
        %v756 = vmul.f32 %v753, %v755
        %v757 = vadd.f32 %v753, %v756
        %vm758 = vweird.f32 %v752
        %vm759 = vweird.f32 %v753
        %vm760 = vmor %vm758, %vm759
        %v761 = vsel %vm760, %v753, %v757
        %v762 = vand.u32 2147483647, %v752
        %vm763 = vcmp.eq.f32.partialorder %v762, 8.507059e+37
        %v764 = vand.u32 %v752, 2147483648
        %v765 = vor.u32 1.1754944e-38, %v764
        %v766 = vsel %vm763, %v765, %v761
        %v767 = vmul.f32 1.0, %v766
        %v768 = vmul.f32 %v462, %v680
        %v769 = vadd.f32 %v716, %v768
        %771 = vrot.lane.b32.xlu0 %v769, 96
        %v772 = vpop.permute.xlu0 %771
        %v774 = vsel %vm466, %v772, 0.0
        %775 = vadd.xlane.f32.xlu0 %v774
        %v776 = vpop.xlane.xlu0 %775
        %v777 = vmul.f32 %v776, 0.03125
        %v778 = vmul.f32 %v769, %v769
        %780 = vrot.lane.b32.xlu0 %v778, 96
        %v781 = vpop.permute.xlu0 %780
        %v783 = vsel %vm466, %v781, 0.0
        %784 = vadd.xlane.f32.xlu0 %v783
        %v785 = vpop.xlane.xlu0 %784
        %v786 = vmul.f32 %v785, 0.03125
        %v787 = vmul.f32 %v777, %v777
        %v788 = vsub.f32 %v786, %v787
        %v789 = vsub.f32 %v769, %v777
        %v790 = vadd.f32 %v788, 1e-05
        %v791 = vrsqrt.pop %v790
        %v792 = vmul.f32 %v791, %v790
        %v793 = vmul.f32 %v792, %v791
        %v794 = vmul.f32 0.5, %v793
        %v795 = vsub.f32 1.5, %v794
        %v796 = vmul.f32 %v791, %v795
        %vm797 = vweird.f32 %v790
        %vm798 = vweird.f32 %v791
        %vm799 = vmor %vm797, %vm798
        %v800 = vsel %vm799, %v791, %v796
        %v801 = vmul.f32 %v789, %v800
        %v802 = vmul.f32 %v801, %v492
        %v803 = vadd.f32 %v802, %v496
        %v804 = vxor.u32 %v803, 2147483648
        %v805 = vmul.f32 %v804, 1.442695
        %v806 = vpow.pop %v805
        %v807 = vadd.f32 %v806, 1.0
        %v808 = vrcp.pop %v807
        %v809 = vmul.f32 %v807, %v808
        %v810 = vsub.f32 1.0, %v809
        %v811 = vmul.f32 %v808, %v810
        %v812 = vadd.f32 %v808, %v811
        %vm813 = vweird.f32 %v807
        %vm814 = vweird.f32 %v808
        %vm815 = vmor %vm813, %vm814
        %v816 = vsel %vm815, %v808, %v812
        %v817 = vand.u32 2147483647, %v807
        %vm818 = vcmp.eq.f32.partialorder %v817, 8.507059e+37
        %v819 = vand.u32 %v807, 2147483648
        %v820 = vor.u32 1.1754944e-38, %v819
        %v821 = vsel %vm818, %v820, %v816
        %v822 = vmul.f32 1.0, %v821
        %823 = vrot.lane.b32.xlu0 %v680, 32
        %v824 = vpop.permute.xlu0 %823
        %v826 = vmul.f32 %v462, %v824
        %v827 = vadd.f32 %v716, %v826
        %829 = vrot.lane.b32.xlu0 %v827, 64
        %v830 = vpop.permute.xlu0 %829
        %v832 = vsel %vm466, %v830, 0.0
        %833 = vadd.xlane.f32.xlu0 %v832
        %v834 = vpop.xlane.xlu0 %833
        %v835 = vmul.f32 %v834, 0.03125
        %v836 = vmul.f32 %v827, %v827
        %838 = vrot.lane.b32.xlu0 %v836, 64
        %v839 = vpop.permute.xlu0 %838
        %v841 = vsel %vm466, %v839, 0.0
        %842 = vadd.xlane.f32.xlu0 %v841
        %v843 = vpop.xlane.xlu0 %842
        %v844 = vmul.f32 %v843, 0.03125
        %v845 = vmul.f32 %v835, %v835
        %v846 = vsub.f32 %v844, %v845
        %v847 = vsub.f32 %v827, %v835
        %v848 = vadd.f32 %v846, 1e-05
        %v849 = vrsqrt.pop %v848
        %v850 = vmul.f32 %v849, %v848
        %v851 = vmul.f32 %v850, %v849
        %v852 = vmul.f32 0.5, %v851
        %v853 = vsub.f32 1.5, %v852
        %v854 = vmul.f32 %v849, %v853
        %vm855 = vweird.f32 %v848
        %vm856 = vweird.f32 %v849
        %vm857 = vmor %vm855, %vm856
        %v858 = vsel %vm857, %v849, %v854
        %v859 = vmul.f32 %v847, %v858
        %v860 = vmul.f32 %v859, %v492
        %v861 = vadd.f32 %v860, %v496
        %v862 = vxor.u32 %v861, 2147483648
        %v863 = vmul.f32 %v862, 1.442695
        %v864 = vpow.pop %v863
        %v865 = vadd.f32 %v864, 1.0
        %v866 = vrcp.pop %v865
        %v867 = vmul.f32 %v865, %v866
        %v868 = vsub.f32 1.0, %v867
        %v869 = vmul.f32 %v866, %v868
        %v870 = vadd.f32 %v866, %v869
        %vm871 = vweird.f32 %v865
        %vm872 = vweird.f32 %v866
        %vm873 = vmor %vm871, %vm872
        %v874 = vsel %vm873, %v866, %v870
        %v875 = vand.u32 2147483647, %v865
        %vm876 = vcmp.eq.f32.partialorder %v875, 8.507059e+37
        %v877 = vand.u32 %v865, 2147483648
        %v878 = vor.u32 1.1754944e-38, %v877
        %v879 = vsel %vm876, %v878, %v874
        %v880 = vmul.f32 1.0, %v879
        %882 = vrot.lane.b32.xlu0 %v716, 32
        %v883 = vpop.permute.xlu0 %882
        %v885 = vsel %vm466, %v883, 0.0
        %886 = vadd.xlane.f32.xlu0 %v885
        %v887 = vpop.xlane.xlu0 %886
        %v888 = vmul.f32 %v887, 0.03125
        %v889 = vmul.f32 %v716, %v716
        %891 = vrot.lane.b32.xlu0 %v889, 32
        %v892 = vpop.permute.xlu0 %891
        %v894 = vsel %vm466, %v892, 0.0
        %895 = vadd.xlane.f32.xlu0 %v894
        %v896 = vpop.xlane.xlu0 %895
        %v897 = vmul.f32 %v896, 0.03125
        %v898 = vmul.f32 %v888, %v888
        %v899 = vsub.f32 %v897, %v898
        %v900 = vsub.f32 %v716, %v888
        %v901 = vadd.f32 %v899, 1e-05
        %v902 = vrsqrt.pop %v901
        %v903 = vmul.f32 %v902, %v901
        %v904 = vmul.f32 %v903, %v902
        %v905 = vmul.f32 0.5, %v904
        %v906 = vsub.f32 1.5, %v905
        %v907 = vmul.f32 %v902, %v906
        %vm908 = vweird.f32 %v901
        %vm909 = vweird.f32 %v902
        %vm910 = vmor %vm908, %vm909
        %v911 = vsel %vm910, %v902, %v907
        %v912 = vmul.f32 %v900, %v911
        %v913 = vmul.f32 %v912, %v492
        %v914 = vadd.f32 %v913, %v496
        %v915 = vtanh.pop %v914
        %v916 = vmul.f32 %v822, %v680
        %918 = vrot.lane.b32.xlu0 %v915, 32
        %v919 = vpop.permute.xlu0 %918
        %v921 = vmul.f32 %v767, %v919
        %923 = vrot.lane.b32.xlu0 %v921, 32
        %v924 = vpop.permute.xlu0 %923
        %v926 = vadd.f32 %v916, %v924
        %v927 = vtanh.pop %v926
        %929 = vrot.lane.b32.xlu0 %v880, 96
        %v930 = vpop.permute.xlu0 %929
        %v932 = vmul.f32 %v927, %v930
        %934 = vrot.lane.b32.xlu0 %v932, 96
        %v935 = vpop.permute.xlu0 %934
        %s937 = scalar_lea.vmem %s410, 4 [#allocation15]
        %938 = vst.msk [vmem:[%s937] sm:$0xf] %vm466, %v935
        %939 = vst.msk [vmem:[#allocation2] sm:$0xf] %vm466, %v935
        %941 = vrot.lane.b32.xlu0 %v926, 96
        %v942 = vpop.permute.xlu0 %941
        %944 = vst.msk [vmem:[#allocation3] sm:$0xf] %vm466, %v942
        %s945 = sand.u32 %s213, 1
        %s946 = scalar_lea.sflag [#allocation6], %s945
        %s947 = sand.u32 %s213, 1
        %s948 = smul.addr %s947, 8
        %s949 = scalar_lea.vmem [#allocation15], %s948
        // Predicated region
        $region77: #{tpu_custom_call.1} parent=47 // pred_check
          %p950 = pneg %p223
        $region78: #{tpu_custom_call.1} parent=47 // pred_check_branch
          %952 = sbr.rel (%p950) target = $region80
        $region79: #{tpu_custom_call.1} parent=47 // pred_region
          %s953 = smul.u32 2, %s32
          %955 = vsyncadd %s946, 0
          %s956 = sadd.s32 %s31, %s953
          %s957 = smul.addr %s956, 4
          %s958 = scalar_lea.hbm %s7, %s957
          %s959 = sshll.u32 %s949, 4
          %s960 = int_to_ptr.vmem [resolvable:$true] %s959
          %s961 = sshll.u32 %s958, 4
          %s962 = int_to_ptr.hbm [resolvable:$true] %s961
          %967 = dma.vmem_to_hbm [thread:$0]  %s960, 128, %s962, %s946, 64, 64, 4
        $region80: #{tpu_custom_call.1} parent=47 // pred_fallthru
          _
      $region48: #{tpu_custom_call.1} parent=5 // pred_fallthru
        _
      %p968 = scmp.le.s32.totalorder 2, %s22
      // Predicated region
      $region81: #{tpu_custom_call.1} parent=5 // pred_check
        %p969 = pneg %p968
      $region82: #{tpu_custom_call.1} parent=5 // pred_check_branch
        %971 = sbr.rel (%p969) target = $region84
      $region83: #{tpu_custom_call.1} parent=5 // pred_region
        %s972 = ssub.s32 %s22, 2
        // Predicated region
        $region85: #{tpu_custom_call.1} parent=83 // pred_check
          %p973 = pneg %p229
        $region86: #{tpu_custom_call.1} parent=83 // pred_check_branch
          %975 = sbr.rel (%p973) target = $region88
        $region87: #{tpu_custom_call.1} parent=83 // pred_region
          %s976 = sand.u32 %s214, 1
          %s977 = scalar_lea.sflag [#allocation6], %s976
          %s978 = sand.u32 %s214, 1
          %s979 = smul.addr %s978, 8
          %s980 = scalar_lea.vmem [#allocation15], %s979
          %982 = dma.done %s977, 128
        $region88: #{tpu_custom_call.1} parent=83 // pred_fallthru
          _
      $region84: #{tpu_custom_call.1} parent=5 // pred_fallthru
        _
    $region6: #{tpu_custom_call.1} parent=1 // loop_footer
      %s26 = sadd.s32 1, %s22
    $region7: #{tpu_custom_call.1} parent=1 // loop_footer_branch
      %21 = sbr.rel target = $region3
    $region8: #{tpu_custom_call.1} parent=1 // loop_exit
      _
    %983 = vsyncpa [#allocation5], 1
    %s984 = scalar_lea.sflag [#allocation5], 1
    %985 = vsyncpa %s984, 1
    %986 = vsyncpa [#allocation8], 1
    %987 = vsyncpa [#allocation11], 1
    %988 = vsyncpa [#allocation14], 1
    %989 = vsyncpa [#allocation6], 1
    %s990 = scalar_lea.sflag [#allocation6], 1
    %991 = vsyncpa %s990, 1

// kernel: tpu_custom_call.1
$region0: #{tpu_custom_call.1}
  #allocation0 [shape = 'u32[]', space=smem, size = 0x4, offset = 0x4, fixed_abs, tag = 'smem constant byte address 0x4 - core index']
  #allocation1 [shape = 'u32[72,128]{1,0:T(1,128)}', space=vmem, size = 0x9000, scoped, tag = 'internal scratch']
  #allocation2 [shape = 'f32[4,32]{1,0:T(4,128)}', space=vmem, size = 0x800, scoped, tag = 'scratch operand']
  #allocation3 [shape = 'f32[4,32]{1,0:T(4,128)}', space=vmem, size = 0x800, scoped, tag = 'scratch operand']
  %s0 = inlined_call_operand.hbm [shape: f32[8,4,128], index: 0, kind: input, shape index: {}]
  %s1 = inlined_call_operand.hbm [shape: f32[32,128], index: 1, kind: input, shape index: {}]
  %s2 = inlined_call_operand.hbm [shape: f32[1,96], index: 2, kind: input, shape index: {}]
  %s3 = inlined_call_operand.hbm [shape: f32[1,128], index: 3, kind: input, shape index: {}]
  %s4 = inlined_call_operand.hbm [shape: f32[1,128], index: 4, kind: input, shape index: {}]
  %s5 = inlined_call_operand.vmem [shape: f32[4,32], index: 5, kind: input, shape index: {}]
  %s6 = inlined_call_operand.hbm [shape: f32[4,32], index: 6, kind: input, shape index: {}]
  %s7 = inlined_call_operand.hbm [shape: f32[8,4,32], index: 7, kind: output, shape index: {}]
  %s8 = sld [smem:[#allocation0]]
  $region89: #{tpu_custom_call.1} parent=0
    _
  %s10 = ssub.s32 1, %s8
  %s11 = scalar_select 0, %s10, %s8
  $region1: #{tpu_custom_call.1} parent=0
    #allocation4 [shape = 'u8[8192]{0}', space=vmem, size = 0x2000, scoped, tag = 'input window, operand 0']
    #allocation5 [shape = 's32[2]{0}', space=sflag, size = 0x8, scoped, tag = 'scoped memory for tpu_custom_call.1']
    #allocation6 [shape = 's32[2]{0}', space=sflag, size = 0x8, scoped, tag = 'scoped memory for tpu_custom_call.1']
    #allocation7 [shape = 'u8[16384]{0}', space=vmem, size = 0x4000, scoped, tag = 'input window, operand 1, single buffered']
    #allocation8 [shape = 's32[1]{0}', space=sflag, size = 0x4, scoped, tag = 'scoped memory for tpu_custom_call.1']
    #allocation9 [shape = 'u8[512]{0}', space=vmem, size = 0x400, scoped, tag = 'input window, operand 2, single buffered']
    #allocation10 [shape = 'u8[512]{0}', space=vmem, size = 0x400, scoped, tag = 'input window, operand 3, single buffered']
    #allocation11 [shape = 's32[1]{0}', space=sflag, size = 0x4, scoped, tag = 'scoped memory for tpu_custom_call.1']
    #allocation12 [shape = 'u8[512]{0}', space=vmem, size = 0x400, scoped, tag = 'input window, operand 4, single buffered']
    #allocation13 [shape = 'u8[2048]{0}', space=vmem, size = 0x800, scoped, tag = 'input window, operand 6, single buffered']
    #allocation14 [shape = 's32[1]{0}', space=sflag, size = 0x4, scoped, tag = 'scoped memory for tpu_custom_call.1']
    #allocation15 [shape = 'u8[8192]{0}', space=vmem, size = 0x2000, scoped, tag = 'output window, operand 0']
    %12 = vsyncpa [#allocation5], 0
    %s13 = scalar_lea.sflag [#allocation5], 1
    %14 = vsyncpa %s13, 0
    %15 = vsyncpa [#allocation8], 0
    %16 = vsyncpa [#allocation11], 0
    %17 = vsyncpa [#allocation14], 0
    %18 = vsyncpa [#allocation6], 0
    %s19 = scalar_lea.sflag [#allocation6], 1
    %20 = vsyncpa %s19, 0
    loop: start=0, step=1, limit=6
    $region2: #{tpu_custom_call.1} parent=1 // loop_pre_header
      _
    $region3: #{tpu_custom_call.1} parent=1 // loop_header
      %s22 = sphi 0, %s26
      %p23 = scmp.ge.s32.totalorder %s22, 6
      %s29 = sphi 0, %s41
      %s30 = sphi 0, %s37
      %s31 = sphi 0, %s29
      %s32 = sphi 0, %s30
      %s33 = sphi 0, %s31
      %s34 = sphi 0, %s32
      %s46 = sphi 0, %s48
      %s49 = sphi 0, %s46
      %s50 = sphi 0, %s49
      %s66 = sphi 0, %s50
      %s70 = sphi 0, %s70
      %s72 = sphi 0, %s70
      %s73 = sphi 0, %s72
      %s87 = sphi 0, %s73
      %s91 = sphi 0, %s91
      %s93 = sphi 0, %s91
      %s94 = sphi 0, %s93
      %s108 = sphi 0, %s94
      %s112 = sphi 0, %s112
      %s114 = sphi 0, %s112
      %s115 = sphi 0, %s114
      %s129 = sphi 0, %s115
      %s133 = sphi 0, %s133
      %s135 = sphi 0, %s133
      %s136 = sphi 0, %s135
      %s150 = sphi 0, %s136
      %s156 = sphi 0, %s158
      %s159 = sphi 0, %s156
      %s160 = sphi 0, %s159
      %s176 = sphi 0, %s160
      %s182 = sphi 0, %s184
      %s185 = sphi 0, %s182
      %s186 = sphi 0, %s185
      %s202 = sphi 0, %s186
      %s210 = sphi 0, %s212
      %s213 = sphi 0, %s210
      %s214 = sphi 0, %s213
      %s230 = sphi 0, %s214
    $region4: #{tpu_custom_call.1} parent=1 // loop_header_branch
      %25 = sbr.rel (%p23) target = $region8
    $region5: #{tpu_custom_call.1} parent=1 // loop_body
      %s27 = ssub.s32 %s22, 1
      %s28 = ssub.s32 %s22, 2
      %s35 = sadd.s32 1, %s30
      %p36 = scmp.ge.s32.totalorder %s35, 4
      %s37 = scalar_select %p36, 0, %s35
      %s38 = sadd.s32 1, %s29
      %s39 = scalar_select %p36, %s38, %s29
      %p40 = scmp.ge.s32.totalorder %s39, 1
      %s41 = scalar_select %p40, 0, %s39
      %s42 = ssub.s32 %s30, %s37
      %s43 = ssub.s32 %s29, %s41
      %s44 = sor.u32 %s42, %s43
      %p45 = scmp.eq.s32.totalorder %s44, 0
      %s47 = sadd.s32 %s46, 1
      %s48 = scalar_select %p45, %s46, %s47
      %p51 = pneg %p45
      %p52 = scmp.eq.s32.totalorder %s22, 3
      %p53 = por %p51, %p52
      %p54 = scmp.ne.s32.totalorder %s46, %s49
      %p55 = scmp.eq.s32.totalorder %s22, 0
      %p56 = por %p54, %p55
      %p57 = scmp.ne.s32.totalorder %s46, %s49
      %p58 = scmp.eq.s32.totalorder %s27, 3
      %p59 = por %p57, %p58
      %p60 = scmp.ne.s32.totalorder %s49, %s50
      %p61 = scmp.eq.s32.totalorder %s27, 0
      %p62 = por %p60, %p61
      %p63 = scmp.ne.s32.totalorder %s49, %s50
      %p64 = scmp.eq.s32.totalorder %s28, 3
      %p65 = por %p63, %p64
      %p67 = scmp.ne.s32.totalorder %s50, %s66
      %p68 = scmp.eq.s32.totalorder %s28, 0
      %p69 = por %p67, %p68
      %s71 = sadd.s32 %s70, 1
      %p74 = scmp.eq.s32.totalorder %s22, 3
      %p75 = scmp.ne.s32.totalorder %s70, %s72
      %p76 = scmp.eq.s32.totalorder %s22, 0
      %p77 = por %p75, %p76
      %p78 = scmp.ne.s32.totalorder %s70, %s72
      %p79 = scmp.eq.s32.totalorder %s27, 3
      %p80 = por %p78, %p79
      %p81 = scmp.ne.s32.totalorder %s72, %s73
      %p82 = scmp.eq.s32.totalorder %s27, 0
      %p83 = por %p81, %p82
      %p84 = scmp.ne.s32.totalorder %s72, %s73
      %p85 = scmp.eq.s32.totalorder %s28, 3
      %p86 = por %p84, %p85
      %p88 = scmp.ne.s32.totalorder %s73, %s87
      %p89 = scmp.eq.s32.totalorder %s28, 0
      %p90 = por %p88, %p89
      %s92 = sadd.s32 %s91, 1
      %p95 = scmp.eq.s32.totalorder %s22, 3
      %p96 = scmp.ne.s32.totalorder %s91, %s93
      %p97 = scmp.eq.s32.totalorder %s22, 0
      %p98 = por %p96, %p97
      %p99 = scmp.ne.s32.totalorder %s91, %s93
      %p100 = scmp.eq.s32.totalorder %s27, 3
      %p101 = por %p99, %p100
      %p102 = scmp.ne.s32.totalorder %s93, %s94
      %p103 = scmp.eq.s32.totalorder %s27, 0
      %p104 = por %p102, %p103
      %p105 = scmp.ne.s32.totalorder %s93, %s94
      %p106 = scmp.eq.s32.totalorder %s28, 3
      %p107 = por %p105, %p106
      %p109 = scmp.ne.s32.totalorder %s94, %s108
      %p110 = scmp.eq.s32.totalorder %s28, 0
      %p111 = por %p109, %p110
      %s113 = sadd.s32 %s112, 1
      %p116 = scmp.eq.s32.totalorder %s22, 3
      %p117 = scmp.ne.s32.totalorder %s112, %s114
      %p118 = scmp.eq.s32.totalorder %s22, 0
      %p119 = por %p117, %p118
      %p120 = scmp.ne.s32.totalorder %s112, %s114
      %p121 = scmp.eq.s32.totalorder %s27, 3
      %p122 = por %p120, %p121
      %p123 = scmp.ne.s32.totalorder %s114, %s115
      %p124 = scmp.eq.s32.totalorder %s27, 0
      %p125 = por %p123, %p124
      %p126 = scmp.ne.s32.totalorder %s114, %s115
      %p127 = scmp.eq.s32.totalorder %s28, 3
      %p128 = por %p126, %p127
      %p130 = scmp.ne.s32.totalorder %s115, %s129
      %p131 = scmp.eq.s32.totalorder %s28, 0
      %p132 = por %p130, %p131
      %s134 = sadd.s32 %s133, 1
      %p137 = scmp.eq.s32.totalorder %s22, 3
      %p138 = scmp.ne.s32.totalorder %s133, %s135
      %p139 = scmp.eq.s32.totalorder %s22, 0
      %p140 = por %p138, %p139
      %p141 = scmp.ne.s32.totalorder %s133, %s135
      %p142 = scmp.eq.s32.totalorder %s27, 3
      %p143 = por %p141, %p142
      %p144 = scmp.ne.s32.totalorder %s135, %s136
      %p145 = scmp.eq.s32.totalorder %s27, 0
      %p146 = por %p144, %p145
      %p147 = scmp.ne.s32.totalorder %s135, %s136
      %p148 = scmp.eq.s32.totalorder %s28, 3
      %p149 = por %p147, %p148
      %p151 = scmp.ne.s32.totalorder %s136, %s150
      %p152 = scmp.eq.s32.totalorder %s28, 0
      %p153 = por %p151, %p152
      %s154 = ssub.s32 %s29, %s41
      %p155 = scmp.eq.s32.totalorder %s154, 0
      %s157 = sadd.s32 %s156, 1
      %s158 = scalar_select %p155, %s156, %s157
      %p161 = pneg %p155
      %p162 = scmp.eq.s32.totalorder %s22, 3
      %p163 = por %p161, %p162
      %p164 = scmp.ne.s32.totalorder %s156, %s159
      %p165 = scmp.eq.s32.totalorder %s22, 0
      %p166 = por %p164, %p165
      %p167 = scmp.ne.s32.totalorder %s156, %s159
      %p168 = scmp.eq.s32.totalorder %s27, 3
      %p169 = por %p167, %p168
      %p170 = scmp.ne.s32.totalorder %s159, %s160
      %p171 = scmp.eq.s32.totalorder %s27, 0
      %p172 = por %p170, %p171
      %p173 = scmp.ne.s32.totalorder %s159, %s160
      %p174 = scmp.eq.s32.totalorder %s28, 3
      %p175 = por %p173, %p174
      %p177 = scmp.ne.s32.totalorder %s160, %s176
      %p178 = scmp.eq.s32.totalorder %s28, 0
      %p179 = por %p177, %p178
      %s180 = ssub.s32 %s29, %s41
      %p181 = scmp.eq.s32.totalorder %s180, 0
      %s183 = sadd.s32 %s182, 1
      %s184 = scalar_select %p181, %s182, %s183
      %p187 = pneg %p181
      %p188 = scmp.eq.s32.totalorder %s22, 3
      %p189 = por %p187, %p188
      %p190 = scmp.ne.s32.totalorder %s182, %s185
      %p191 = scmp.eq.s32.totalorder %s22, 0
      %p192 = por %p190, %p191
      %p193 = scmp.ne.s32.totalorder %s182, %s185
      %p194 = scmp.eq.s32.totalorder %s27, 3
      %p195 = por %p193, %p194
      %p196 = scmp.ne.s32.totalorder %s185, %s186
      %p197 = scmp.eq.s32.totalorder %s27, 0
      %p198 = por %p196, %p197
      %p199 = scmp.ne.s32.totalorder %s185, %s186
      %p200 = scmp.eq.s32.totalorder %s28, 3
      %p201 = por %p199, %p200
      %p203 = scmp.ne.s32.totalorder %s186, %s202
      %p204 = scmp.eq.s32.totalorder %s28, 0
      %p205 = por %p203, %p204
      %s206 = ssub.s32 %s30, %s37
      %s207 = ssub.s32 %s29, %s41
      %s208 = sor.u32 %s206, %s207
      %p209 = scmp.eq.s32.totalorder %s208, 0
      %s211 = sadd.s32 %s210, 1
      %s212 = scalar_select %p209, %s210, %s211
      %p215 = pneg %p209
      %p216 = scmp.eq.s32.totalorder %s22, 3
      %p217 = por %p215, %p216
      %p218 = scmp.ne.s32.totalorder %s210, %s213
      %p219 = scmp.eq.s32.totalorder %s22, 0
      %p220 = por %p218, %p219
      %p221 = scmp.ne.s32.totalorder %s210, %s213
      %p222 = scmp.eq.s32.totalorder %s27, 3
      %p223 = por %p221, %p222
      %p224 = scmp.ne.s32.totalorder %s213, %s214
      %p225 = scmp.eq.s32.totalorder %s27, 0
      %p226 = por %p224, %p225
      %p227 = scmp.ne.s32.totalorder %s213, %s214
      %p228 = scmp.eq.s32.totalorder %s28, 3
      %p229 = por %p227, %p228
      %p231 = scmp.ne.s32.totalorder %s214, %s230
      %p232 = scmp.eq.s32.totalorder %s28, 0
      %p233 = por %p231, %p232
      %p234 = scmp.le.s32.totalorder 1, %s22
      %p235 = scmp.lt.s32.totalorder %s22, 5
      %p236 = pnand %p234, %p235
      %p237 = pneg %p236
      // Predicated region
      $region9: #{tpu_custom_call.1} parent=5 // pred_check
        _
      $region10: #{tpu_custom_call.1} parent=5 // pred_check_branch
        %239 = sbr.rel (%p236) target = $region12
      $region11: #{tpu_custom_call.1} parent=5 // pred_region
        %s240 = ssub.s32 %s22, 1
        // Predicated region
        $region13: #{tpu_custom_call.1} parent=11 // pred_check
          %p241 = pneg %p83
        $region14: #{tpu_custom_call.1} parent=11 // pred_check_branch
          %243 = sbr.rel (%p241) target = $region16
        $region15: #{tpu_custom_call.1} parent=11 // pred_region
          %245 = vsyncadd [#allocation8], 0
          %s246 = sshll.u32 %s1, 4
          %s247 = int_to_ptr.hbm [resolvable:$true] %s246
          %s248 = sshll.u32 [#allocation7], 4
          %s249 = int_to_ptr.vmem [resolvable:$true] %s248
          %254 = dma.hbm_to_vmem [thread:$0]  %s247, 512, %s249, [#allocation8], 128, 128, 8
        $region16: #{tpu_custom_call.1} parent=11 // pred_fallthru
          _
        // Predicated region
        $region17: #{tpu_custom_call.1} parent=11 // pred_check
          %p255 = pneg %p104
        $region18: #{tpu_custom_call.1} parent=11 // pred_check_branch
          %257 = sbr.rel (%p255) target = $region20
        $region19: #{tpu_custom_call.1} parent=11 // pred_region
          %259 = vsyncadd [#allocation8], 0
          %s261 = sshll.u32 %s2, 4
          %s262 = int_to_ptr.hbm [resolvable:$true] %s261
          %s263 = sshll.u32 [#allocation9], 4
          %s264 = int_to_ptr.vmem [resolvable:$true] %s263
          %266 = dma.hbm_to_vmem [thread:$0]  %s262, 16, %s264, [#allocation8]
        $region20: #{tpu_custom_call.1} parent=11 // pred_fallthru
          _
        // Predicated region
        $region21: #{tpu_custom_call.1} parent=11 // pred_check
          %p267 = pneg %p125
        $region22: #{tpu_custom_call.1} parent=11 // pred_check_branch
          %269 = sbr.rel (%p267) target = $region24
        $region23: #{tpu_custom_call.1} parent=11 // pred_region
          %271 = vsyncadd [#allocation11], 0
          %s273 = sshll.u32 %s3, 4
          %s274 = int_to_ptr.hbm [resolvable:$true] %s273
          %s275 = sshll.u32 [#allocation10], 4
          %s276 = int_to_ptr.vmem [resolvable:$true] %s275
          %278 = dma.hbm_to_vmem [thread:$0]  %s274, 16, %s276, [#allocation11]
        $region24: #{tpu_custom_call.1} parent=11 // pred_fallthru
          _
        // Predicated region
        $region25: #{tpu_custom_call.1} parent=11 // pred_check
          %p279 = pneg %p146
        $region26: #{tpu_custom_call.1} parent=11 // pred_check_branch
          %281 = sbr.rel (%p279) target = $region28
        $region27: #{tpu_custom_call.1} parent=11 // pred_region
          %283 = vsyncadd [#allocation11], 0
          %s285 = sshll.u32 %s4, 4
          %s286 = int_to_ptr.hbm [resolvable:$true] %s285
          %s287 = sshll.u32 [#allocation12], 4
          %s288 = int_to_ptr.vmem [resolvable:$true] %s287
          %290 = dma.hbm_to_vmem [thread:$0]  %s286, 16, %s288, [#allocation11]
        $region28: #{tpu_custom_call.1} parent=11 // pred_fallthru
          _
        // Predicated region
        $region29: #{tpu_custom_call.1} parent=11 // pred_check
          %p291 = pneg %p172
        $region30: #{tpu_custom_call.1} parent=11 // pred_check_branch
          %293 = sbr.rel (%p291) target = $region32
        $region31: #{tpu_custom_call.1} parent=11 // pred_region
          %p294 = scmp.lt.s32.totalorder %s31, 0
          %s295 = scalar_select %p294, %s31, 0
          %s296 = smul.addr %s295, 4
          %s297 = scalar_lea.vmem %s5, %s296
        $region32: #{tpu_custom_call.1} parent=11 // pred_fallthru
          _
        // Predicated region
        $region33: #{tpu_custom_call.1} parent=11 // pred_check
          %p298 = pneg %p198
        $region34: #{tpu_custom_call.1} parent=11 // pred_check_branch
          %300 = sbr.rel (%p298) target = $region36
        $region35: #{tpu_custom_call.1} parent=11 // pred_region
          %302 = vsyncadd [#allocation14], 0
          %s303 = smul.addr %s31, 4
          %s304 = scalar_lea.hbm %s6, %s303
          %s306 = sshll.u32 %s304, 4
          %s307 = int_to_ptr.hbm [resolvable:$true] %s306
          %s308 = sshll.u32 [#allocation13], 4
          %s309 = int_to_ptr.vmem [resolvable:$true] %s308
          %311 = dma.hbm_to_vmem [thread:$0]  %s307, 64, %s309, [#allocation14]
        $region36: #{tpu_custom_call.1} parent=11 // pred_fallthru
          _
      $region12: #{tpu_custom_call.1} parent=5 // pred_fallthru
        _
      %p312 = scmp.lt.s32.totalorder %s22, 4
      // Predicated region
      $region37: #{tpu_custom_call.1} parent=5 // pred_check
        %p313 = pneg %p312
      $region38: #{tpu_custom_call.1} parent=5 // pred_check_branch
        %315 = sbr.rel (%p313) target = $region40
      $region39: #{tpu_custom_call.1} parent=5 // pred_region
        // Predicated region
        $region41: #{tpu_custom_call.1} parent=39 // pred_check
          %p316 = pneg %p56
        $region42: #{tpu_custom_call.1} parent=39 // pred_check_branch
          %318 = sbr.rel (%p316) target = $region44
        $region43: #{tpu_custom_call.1} parent=39 // pred_region
          %s319 = sand.u32 %s46, 1
          %s320 = scalar_lea.sflag [#allocation5], %s319
          %s321 = sand.u32 %s46, 1
          %s322 = smul.addr %s321, 8
          %s323 = scalar_lea.vmem [#allocation4], %s322
          %s324 = smul.u32 2, %s30
          %326 = vsyncadd %s320, 0
          %s327 = sadd.s32 %s29, %s324
          %s328 = smul.addr %s327, 4
          %s329 = scalar_lea.hbm %s0, %s328
          %s330 = sshll.u32 %s329, 4
          %s331 = int_to_ptr.hbm [resolvable:$true] %s330
          %s332 = sshll.u32 %s323, 4
          %s333 = int_to_ptr.vmem [resolvable:$true] %s332
          %338 = dma.hbm_to_vmem [thread:$0]  %s331, 128, %s333, %s320, 64, 64, 4
        $region44: #{tpu_custom_call.1} parent=39 // pred_fallthru
          _
      $region40: #{tpu_custom_call.1} parent=5 // pred_fallthru
        _
      %p339 = scmp.le.s32.totalorder 1, %s22
      %p340 = scmp.lt.s32.totalorder %s22, 5
      %p341 = pnand %p339, %p340
      %p342 = pneg %p341
      // Predicated region
      $region45: #{tpu_custom_call.1} parent=5 // pred_check
        _
      $region46: #{tpu_custom_call.1} parent=5 // pred_check_branch
        %344 = sbr.rel (%p341) target = $region48
      $region47: #{tpu_custom_call.1} parent=5 // pred_region
        %s345 = ssub.s32 %s22, 1
        %s346 = sand.u32 %s49, 1
        %s347 = scalar_lea.sflag [#allocation5], %s346
        %s348 = sand.u32 %s49, 1
        %s349 = smul.addr %s348, 8
        %s350 = scalar_lea.vmem [#allocation4], %s349
        // Predicated region
        $region49: #{tpu_custom_call.1} parent=47 // pred_check
          %p351 = pneg %p62
        $region50: #{tpu_custom_call.1} parent=47 // pred_check_branch
          %353 = sbr.rel (%p351) target = $region52
        $region51: #{tpu_custom_call.1} parent=47 // pred_region
          %355 = dma.done %s347, 128
        $region52: #{tpu_custom_call.1} parent=47 // pred_fallthru
          _
        // Predicated region
        $region53: #{tpu_custom_call.1} parent=47 // pred_check
          %p356 = pneg %p83
        $region54: #{tpu_custom_call.1} parent=47 // pred_check_branch
          %358 = sbr.rel (%p356) target = $region56
        $region55: #{tpu_custom_call.1} parent=47 // pred_region
          %360 = dma.done [#allocation8], 512
        $region56: #{tpu_custom_call.1} parent=47 // pred_fallthru
          _
        // Predicated region
        $region57: #{tpu_custom_call.1} parent=47 // pred_check
          %p361 = pneg %p104
        $region58: #{tpu_custom_call.1} parent=47 // pred_check_branch
          %363 = sbr.rel (%p361) target = $region60
        $region59: #{tpu_custom_call.1} parent=47 // pred_region
          %365 = dma.done [#allocation8], 16
        $region60: #{tpu_custom_call.1} parent=47 // pred_fallthru
          _
        // Predicated region
        $region61: #{tpu_custom_call.1} parent=47 // pred_check
          %p366 = pneg %p125
        $region62: #{tpu_custom_call.1} parent=47 // pred_check_branch
          %368 = sbr.rel (%p366) target = $region64
        $region63: #{tpu_custom_call.1} parent=47 // pred_region
          %370 = dma.done [#allocation11], 16
        $region64: #{tpu_custom_call.1} parent=47 // pred_fallthru
          _
        // Predicated region
        $region65: #{tpu_custom_call.1} parent=47 // pred_check
          %p371 = pneg %p146
        $region66: #{tpu_custom_call.1} parent=47 // pred_check_branch
          %373 = sbr.rel (%p371) target = $region68
        $region67: #{tpu_custom_call.1} parent=47 // pred_region
          %375 = dma.done [#allocation11], 16
        $region68: #{tpu_custom_call.1} parent=47 // pred_fallthru
          _
        // Predicated region
        $region69: #{tpu_custom_call.1} parent=47 // pred_check
          %p376 = pneg %p198
        $region70: #{tpu_custom_call.1} parent=47 // pred_check_branch
          %378 = sbr.rel (%p376) target = $region72
        $region71: #{tpu_custom_call.1} parent=47 // pred_region
          %380 = dma.done [#allocation14], 64
        $region72: #{tpu_custom_call.1} parent=47 // pred_fallthru
          _
        %s381 = sand.u32 %s49, 1
        %s382 = scalar_lea.sflag [#allocation5], %s381
        %s383 = sand.u32 %s49, 1
        %s384 = smul.addr %s383, 8
        %s385 = scalar_lea.vmem [#allocation4], %s384
        %p386 = pneg %p62
        %p387 = pneg %p59
        %p388 = pneg %p83
        %p389 = pneg %p80
        %p390 = pneg %p104
        %p391 = pneg %p101
        %p392 = pneg %p125
        %p393 = pneg %p122
        %p394 = pneg %p146
        %p395 = pneg %p143
        %p396 = scmp.lt.s32.totalorder %s31, 0
        %s397 = scalar_select %p396, %s31, 0
        %s398 = smul.addr %s397, 4
        %s399 = scalar_lea.vmem %s5, %s398
        %p400 = pneg %p172
        %p401 = pneg %p169
        %p402 = pneg %p198
        %p403 = pneg %p195
        %p404 = pneg %p226
        %p405 = pneg %p223
        %s406 = sand.u32 %s213, 1
        %s407 = scalar_lea.sflag [#allocation6], %s406
        %s408 = sand.u32 %s213, 1
        %s409 = smul.addr %s408, 8
        %s410 = scalar_lea.vmem [#allocation15], %s409
        %s411 = smul.u32 2, %s32
        %p412 = scmp.lt.s32.totalorder %s31, 0
        %s413 = scalar_select %p412, %s31, 0
        %s414 = smul.addr %s413, 4
        %s415 = scalar_lea.vmem %s5, %s414
        %s416 = smul.u32 2, %s32
        %p417 = scmp.eq.s32.totalorder %s32, 0
        // Predicated region
        $region73: #{tpu_custom_call.1} parent=47 // pred_check
          %p418 = pneg %p417
        $region74: #{tpu_custom_call.1} parent=47 // pred_check_branch
          %420 = sbr.rel (%p418) target = $region76
        $region75: #{tpu_custom_call.1} parent=47 // pred_region
          %v421 = vld [vmem:[%s415] sm:$0xf]
          %vm422 = vcmask 257024
          %423 = vst.msk [vmem:[#allocation2] sm:$0xf] %vm422, %v421
          %v424 = vld [vmem:[#allocation13] sm:$0xf]
          %425 = vst.msk [vmem:[#allocation3] sm:$0xf] %vm422, %v424
        $region76: #{tpu_custom_call.1} parent=47 // pred_fallthru
          _
        %v426 = vld [vmem:[#allocation7] sm:$0xff]
        %v427 = vld [vmem:[#allocation7 + $0x8] sm:$0xff]
        %v428 = vld [vmem:[#allocation7 + $0x10] sm:$0xff]
        %v429 = vld [vmem:[#allocation7 + $0x18] sm:$0xff]
        %v430 = vld [vmem:[#allocation9] sm:$0x1]
        %v431 = vld [vmem:[#allocation10] sm:$0x1]
        %v432 = vld [vmem:[#allocation12] sm:$0x1]
        %v433 = vld [vmem:[#allocation2] sm:$0xf]
        %v434 = vld [vmem:[#allocation3] sm:$0xf]
        %v435 = vld [vmem:[%s350] sm:$0xf]
        %vm436 = vcmask 261120
        %v438 = vsel %vm436, %v433, 0
        %440 = vmatpush.msra.mxu0 0.0
        %441 = vmatpush.msra.mxu0 0.0
        %442 = vmatpush.msra.mxu0 0.0
        %443 = vmatpush.msra.mxu0 0.0
        %444 = vmatpush.msra.mxu0 0.0
        %445 = vmatpush.msra.mxu0 0.0
        %446 = vmatpush.msra.mxu0 0.0
        %447 = vmatpush.msra.mxu0 0.0
        %448 = vmatpush.msra.mxu0 0.0
        %449 = vmatpush.msra.mxu0 0.0
        %450 = vmatpush.msra.mxu0 0.0
        %451 = vmatpush.msra.mxu0 0.0
        %452 = vmatpush.msra.mxu0 %v429
        %453 = vmatpush.msra.mxu0 %v428
        %454 = vmatpush.msra.mxu0 %v427
        %455 = vmatpush.msra.mxu0 %v426
        %456 = vmatmul.f32.gmra.mxu0 %v438
        %v457 = vpop.f32.mrf.mxu0
        %v458 = vadd.f32 0.0, %v457
        %459 = vdwg.mxu0
        %v460 = vadd.f32 %v435, %v458
        %v462 = vperm.slane %v430, 0
        %v464 = vmul.f32 %v462, %v434
        %v465 = vadd.f32 %v460, %v464
        %vm466 = vcmask 257024
        %v467 = vsel %vm466, %v465, 0.0
        %468 = vadd.xlane.f32.xlu0 %v467
        %v469 = vpop.xlane.xlu0 %468
        %v470 = vmul.f32 %v469, 0.03125
        %v471 = vmul.f32 %v465, %v465
        %v472 = vsel %vm466, %v471, 0.0
        %473 = vadd.xlane.f32.xlu0 %v472
        %v474 = vpop.xlane.xlu0 %473
        %v475 = vmul.f32 %v474, 0.03125
        %v476 = vmul.f32 %v470, %v470
        %v477 = vsub.f32 %v475, %v476
        %v478 = vsub.f32 %v465, %v470
        %v479 = vadd.f32 %v477, 1e-05
        %v480 = vrsqrt.pop %v479
        %v481 = vmul.f32 %v480, %v479
        %v482 = vmul.f32 %v481, %v480
        %v483 = vmul.f32 0.5, %v482
        %v484 = vsub.f32 1.5, %v483
        %v485 = vmul.f32 %v480, %v484
        %vm486 = vweird.f32 %v479
        %vm487 = vweird.f32 %v480
        %vm488 = vmor %vm486, %vm487
        %v489 = vsel %vm488, %v480, %v485
        %v490 = vmul.f32 %v478, %v489
        %v492 = vperm.slane %v431, 0
        %v494 = vmul.f32 %v490, %v492
        %v496 = vperm.slane %v432, 0
        %v498 = vadd.f32 %v494, %v496
        %v499 = vxor.u32 %v498, 2147483648
        %v500 = vmul.f32 %v499, 1.442695
        %v501 = vpow.pop %v500
        %v502 = vadd.f32 %v501, 1.0
        %v503 = vrcp.pop %v502
        %v504 = vmul.f32 %v502, %v503
        %v505 = vsub.f32 1.0, %v504
        %v506 = vmul.f32 %v503, %v505
        %v507 = vadd.f32 %v503, %v506
        %vm508 = vweird.f32 %v502
        %vm509 = vweird.f32 %v503
        %vm510 = vmor %vm508, %vm509
        %v511 = vsel %vm510, %v503, %v507
        %v512 = vand.u32 2147483647, %v502
        %vm513 = vcmp.eq.f32.partialorder %v512, 8.507059e+37
        %v514 = vand.u32 %v502, 2147483648
        %v515 = vor.u32 1.1754944e-38, %v514
        %v516 = vsel %vm513, %v515, %v511
        %v517 = vmul.f32 1.0, %v516
        %519 = vrot.lane.b32.xlu0 %v434, 32
        %v520 = vpop.permute.xlu0 %519
        %v522 = vmul.f32 %v462, %v520
        %v523 = vadd.f32 %v460, %v522
        %525 = vrot.lane.b32.xlu0 %v523, 96
        %v526 = vpop.permute.xlu0 %525
        %v528 = vsel %vm466, %v526, 0.0
        %529 = vadd.xlane.f32.xlu0 %v528
        %v530 = vpop.xlane.xlu0 %529
        %v531 = vmul.f32 %v530, 0.03125
        %v532 = vmul.f32 %v523, %v523
        %534 = vrot.lane.b32.xlu0 %v532, 96
        %v535 = vpop.permute.xlu0 %534
        %v537 = vsel %vm466, %v535, 0.0
        %538 = vadd.xlane.f32.xlu0 %v537
        %v539 = vpop.xlane.xlu0 %538
        %v540 = vmul.f32 %v539, 0.03125
        %v541 = vmul.f32 %v531, %v531
        %v542 = vsub.f32 %v540, %v541
        %v543 = vsub.f32 %v523, %v531
        %v544 = vadd.f32 %v542, 1e-05
        %v545 = vrsqrt.pop %v544
        %v546 = vmul.f32 %v545, %v544
        %v547 = vmul.f32 %v546, %v545
        %v548 = vmul.f32 0.5, %v547
        %v549 = vsub.f32 1.5, %v548
        %v550 = vmul.f32 %v545, %v549
        %vm551 = vweird.f32 %v544
        %vm552 = vweird.f32 %v545
        %vm553 = vmor %vm551, %vm552
        %v554 = vsel %vm553, %v545, %v550
        %v555 = vmul.f32 %v543, %v554
        %v556 = vmul.f32 %v555, %v492
        %v557 = vadd.f32 %v556, %v496
        %v558 = vxor.u32 %v557, 2147483648
        %v559 = vmul.f32 %v558, 1.442695
        %v560 = vpow.pop %v559
        %v561 = vadd.f32 %v560, 1.0
        %v562 = vrcp.pop %v561
        %v563 = vmul.f32 %v561, %v562
        %v564 = vsub.f32 1.0, %v563
        %v565 = vmul.f32 %v562, %v564
        %v566 = vadd.f32 %v562, %v565
        %vm567 = vweird.f32 %v561
        %vm568 = vweird.f32 %v562
        %vm569 = vmor %vm567, %vm568
        %v570 = vsel %vm569, %v562, %v566
        %v571 = vand.u32 2147483647, %v561
        %vm572 = vcmp.eq.f32.partialorder %v571, 8.507059e+37
        %v573 = vand.u32 %v561, 2147483648
        %v574 = vor.u32 1.1754944e-38, %v573
        %v575 = vsel %vm572, %v574, %v570
        %v576 = vmul.f32 1.0, %v575
        %577 = vrot.lane.b32.xlu0 %v434, 64
        %v578 = vpop.permute.xlu0 %577
        %v580 = vmul.f32 %v462, %v578
        %v581 = vadd.f32 %v460, %v580
        %583 = vrot.lane.b32.xlu0 %v581, 64
        %v584 = vpop.permute.xlu0 %583
        %v586 = vsel %vm466, %v584, 0.0
        %587 = vadd.xlane.f32.xlu0 %v586
        %v588 = vpop.xlane.xlu0 %587
        %v589 = vmul.f32 %v588, 0.03125
        %v590 = vmul.f32 %v581, %v581
        %592 = vrot.lane.b32.xlu0 %v590, 64
        %v593 = vpop.permute.xlu0 %592
        %v595 = vsel %vm466, %v593, 0.0
        %596 = vadd.xlane.f32.xlu0 %v595
        %v597 = vpop.xlane.xlu0 %596
        %v598 = vmul.f32 %v597, 0.03125
        %v599 = vmul.f32 %v589, %v589
        %v600 = vsub.f32 %v598, %v599
        %v601 = vsub.f32 %v581, %v589
        %v602 = vadd.f32 %v600, 1e-05
        %v603 = vrsqrt.pop %v602
        %v604 = vmul.f32 %v603, %v602
        %v605 = vmul.f32 %v604, %v603
        %v606 = vmul.f32 0.5, %v605
        %v607 = vsub.f32 1.5, %v606
        %v608 = vmul.f32 %v603, %v607
        %vm609 = vweird.f32 %v602
        %vm610 = vweird.f32 %v603
        %vm611 = vmor %vm609, %vm610
        %v612 = vsel %vm611, %v603, %v608
        %v613 = vmul.f32 %v601, %v612
        %v614 = vmul.f32 %v613, %v492
        %v615 = vadd.f32 %v614, %v496
        %v616 = vxor.u32 %v615, 2147483648
        %v617 = vmul.f32 %v616, 1.442695
        %v618 = vpow.pop %v617
        %v619 = vadd.f32 %v618, 1.0
        %v620 = vrcp.pop %v619
        %v621 = vmul.f32 %v619, %v620
        %v622 = vsub.f32 1.0, %v621
        %v623 = vmul.f32 %v620, %v622
        %v624 = vadd.f32 %v620, %v623
        %vm625 = vweird.f32 %v619
        %vm626 = vweird.f32 %v620
        %vm627 = vmor %vm625, %vm626
        %v628 = vsel %vm627, %v620, %v624
        %v629 = vand.u32 2147483647, %v619
        %vm630 = vcmp.eq.f32.partialorder %v629, 8.507059e+37
        %v631 = vand.u32 %v619, 2147483648
        %v632 = vor.u32 1.1754944e-38, %v631
        %v633 = vsel %vm630, %v632, %v628
        %v634 = vmul.f32 1.0, %v633
        %636 = vrot.lane.b32.xlu0 %v460, 32
        %v637 = vpop.permute.xlu0 %636
        %v639 = vsel %vm466, %v637, 0.0
        %640 = vadd.xlane.f32.xlu0 %v639
        %v641 = vpop.xlane.xlu0 %640
        %v642 = vmul.f32 %v641, 0.03125
        %v643 = vmul.f32 %v460, %v460
        %645 = vrot.lane.b32.xlu0 %v643, 32
        %v646 = vpop.permute.xlu0 %645
        %v648 = vsel %vm466, %v646, 0.0
        %649 = vadd.xlane.f32.xlu0 %v648
        %v650 = vpop.xlane.xlu0 %649
        %v651 = vmul.f32 %v650, 0.03125
        %v652 = vmul.f32 %v642, %v642
        %v653 = vsub.f32 %v651, %v652
        %v654 = vsub.f32 %v460, %v642
        %v655 = vadd.f32 %v653, 1e-05
        %v656 = vrsqrt.pop %v655
        %v657 = vmul.f32 %v656, %v655
        %v658 = vmul.f32 %v657, %v656
        %v659 = vmul.f32 0.5, %v658
        %v660 = vsub.f32 1.5, %v659
        %v661 = vmul.f32 %v656, %v660
        %vm662 = vweird.f32 %v655
        %vm663 = vweird.f32 %v656
        %vm664 = vmor %vm662, %vm663
        %v665 = vsel %vm664, %v656, %v661
        %v666 = vmul.f32 %v654, %v665
        %v667 = vmul.f32 %v666, %v492
        %v668 = vadd.f32 %v667, %v496
        %v669 = vtanh.pop %v668
        %v670 = vmul.f32 %v576, %v520
        %672 = vrot.lane.b32.xlu0 %v669, 32
        %v673 = vpop.permute.xlu0 %672
        %v675 = vmul.f32 %v517, %v673
        %677 = vrot.lane.b32.xlu0 %v675, 32
        %v678 = vpop.permute.xlu0 %677
        %v680 = vadd.f32 %v670, %v678
        %v681 = vtanh.pop %v680
        %683 = vrot.lane.b32.xlu0 %v634, 96
        %v684 = vpop.permute.xlu0 %683
        %v686 = vmul.f32 %v681, %v684
        %688 = vrot.lane.b32.xlu0 %v686, 96
        %v689 = vpop.permute.xlu0 %688
        %691 = vst.msk [vmem:[%s410] sm:$0xf] %vm466, %v689
        %s692 = scalar_lea.vmem %s350, 4 [#allocation4]
        %v693 = vld [vmem:[%s692] sm:$0xf]
        %v694 = vsel %vm436, %v689, 0
        %696 = vmatpush.msra.mxu0 0.0
        %697 = vmatpush.msra.mxu0 0.0
        %698 = vmatpush.msra.mxu0 0.0
        %699 = vmatpush.msra.mxu0 0.0
        %700 = vmatpush.msra.mxu0 0.0
        %701 = vmatpush.msra.mxu0 0.0
        %702 = vmatpush.msra.mxu0 0.0
        %703 = vmatpush.msra.mxu0 0.0
        %704 = vmatpush.msra.mxu0 0.0
        %705 = vmatpush.msra.mxu0 0.0
        %706 = vmatpush.msra.mxu0 0.0
        %707 = vmatpush.msra.mxu0 0.0
        %708 = vmatpush.msra.mxu0 %v429
        %709 = vmatpush.msra.mxu0 %v428
        %710 = vmatpush.msra.mxu0 %v427
        %711 = vmatpush.msra.mxu0 %v426
        %712 = vmatmul.f32.gmra.mxu0 %v694
        %v713 = vpop.f32.mrf.mxu0
        %v714 = vadd.f32 0.0, %v713
        %715 = vdwg.mxu0
        %v716 = vadd.f32 %v693, %v714
        %718 = vrot.lane.b32.xlu0 %v680, 96
        %v719 = vpop.permute.xlu0 %718
        %v721 = vmul.f32 %v462, %v719
        %v722 = vadd.f32 %v716, %v721
        %v723 = vsel %vm466, %v722, 0.0
        %724 = vadd.xlane.f32.xlu0 %v723
        %v725 = vpop.xlane.xlu0 %724
        %v726 = vmul.f32 %v725, 0.03125
        %v727 = vmul.f32 %v722, %v722
        %v728 = vsel %vm466, %v727, 0.0
        %729 = vadd.xlane.f32.xlu0 %v728
        %v730 = vpop.xlane.xlu0 %729
        %v731 = vmul.f32 %v730, 0.03125
        %v732 = vmul.f32 %v726, %v726
        %v733 = vsub.f32 %v731, %v732
        %v734 = vsub.f32 %v722, %v726
        %v735 = vadd.f32 %v733, 1e-05
        %v736 = vrsqrt.pop %v735
        %v737 = vmul.f32 %v736, %v735
        %v738 = vmul.f32 %v737, %v736
        %v739 = vmul.f32 0.5, %v738
        %v740 = vsub.f32 1.5, %v739
        %v741 = vmul.f32 %v736, %v740
        %vm742 = vweird.f32 %v735
        %vm743 = vweird.f32 %v736
        %vm744 = vmor %vm742, %vm743
        %v745 = vsel %vm744, %v736, %v741
        %v746 = vmul.f32 %v734, %v745
        %v747 = vmul.f32 %v746, %v492
        %v748 = vadd.f32 %v747, %v496
        %v749 = vxor.u32 %v748, 2147483648
        %v750 = vmul.f32 %v749, 1.442695
        %v751 = vpow.pop %v750
        %v752 = vadd.f32 %v751, 1.0
        %v753 = vrcp.pop %v752
        %v754 = vmul.f32 %v752, %v753
        %v755 = vsub.f32 1.0, %v754
        %v756 = vmul.f32 %v753, %v755
        %v757 = vadd.f32 %v753, %v756
        %vm758 = vweird.f32 %v752
        %vm759 = vweird.f32 %v753
        %vm760 = vmor %vm758, %vm759
        %v761 = vsel %vm760, %v753, %v757
        %v762 = vand.u32 2147483647, %v752
        %vm763 = vcmp.eq.f32.partialorder %v762, 8.507059e+37
        %v764 = vand.u32 %v752, 2147483648
        %v765 = vor.u32 1.1754944e-38, %v764
        %v766 = vsel %vm763, %v765, %v761
        %v767 = vmul.f32 1.0, %v766
        %v768 = vmul.f32 %v462, %v680
        %v769 = vadd.f32 %v716, %v768
        %771 = vrot.lane.b32.xlu0 %v769, 96
        %v772 = vpop.permute.xlu0 %771
        %v774 = vsel %vm466, %v772, 0.0
        %775 = vadd.xlane.f32.xlu0 %v774
        %v776 = vpop.xlane.xlu0 %775
        %v777 = vmul.f32 %v776, 0.03125
        %v778 = vmul.f32 %v769, %v769
        %780 = vrot.lane.b32.xlu0 %v778, 96
        %v781 = vpop.permute.xlu0 %780
        %v783 = vsel %vm466, %v781, 0.0
        %784 = vadd.xlane.f32.xlu0 %v783
        %v785 = vpop.xlane.xlu0 %784
        %v786 = vmul.f32 %v785, 0.03125
        %v787 = vmul.f32 %v777, %v777
        %v788 = vsub.f32 %v786, %v787
        %v789 = vsub.f32 %v769, %v777
        %v790 = vadd.f32 %v788, 1e-05
        %v791 = vrsqrt.pop %v790
        %v792 = vmul.f32 %v791, %v790
        %v793 = vmul.f32 %v792, %v791
        %v794 = vmul.f32 0.5, %v793
        %v795 = vsub.f32 1.5, %v794
        %v796 = vmul.f32 %v791, %v795
        %vm797 = vweird.f32 %v790
        %vm798 = vweird.f32 %v791
        %vm799 = vmor %vm797, %vm798
        %v800 = vsel %vm799, %v791, %v796
        %v801 = vmul.f32 %v789, %v800
        %v802 = vmul.f32 %v801, %v492
        %v803 = vadd.f32 %v802, %v496
        %v804 = vxor.u32 %v803, 2147483648
        %v805 = vmul.f32 %v804, 1.442695
        %v806 = vpow.pop %v805
        %v807 = vadd.f32 %v806, 1.0
        %v808 = vrcp.pop %v807
        %v809 = vmul.f32 %v807, %v808
        %v810 = vsub.f32 1.0, %v809
        %v811 = vmul.f32 %v808, %v810
        %v812 = vadd.f32 %v808, %v811
        %vm813 = vweird.f32 %v807
        %vm814 = vweird.f32 %v808
        %vm815 = vmor %vm813, %vm814
        %v816 = vsel %vm815, %v808, %v812
        %v817 = vand.u32 2147483647, %v807
        %vm818 = vcmp.eq.f32.partialorder %v817, 8.507059e+37
        %v819 = vand.u32 %v807, 2147483648
        %v820 = vor.u32 1.1754944e-38, %v819
        %v821 = vsel %vm818, %v820, %v816
        %v822 = vmul.f32 1.0, %v821
        %823 = vrot.lane.b32.xlu0 %v680, 32
        %v824 = vpop.permute.xlu0 %823
        %v826 = vmul.f32 %v462, %v824
        %v827 = vadd.f32 %v716, %v826
        %829 = vrot.lane.b32.xlu0 %v827, 64
        %v830 = vpop.permute.xlu0 %829
        %v832 = vsel %vm466, %v830, 0.0
        %833 = vadd.xlane.f32.xlu0 %v832
        %v834 = vpop.xlane.xlu0 %833
        %v835 = vmul.f32 %v834, 0.03125
        %v836 = vmul.f32 %v827, %v827
        %838 = vrot.lane.b32.xlu0 %v836, 64
        %v839 = vpop.permute.xlu0 %838
        %v841 = vsel %vm466, %v839, 0.0
        %842 = vadd.xlane.f32.xlu0 %v841
        %v843 = vpop.xlane.xlu0 %842
        %v844 = vmul.f32 %v843, 0.03125
        %v845 = vmul.f32 %v835, %v835
        %v846 = vsub.f32 %v844, %v845
        %v847 = vsub.f32 %v827, %v835
        %v848 = vadd.f32 %v846, 1e-05
        %v849 = vrsqrt.pop %v848
        %v850 = vmul.f32 %v849, %v848
        %v851 = vmul.f32 %v850, %v849
        %v852 = vmul.f32 0.5, %v851
        %v853 = vsub.f32 1.5, %v852
        %v854 = vmul.f32 %v849, %v853
        %vm855 = vweird.f32 %v848
        %vm856 = vweird.f32 %v849
        %vm857 = vmor %vm855, %vm856
        %v858 = vsel %vm857, %v849, %v854
        %v859 = vmul.f32 %v847, %v858
        %v860 = vmul.f32 %v859, %v492
        %v861 = vadd.f32 %v860, %v496
        %v862 = vxor.u32 %v861, 2147483648
        %v863 = vmul.f32 %v862, 1.442695
        %v864 = vpow.pop %v863
        %v865 = vadd.f32 %v864, 1.0
        %v866 = vrcp.pop %v865
        %v867 = vmul.f32 %v865, %v866
        %v868 = vsub.f32 1.0, %v867
        %v869 = vmul.f32 %v866, %v868
        %v870 = vadd.f32 %v866, %v869
        %vm871 = vweird.f32 %v865
        %vm872 = vweird.f32 %v866
        %vm873 = vmor %vm871, %vm872
        %v874 = vsel %vm873, %v866, %v870
        %v875 = vand.u32 2147483647, %v865
        %vm876 = vcmp.eq.f32.partialorder %v875, 8.507059e+37
        %v877 = vand.u32 %v865, 2147483648
        %v878 = vor.u32 1.1754944e-38, %v877
        %v879 = vsel %vm876, %v878, %v874
        %v880 = vmul.f32 1.0, %v879
        %882 = vrot.lane.b32.xlu0 %v716, 32
        %v883 = vpop.permute.xlu0 %882
        %v885 = vsel %vm466, %v883, 0.0
        %886 = vadd.xlane.f32.xlu0 %v885
        %v887 = vpop.xlane.xlu0 %886
        %v888 = vmul.f32 %v887, 0.03125
        %v889 = vmul.f32 %v716, %v716
        %891 = vrot.lane.b32.xlu0 %v889, 32
        %v892 = vpop.permute.xlu0 %891
        %v894 = vsel %vm466, %v892, 0.0
        %895 = vadd.xlane.f32.xlu0 %v894
        %v896 = vpop.xlane.xlu0 %895
        %v897 = vmul.f32 %v896, 0.03125
        %v898 = vmul.f32 %v888, %v888
        %v899 = vsub.f32 %v897, %v898
        %v900 = vsub.f32 %v716, %v888
        %v901 = vadd.f32 %v899, 1e-05
        %v902 = vrsqrt.pop %v901
        %v903 = vmul.f32 %v902, %v901
        %v904 = vmul.f32 %v903, %v902
        %v905 = vmul.f32 0.5, %v904
        %v906 = vsub.f32 1.5, %v905
        %v907 = vmul.f32 %v902, %v906
        %vm908 = vweird.f32 %v901
        %vm909 = vweird.f32 %v902
        %vm910 = vmor %vm908, %vm909
        %v911 = vsel %vm910, %v902, %v907
        %v912 = vmul.f32 %v900, %v911
        %v913 = vmul.f32 %v912, %v492
        %v914 = vadd.f32 %v913, %v496
        %v915 = vtanh.pop %v914
        %v916 = vmul.f32 %v822, %v680
        %918 = vrot.lane.b32.xlu0 %v915, 32
        %v919 = vpop.permute.xlu0 %918
        %v921 = vmul.f32 %v767, %v919
        %923 = vrot.lane.b32.xlu0 %v921, 32
        %v924 = vpop.permute.xlu0 %923
        %v926 = vadd.f32 %v916, %v924
        %v927 = vtanh.pop %v926
        %929 = vrot.lane.b32.xlu0 %v880, 96
        %v930 = vpop.permute.xlu0 %929
        %v932 = vmul.f32 %v927, %v930
        %934 = vrot.lane.b32.xlu0 %v932, 96
        %v935 = vpop.permute.xlu0 %934
        %s937 = scalar_lea.vmem %s410, 4 [#allocation15]
        %938 = vst.msk [vmem:[%s937] sm:$0xf] %vm466, %v935
        %939 = vst.msk [vmem:[#allocation2] sm:$0xf] %vm466, %v935
        %941 = vrot.lane.b32.xlu0 %v926, 96
        %v942 = vpop.permute.xlu0 %941
        %944 = vst.msk [vmem:[#allocation3] sm:$0xf] %vm466, %v942
        %s945 = sand.u32 %s213, 1
        %s946 = scalar_lea.sflag [#allocation6], %s945
        %s947 = sand.u32 %s213, 1
        %s948 = smul.addr %s947, 8
        %s949 = scalar_lea.vmem [#allocation15], %s948
        // Predicated region
        $region77: #{tpu_custom_call.1} parent=47 // pred_check
          %p950 = pneg %p223
        $region78: #{tpu_custom_call.1} parent=47 // pred_check_branch
          %952 = sbr.rel (%p950) target = $region80
        $region79: #{tpu_custom_call.1} parent=47 // pred_region
          %s953 = smul.u32 2, %s32
          %955 = vsyncadd %s946, 0
          %s956 = sadd.s32 %s31, %s953
          %s957 = smul.addr %s956, 4
          %s958 = scalar_lea.hbm %s7, %s957
          %s959 = sshll.u32 %s949, 4
          %s960 = int_to_ptr.vmem [resolvable:$true] %s959
          %s961 = sshll.u32 %s958, 4
          %s962 = int_to_ptr.hbm [resolvable:$true] %s961
          %967 = dma.vmem_to_hbm [thread:$0]  %s960, 128, %s962, %s946, 64, 64, 4
        $region80: #{tpu_custom_call.1} parent=47 // pred_fallthru
          _
      $region48: #{tpu_custom_call.1} parent=5 // pred_fallthru
        _
      %p968 = scmp.le.s32.totalorder 2, %s22
      // Predicated region
      $region81: #{tpu_custom_call.1} parent=5 // pred_check
        %p969 = pneg %p968
      $region82: #{tpu_custom_call.1} parent=5 // pred_check_branch
        %971 = sbr.rel (%p969) target = $region84
      $region83: #{tpu_custom_call.1} parent=5 // pred_region
        %s972 = ssub.s32 %s22, 2
        // Predicated region
        $region85: #{tpu_custom_call.1} parent=83 // pred_check
          %p973 = pneg %p229
        $region86: #{tpu_custom_call.1} parent=83 // pred_check_branch
          %975 = sbr.rel (%p973) target = $region88
        $region87: #{tpu_custom_call.1} parent=83 // pred_region
          %s976 = sand.u32 %s214, 1
          %s977 = scalar_lea.sflag [#allocation6], %s976
          %s978 = sand.u32 %s214, 1
          %s979 = smul.addr %s978, 8
          %s980 = scalar_lea.vmem [#allocation15], %s979
          %982 = dma.done %s977, 128
        $region88: #{tpu_custom_call.1} parent=83 // pred_fallthru
          _
      $region84: #{tpu_custom_call.1} parent=5 // pred_fallthru
        _
    $region6: #{tpu_custom_call.1} parent=1 // loop_footer
      %s26 = sadd.s32 1, %s22
    $region7: #{tpu_custom_call.1} parent=1 // loop_footer_branch
      %21 = sbr.rel target = $region3
    $region8: #{tpu_custom_call.1} parent=1 // loop_exit
      _
    %983 = vsyncpa [#allocation5], 1
    %s984 = scalar_lea.sflag [#allocation5], 1
    %985 = vsyncpa %s984, 1
    %986 = vsyncpa [#allocation8], 1
    %987 = vsyncpa [#allocation11], 1
    %988 = vsyncpa [#allocation14], 1
    %989 = vsyncpa [#allocation6], 1
    %s990 = scalar_lea.sflag [#allocation6], 1
    %991 = vsyncpa %s990, 1

</llo_original>
